<compile_context>
chip_gen: v5e
topology: v5e:2x2
jax: 0.10.0
libtpu: 0.0.40
codegen_flags: <defaults>
</compile_context>

<pallas_src>
import numpy as np
import jax
import jax.numpy as jnp
from jax import lax
from jax.experimental import pallas as pl
from jax.experimental.pallas import tpu as pltpu

EPS = 1e-5          # torch.nn.LayerNorm default eps
K = 3               # kernel size used by SepConvEncoder
S = (2, 2)          # strides used by SepConvEncoder
TB = 8              # batch tile (sublane-aligned)


# ------------------------------ Pallas kernel -------------------------------

def _encoder_kernel(x_ref, *refs):
    """Whole SepConvEncoder for a TB-sample batch tile (one grid step).

    x_ref : (TB, N0)  flattened (C=1, F, T) input spectrograms.
    refs  : [op_0, v_0, op_1, v_1, ..., op_15, v_15, out_ref]
            op_s : (N_in, N_out) dense operator for stage s (conv weights,
                   stride, zero padding and depthwise grouping folded in).
            v_s  : (3, N_out) rows = [conv bias, LN gamma, LN beta], flattened
                   in (C, F, T) order.
    out   : (TB, N_last)
    """
    o_ref = refs[-1]
    p_refs = refs[:-1]
    n_stages = len(p_refs) // 2

    a = x_ref[...]                                        # (TB, N0), f32
    for s in range(n_stages):                             # statically unrolled
        op_ref = p_refs[2 * s]
        v_ref = p_refs[2 * s + 1]

        # "same"-padded strided conv (+ depthwise structure) as one matmul.
        a = jnp.dot(a, op_ref[...], preferred_element_type=jnp.float32)
        a = a + v_ref[0:1, :]                             # conv bias

        # LayerNorm over the whole (C, F, T) extent -- one-pass stats in f32.
        mean = jnp.mean(a, axis=-1, keepdims=True)
        ex2 = jnp.mean(a * a, axis=-1, keepdims=True)
        var = jnp.maximum(ex2 - mean * mean, 0.0)
        a = (a - mean) * lax.rsqrt(var + EPS)
        a = a * v_ref[1:2, :] + v_ref[2:3, :]
        a = jnp.maximum(a, 0.0)                           # ReLU
    o_ref[...] = a


def sepconv_encoder_pallas(x, flat_params):
    """x: (B, F, T) float32 spectrogram -> (B, h, 1, 1)."""
    B, F, T = x.shape
    N0 = F * T
    N_last = flat_params[-2].shape[1]

    x2 = x.reshape(B, N0).astype(jnp.float32)
    B_pad = ((B + TB - 1) // TB) * TB
    if B_pad != B:
        x2 = jnp.pad(x2, ((0, B_pad - B), (0, 0)))        # zero rows are benign

    in_specs = [pl.BlockSpec((TB, N0), lambda b: (b, 0))]
    # Parameters: full-array blocks, constant index_map -> VMEM resident.
    in_specs += [pl.BlockSpec(p.shape, lambda b: (0, 0)) for p in flat_params]

    out = pl.pallas_call(
        _encoder_kernel,
        out_shape=jax.ShapeDtypeStruct((B_pad, N_last), jnp.float32),
        grid=(B_pad // TB,),
        in_specs=in_specs,
        out_specs=pl.BlockSpec((TB, N_last), lambda b: (b, 0)),
        compiler_params=pltpu.CompilerParams(
            dimension_semantics=("parallel",)),   # v7x: split batch tiles over 2 TCs
    )(x2, *flat_params)
    return out[:B].reshape(B, N_last, 1, 1)


# ----------------- Host-side parameter -> operator preparation ---------------

def _axis_select(l_in, l_out, stride, pad_left):
    """sel[l, dk, lo] = 1 iff padded-conv output `lo`, tap `dk` reads input `l`."""
    sel = np.zeros((l_in, K, l_out), np.float32)
    for lo in range(l_out):
        for dk in range(K):
            li = stride * lo + dk - pad_left
            if 0 <= li < l_in:
                sel[li, dk, lo] = 1.0
    return sel


def _block_operators(p, F, T):
    """Fold one SepConvBlock's two conv stages into dense flattened operators."""
    Co, Ci, _ = p["w1"].shape
    T_out = (T - 1) // S[0] + 1
    F_out = (F - 1) // S[1] + 1

    w1 = np.asarray(p["w1"], np.float32)              # (Co, Ci, K)
    w2 = np.asarray(p["w2"], np.float32)              # (Co, K)

    # ---- stage 1: (Ci,F,T) -> (Co,F,T_out); (1,k) conv, stride (1,2), pad T
    pad_t = (T - 1) // S[0] * S[0] + K - T
    st = _axis_select(T, T_out, S[0], pad_t // 2)     # (T, K, T_out)
    a1 = np.einsum("oid,tdp->itop", w1, st)           # (Ci, T, Co, T_out)
    op1 = np.einsum("itop,fg->iftogp", a1, np.eye(F, dtype=np.float32))
    op1 = op1.reshape(Ci * F * T, Co * F * T_out)

    b1 = np.broadcast_to(np.asarray(p["b1"], np.float32)[:, None, None],
                         (Co, F, T_out)).reshape(-1)
    v1 = np.stack([b1,
                   np.asarray(p["g1"], np.float32).reshape(-1),
                   np.asarray(p["bt1"], np.float32).reshape(-1)])

    # ---- stage 2: (Co,F,T_out) -> (Co,F_out,T_out); depthwise (k,1), stride (2,1), pad F
    pad_f = (F - 1) // S[1] * S[1] + K - F
    sf = _axis_select(F, F_out, S[1], pad_f // 2)     # (F, K, F_out)
    b2m = np.einsum("cd,fdg->cfg", w2, sf)            # (Co, F, F_out)
    op2 = np.einsum("cfg,ce,tu->cftegu", b2m,
                    np.eye(Co, dtype=np.float32),
                    np.eye(T_out, dtype=np.float32))
    op2 = op2.reshape(Co * F * T_out, Co * F_out * T_out)

    b2 = np.broadcast_to(np.asarray(p["b2"], np.float32)[:, None, None],
                         (Co, F_out, T_out)).reshape(-1)
    v2 = np.stack([b2,
                   np.asarray(p["g2"], np.float32).reshape(-1),
                   np.asarray(p["bt2"], np.float32).reshape(-1)])

    arrs = [jnp.asarray(op1), jnp.asarray(v1), jnp.asarray(op2), jnp.asarray(v2)]
    return arrs, F_out, T_out


def prepare_encoder(params, in_F, in_T):
    """One-time relayout of PyTorch-style params into fused-kernel operands."""
    flat = []
    F, T = in_F, in_T
    for p in params:
        arrs, F, T = _block_operators(p, F, T)
        flat += arrs
    return tuple(flat)


# ------------------------- Deterministic parameters -------------------------

def init_params(key, d, h, in_F, in_T):
    channels = [1, d, d, 2 * d, 2 * d, 4 * d, 4 * d, h, h]
    params = []
    F, T = in_F, in_T
    for i in range(8):
        ci, co = channels[i], channels[i + 1]
        T_out = (T - 1) // S[0] + 1
        F_out = (F - 1) // S[1] + 1
        key, *ks = jax.random.split(key, 9)
        scale1 = 0.5 / (K * ci) ** 0.5
        scale2 = 0.5 / K ** 0.5
        params.append(dict(
            w1=scale1 * jax.random.normal(ks[0], (co, ci, K), jnp.float32),   # Conv2d (co,ci,1,k)
            b1=0.1 * jax.random.normal(ks[1], (co,), jnp.float32),
            g1=1.0 + 0.1 * jax.random.normal(ks[2], (co, F, T_out), jnp.float32),
            bt1=0.1 * jax.random.normal(ks[3], (co, F, T_out), jnp.float32),
            w2=scale2 * jax.random.normal(ks[4], (co, K), jnp.float32),       # depthwise (co,1,k,1)
            b2=0.1 * jax.random.normal(ks[5], (co,), jnp.float32),
            g2=1.0 + 0.1 * jax.random.normal(ks[6], (co, F_out, T_out), jnp.float32),
            bt2=0.1 * jax.random.normal(ks[7], (co, F_out, T_out), jnp.float32),
        ))
        F, T = F_out, T_out
    assert F == 1 and T == 1, "output must be 1x1"
    return params


# ------------------------- Pure-JAX reference (NCHW) -------------------------

def _ln_ref(y, g, b):
    mean = jnp.mean(y, axis=(1, 2, 3), keepdims=True)
    var = jnp.mean((y - mean) ** 2, axis=(1, 2, 3), keepdims=True)
    return (y - mean) * lax.rsqrt(var + EPS) * g[None] + b[None]


def ref_block(x, p, F, T):
    Co = p["w1"].shape[0]
    T_out = (T - 1) // S[0] + 1
    F_out = (F - 1) // S[1] + 1
    pad_t = (T - 1) // S[0] * S[0] + K - T
    x = jnp.pad(x, ((0, 0), (0, 0), (0, 0), (pad_t // 2, pad_t - pad_t // 2)))
    y = lax.conv_general_dilated(
        x, p["w1"][:, :, None, :], window_strides=(1, S[0]), padding="VALID",
        dimension_numbers=("NCHW", "OIHW", "NCHW"), precision=lax.Precision.HIGHEST)
    y = y + p["b1"][None, :, None, None]
    y = jnp.maximum(_ln_ref(y, p["g1"], p["bt1"]), 0.0)
    pad_f = (F - 1) // S[1] * S[1] + K - F
    y = jnp.pad(y, ((0, 0), (0, 0), (pad_f // 2, pad_f - pad_f // 2), (0, 0)))
    y = lax.conv_general_dilated(
        y, p["w2"][:, None, :, None], window_strides=(S[1], 1), padding="VALID",
        dimension_numbers=("NCHW", "OIHW", "NCHW"),
        feature_group_count=Co, precision=lax.Precision.HIGHEST)
    y = y + p["b2"][None, :, None, None]
    y = jnp.maximum(_ln_ref(y, p["g2"], p["bt2"]), 0.0)
    return y, F_out, T_out


def ref_encoder(x, params, in_F, in_T):
    y = x[:, None, :, :]
    Fc, Tc = in_F, in_T
    for p in params:
        y, Fc, Tc = ref_block(y, p, Fc, Tc)
    return y


# ---------------------------------- Main -------------------------------------

if __name__ == "__main__":
    d, h = 4, 8
    in_F = 16
    segment_size, stft_hop, sample_rate = 1.0, 100, 1600
    in_T = (int(segment_size * sample_rate) + stft_hop - 1) // stft_hop   # 16
    B = 2

    key = jax.random.PRNGKey(0)
    kx, kp = jax.random.split(key)
    params = init_params(kp, d, h, in_F, in_T)
    x = jax.random.normal(kx, (B, in_F, in_T), jnp.float32)

    enc = prepare_encoder(params, in_F, in_T)    # one-time host-side relayout

    fwd = jax.jit(sepconv_encoder_pallas)
    out = fwd(x, enc)
    jax.block_until_ready(out)

    ref = ref_encoder(x, params, in_F, in_T)
    assert out.shape == (B, h, 1, 1), out.shape
    err = float(jnp.max(jnp.abs(out - ref)))
    assert err < 1e-3, f"mismatch vs reference: max abs err = {err}"
    print("KERNEL_OK")
</pallas_src>

<mosaic_0001>
module attributes {stable_mosaic.version = 11 : i64} {
  func.func @_encoder_kernel(%arg0: i32, %arg1: memref<8x256xf32, #tpu.memory_space<vmem>>, %arg2: memref<256x512xf32, #tpu.memory_space<vmem>>, %arg3: memref<3x512xf32, #tpu.memory_space<vmem>>, %arg4: memref<512x256xf32, #tpu.memory_space<vmem>>, %arg5: memref<3x256xf32, #tpu.memory_space<vmem>>, %arg6: memref<256x128xf32, #tpu.memory_space<vmem>>, %arg7: memref<3x128xf32, #tpu.memory_space<vmem>>, %arg8: memref<128x64xf32, #tpu.memory_space<vmem>>, %arg9: memref<3x64xf32, #tpu.memory_space<vmem>>, %arg10: memref<64x64xf32, #tpu.memory_space<vmem>>, %arg11: memref<3x64xf32, #tpu.memory_space<vmem>>, %arg12: memref<64x32xf32, #tpu.memory_space<vmem>>, %arg13: memref<3x32xf32, #tpu.memory_space<vmem>>, %arg14: memref<32x16xf32, #tpu.memory_space<vmem>>, %arg15: memref<3x16xf32, #tpu.memory_space<vmem>>, %arg16: memref<16x8xf32, #tpu.memory_space<vmem>>, %arg17: memref<3x8xf32, #tpu.memory_space<vmem>>, %arg18: memref<8x16xf32, #tpu.memory_space<vmem>>, %arg19: memref<3x16xf32, #tpu.memory_space<vmem>>, %arg20: memref<16x16xf32, #tpu.memory_space<vmem>>, %arg21: memref<3x16xf32, #tpu.memory_space<vmem>>, %arg22: memref<16x16xf32, #tpu.memory_space<vmem>>, %arg23: memref<3x16xf32, #tpu.memory_space<vmem>>, %arg24: memref<16x16xf32, #tpu.memory_space<vmem>>, %arg25: memref<3x16xf32, #tpu.memory_space<vmem>>, %arg26: memref<16x8xf32, #tpu.memory_space<vmem>>, %arg27: memref<3x8xf32, #tpu.memory_space<vmem>>, %arg28: memref<8x8xf32, #tpu.memory_space<vmem>>, %arg29: memref<3x8xf32, #tpu.memory_space<vmem>>, %arg30: memref<8x8xf32, #tpu.memory_space<vmem>>, %arg31: memref<3x8xf32, #tpu.memory_space<vmem>>, %arg32: memref<8x8xf32, #tpu.memory_space<vmem>>, %arg33: memref<3x8xf32, #tpu.memory_space<vmem>>, %arg34: memref<8x8xf32, #tpu.memory_space<vmem>>) attributes {dimension_semantics = [#tpu.dimension_semantics<parallel>], iteration_bounds = array<i64: 1>, scalar_prefetch = 0 : i64, scratch_operands = 0 : i64, tpu.core_type = #tpu.core_type<tc>, window_params = [{transform_indices = @transform_0, window_bounds = array<i64: 8, 256>}, {pipeline_mode = #tpu.pipeline_mode<synchronous>, transform_indices = @transform_1, window_bounds = array<i64: 256, 512>}, {pipeline_mode = #tpu.pipeline_mode<synchronous>, transform_indices = @transform_2, window_bounds = array<i64: 3, 512>}, {pipeline_mode = #tpu.pipeline_mode<synchronous>, transform_indices = @transform_3, window_bounds = array<i64: 512, 256>}, {pipeline_mode = #tpu.pipeline_mode<synchronous>, transform_indices = @transform_4, window_bounds = array<i64: 3, 256>}, {pipeline_mode = #tpu.pipeline_mode<synchronous>, transform_indices = @transform_5, window_bounds = array<i64: 256, 128>}, {pipeline_mode = #tpu.pipeline_mode<synchronous>, transform_indices = @transform_6, window_bounds = array<i64: 3, 128>}, {pipeline_mode = #tpu.pipeline_mode<synchronous>, transform_indices = @transform_7, window_bounds = array<i64: 128, 64>}, {pipeline_mode = #tpu.pipeline_mode<synchronous>, transform_indices = @transform_8, window_bounds = array<i64: 3, 64>}, {pipeline_mode = #tpu.pipeline_mode<synchronous>, transform_indices = @transform_9, window_bounds = array<i64: 64, 64>}, {pipeline_mode = #tpu.pipeline_mode<synchronous>, transform_indices = @transform_10, window_bounds = array<i64: 3, 64>}, {pipeline_mode = #tpu.pipeline_mode<synchronous>, transform_indices = @transform_11, window_bounds = array<i64: 64, 32>}, {pipeline_mode = #tpu.pipeline_mode<synchronous>, transform_indices = @transform_12, window_bounds = array<i64: 3, 32>}, {pipeline_mode = #tpu.pipeline_mode<synchronous>, transform_indices = @transform_13, window_bounds = array<i64: 32, 16>}, {pipeline_mode = #tpu.pipeline_mode<synchronous>, transform_indices = @transform_14, window_bounds = array<i64: 3, 16>}, {pipeline_mode = #tpu.pipeline_mode<synchronous>, transform_indices = @transform_15, window_bounds = array<i64: 16, 8>}, {pipeline_mode = #tpu.pipeline_mode<synchronous>, transform_indices = @transform_16, window_bounds = array<i64: 3, 8>}, {pipeline_mode = #tpu.pipeline_mode<synchronous>, transform_indices = @transform_17, window_bounds = array<i64: 8, 16>}, {pipeline_mode = #tpu.pipeline_mode<synchronous>, transform_indices = @transform_18, window_bounds = array<i64: 3, 16>}, {pipeline_mode = #tpu.pipeline_mode<synchronous>, transform_indices = @transform_19, window_bounds = array<i64: 16, 16>}, {pipeline_mode = #tpu.pipeline_mode<synchronous>, transform_indices = @transform_20, window_bounds = array<i64: 3, 16>}, {pipeline_mode = #tpu.pipeline_mode<synchronous>, transform_indices = @transform_21, window_bounds = array<i64: 16, 16>}, {pipeline_mode = #tpu.pipeline_mode<synchronous>, transform_indices = @transform_22, window_bounds = array<i64: 3, 16>}, {pipeline_mode = #tpu.pipeline_mode<synchronous>, transform_indices = @transform_23, window_bounds = array<i64: 16, 16>}, {pipeline_mode = #tpu.pipeline_mode<synchronous>, transform_indices = @transform_24, window_bounds = array<i64: 3, 16>}, {pipeline_mode = #tpu.pipeline_mode<synchronous>, transform_indices = @transform_25, window_bounds = array<i64: 16, 8>}, {pipeline_mode = #tpu.pipeline_mode<synchronous>, transform_indices = @transform_26, window_bounds = array<i64: 3, 8>}, {pipeline_mode = #tpu.pipeline_mode<synchronous>, transform_indices = @transform_27, window_bounds = array<i64: 8, 8>}, {pipeline_mode = #tpu.pipeline_mode<synchronous>, transform_indices = @transform_28, window_bounds = array<i64: 3, 8>}, {pipeline_mode = #tpu.pipeline_mode<synchronous>, transform_indices = @transform_29, window_bounds = array<i64: 8, 8>}, {pipeline_mode = #tpu.pipeline_mode<synchronous>, transform_indices = @transform_30, window_bounds = array<i64: 3, 8>}, {pipeline_mode = #tpu.pipeline_mode<synchronous>, transform_indices = @transform_31, window_bounds = array<i64: 8, 8>}, {pipeline_mode = #tpu.pipeline_mode<synchronous>, transform_indices = @transform_32, window_bounds = array<i64: 3, 8>}, {transform_indices = @transform_33, window_bounds = array<i64: 8, 8>}]} {
    %c0 = arith.constant 0 : index
    %c0_0 = arith.constant 0 : index
    %0 = vector.load %arg1[%c0, %c0_0] : memref<8x256xf32, #tpu.memory_space<vmem>>, vector<8x256xf32>
    %c0_1 = arith.constant 0 : index
    %c0_2 = arith.constant 0 : index
    %1 = vector.load %arg2[%c0_1, %c0_2] : memref<256x512xf32, #tpu.memory_space<vmem>>, vector<256x512xf32>
    %cst = arith.constant dense<0.000000e+00> : vector<8x512xf32>
    %2 = tpu.matmul %0, %1, %cst {dimension_numbers = #tpu.dot_dimension_numbers<[1], [0], [0], [1], [0, 0, 1, 1], [], []>} : vector<8x256xf32>, vector<256x512xf32>, vector<8x512xf32> -> vector<8x512xf32>
    %c0_3 = arith.constant 0 : index
    %c0_4 = arith.constant 0 : index
    %3 = vector.load %arg3[%c0_3, %c0_4] : memref<3x512xf32, #tpu.memory_space<vmem>>, vector<1x512xf32>
    %4 = vector.broadcast %3 : vector<1x512xf32> to vector<8x512xf32>
    %5 = arith.addf %2, %4 : vector<8x512xf32>
    %cst_5 = arith.constant dense<0.000000e+00> : vector<8xf32>
    %6 = vector.multi_reduction <add>, %5, %cst_5 [1] : vector<8x512xf32> to vector<8xf32>
    %7 = vector.shape_cast %6 : vector<8xf32> to vector<8x1xf32>
    %cst_6 = arith.constant 5.120000e+02 : f32
    %8 = vector.broadcast %cst_6 : f32 to vector<8x1xf32>
    %9 = arith.divf %7, %8 : vector<8x1xf32>
    %10 = arith.mulf %5, %5 : vector<8x512xf32>
    %cst_7 = arith.constant dense<0.000000e+00> : vector<8xf32>
    %11 = vector.multi_reduction <add>, %10, %cst_7 [1] : vector<8x512xf32> to vector<8xf32>
    %12 = vector.shape_cast %11 : vector<8xf32> to vector<8x1xf32>
    %cst_8 = arith.constant 5.120000e+02 : f32
    %13 = vector.broadcast %cst_8 : f32 to vector<8x1xf32>
    %14 = arith.divf %12, %13 : vector<8x1xf32>
    %15 = arith.mulf %9, %9 : vector<8x1xf32>
    %16 = arith.subf %14, %15 : vector<8x1xf32>
    %cst_9 = arith.constant 0.000000e+00 : f32
    %17 = vector.broadcast %cst_9 : f32 to vector<8x1xf32>
    %18 = arith.maximumf %16, %17 : vector<8x1xf32>
    %19 = vector.broadcast %9 : vector<8x1xf32> to vector<8x512xf32>
    %20 = arith.subf %5, %19 : vector<8x512xf32>
    %cst_10 = arith.constant 9.99999974E-6 : f32
    %21 = vector.broadcast %cst_10 : f32 to vector<8x1xf32>
    %22 = arith.addf %18, %21 : vector<8x1xf32>
    %23 = math.rsqrt %22 : vector<8x1xf32>
    %24 = vector.broadcast %23 : vector<8x1xf32> to vector<8x512xf32>
    %25 = arith.mulf %20, %24 : vector<8x512xf32>
    %c1 = arith.constant 1 : index
    %c0_11 = arith.constant 0 : index
    %26 = vector.load %arg3[%c1, %c0_11] : memref<3x512xf32, #tpu.memory_space<vmem>>, vector<1x512xf32>
    %27 = vector.broadcast %26 : vector<1x512xf32> to vector<8x512xf32>
    %28 = arith.mulf %25, %27 : vector<8x512xf32>
    %c2 = arith.constant 2 : index
    %c0_12 = arith.constant 0 : index
    %29 = vector.load %arg3[%c2, %c0_12] : memref<3x512xf32, #tpu.memory_space<vmem>>, vector<1x512xf32>
    %30 = vector.broadcast %29 : vector<1x512xf32> to vector<8x512xf32>
    %31 = arith.addf %28, %30 : vector<8x512xf32>
    %cst_13 = arith.constant 0.000000e+00 : f32
    %32 = vector.broadcast %cst_13 : f32 to vector<8x512xf32>
    %33 = arith.maximumf %31, %32 : vector<8x512xf32>
    %c0_14 = arith.constant 0 : index
    %c0_15 = arith.constant 0 : index
    %34 = vector.load %arg4[%c0_14, %c0_15] : memref<512x256xf32, #tpu.memory_space<vmem>>, vector<512x256xf32>
    %cst_16 = arith.constant dense<0.000000e+00> : vector<8x256xf32>
    %35 = tpu.matmul %33, %34, %cst_16 {dimension_numbers = #tpu.dot_dimension_numbers<[1], [0], [0], [1], [0, 0, 1, 1], [], []>} : vector<8x512xf32>, vector<512x256xf32>, vector<8x256xf32> -> vector<8x256xf32>
    %c0_17 = arith.constant 0 : index
    %c0_18 = arith.constant 0 : index
    %36 = vector.load %arg5[%c0_17, %c0_18] : memref<3x256xf32, #tpu.memory_space<vmem>>, vector<1x256xf32>
    %37 = vector.broadcast %36 : vector<1x256xf32> to vector<8x256xf32>
    %38 = arith.addf %35, %37 : vector<8x256xf32>
    %cst_19 = arith.constant dense<0.000000e+00> : vector<8xf32>
    %39 = vector.multi_reduction <add>, %38, %cst_19 [1] : vector<8x256xf32> to vector<8xf32>
    %40 = vector.shape_cast %39 : vector<8xf32> to vector<8x1xf32>
    %cst_20 = arith.constant 2.560000e+02 : f32
    %41 = vector.broadcast %cst_20 : f32 to vector<8x1xf32>
    %42 = arith.divf %40, %41 : vector<8x1xf32>
    %43 = arith.mulf %38, %38 : vector<8x256xf32>
    %cst_21 = arith.constant dense<0.000000e+00> : vector<8xf32>
    %44 = vector.multi_reduction <add>, %43, %cst_21 [1] : vector<8x256xf32> to vector<8xf32>
    %45 = vector.shape_cast %44 : vector<8xf32> to vector<8x1xf32>
    %cst_22 = arith.constant 2.560000e+02 : f32
    %46 = vector.broadcast %cst_22 : f32 to vector<8x1xf32>
    %47 = arith.divf %45, %46 : vector<8x1xf32>
    %48 = arith.mulf %42, %42 : vector<8x1xf32>
    %49 = arith.subf %47, %48 : vector<8x1xf32>
    %cst_23 = arith.constant 0.000000e+00 : f32
    %50 = vector.broadcast %cst_23 : f32 to vector<8x1xf32>
    %51 = arith.maximumf %49, %50 : vector<8x1xf32>
    %52 = vector.broadcast %42 : vector<8x1xf32> to vector<8x256xf32>
    %53 = arith.subf %38, %52 : vector<8x256xf32>
    %cst_24 = arith.constant 9.99999974E-6 : f32
    %54 = vector.broadcast %cst_24 : f32 to vector<8x1xf32>
    %55 = arith.addf %51, %54 : vector<8x1xf32>
    %56 = math.rsqrt %55 : vector<8x1xf32>
    %57 = vector.broadcast %56 : vector<8x1xf32> to vector<8x256xf32>
    %58 = arith.mulf %53, %57 : vector<8x256xf32>
    %c1_25 = arith.constant 1 : index
    %c0_26 = arith.constant 0 : index
    %59 = vector.load %arg5[%c1_25, %c0_26] : memref<3x256xf32, #tpu.memory_space<vmem>>, vector<1x256xf32>
    %60 = vector.broadcast %59 : vector<1x256xf32> to vector<8x256xf32>
    %61 = arith.mulf %58, %60 : vector<8x256xf32>
    %c2_27 = arith.constant 2 : index
    %c0_28 = arith.constant 0 : index
    %62 = vector.load %arg5[%c2_27, %c0_28] : memref<3x256xf32, #tpu.memory_space<vmem>>, vector<1x256xf32>
    %63 = vector.broadcast %62 : vector<1x256xf32> to vector<8x256xf32>
    %64 = arith.addf %61, %63 : vector<8x256xf32>
    %cst_29 = arith.constant 0.000000e+00 : f32
    %65 = vector.broadcast %cst_29 : f32 to vector<8x256xf32>
    %66 = arith.maximumf %64, %65 : vector<8x256xf32>
    %c0_30 = arith.constant 0 : index
    %c0_31 = arith.constant 0 : index
    %67 = vector.load %arg6[%c0_30, %c0_31] : memref<256x128xf32, #tpu.memory_space<vmem>>, vector<256x128xf32>
    %cst_32 = arith.constant dense<0.000000e+00> : vector<8x128xf32>
    %68 = tpu.matmul %66, %67, %cst_32 {dimension_numbers = #tpu.dot_dimension_numbers<[1], [0], [0], [1], [0, 0, 1, 1], [], []>} : vector<8x256xf32>, vector<256x128xf32>, vector<8x128xf32> -> vector<8x128xf32>
    %c0_33 = arith.constant 0 : index
    %c0_34 = arith.constant 0 : index
    %69 = vector.load %arg7[%c0_33, %c0_34] : memref<3x128xf32, #tpu.memory_space<vmem>>, vector<1x128xf32>
    %70 = vector.broadcast %69 : vector<1x128xf32> to vector<8x128xf32>
    %71 = arith.addf %68, %70 : vector<8x128xf32>
    %cst_35 = arith.constant dense<0.000000e+00> : vector<8xf32>
    %72 = vector.multi_reduction <add>, %71, %cst_35 [1] : vector<8x128xf32> to vector<8xf32>
    %73 = vector.shape_cast %72 : vector<8xf32> to vector<8x1xf32>
    %cst_36 = arith.constant 1.280000e+02 : f32
    %74 = vector.broadcast %cst_36 : f32 to vector<8x1xf32>
    %75 = arith.divf %73, %74 : vector<8x1xf32>
    %76 = arith.mulf %71, %71 : vector<8x128xf32>
    %cst_37 = arith.constant dense<0.000000e+00> : vector<8xf32>
    %77 = vector.multi_reduction <add>, %76, %cst_37 [1] : vector<8x128xf32> to vector<8xf32>
    %78 = vector.shape_cast %77 : vector<8xf32> to vector<8x1xf32>
    %cst_38 = arith.constant 1.280000e+02 : f32
    %79 = vector.broadcast %cst_38 : f32 to vector<8x1xf32>
    %80 = arith.divf %78, %79 : vector<8x1xf32>
    %81 = arith.mulf %75, %75 : vector<8x1xf32>
    %82 = arith.subf %80, %81 : vector<8x1xf32>
    %cst_39 = arith.constant 0.000000e+00 : f32
    %83 = vector.broadcast %cst_39 : f32 to vector<8x1xf32>
    %84 = arith.maximumf %82, %83 : vector<8x1xf32>
    %85 = vector.broadcast %75 : vector<8x1xf32> to vector<8x128xf32>
    %86 = arith.subf %71, %85 : vector<8x128xf32>
    %cst_40 = arith.constant 9.99999974E-6 : f32
    %87 = vector.broadcast %cst_40 : f32 to vector<8x1xf32>
    %88 = arith.addf %84, %87 : vector<8x1xf32>
    %89 = math.rsqrt %88 : vector<8x1xf32>
    %90 = vector.broadcast %89 : vector<8x1xf32> to vector<8x128xf32>
    %91 = arith.mulf %86, %90 : vector<8x128xf32>
    %c1_41 = arith.constant 1 : index
    %c0_42 = arith.constant 0 : index
    %92 = vector.load %arg7[%c1_41, %c0_42] : memref<3x128xf32, #tpu.memory_space<vmem>>, vector<1x128xf32>
    %93 = vector.broadcast %92 : vector<1x128xf32> to vector<8x128xf32>
    %94 = arith.mulf %91, %93 : vector<8x128xf32>
    %c2_43 = arith.constant 2 : index
    %c0_44 = arith.constant 0 : index
    %95 = vector.load %arg7[%c2_43, %c0_44] : memref<3x128xf32, #tpu.memory_space<vmem>>, vector<1x128xf32>
    %96 = vector.broadcast %95 : vector<1x128xf32> to vector<8x128xf32>
    %97 = arith.addf %94, %96 : vector<8x128xf32>
    %cst_45 = arith.constant 0.000000e+00 : f32
    %98 = vector.broadcast %cst_45 : f32 to vector<8x128xf32>
    %99 = arith.maximumf %97, %98 : vector<8x128xf32>
    %c0_46 = arith.constant 0 : index
    %c0_47 = arith.constant 0 : index
    %100 = vector.load %arg8[%c0_46, %c0_47] : memref<128x64xf32, #tpu.memory_space<vmem>>, vector<128x64xf32>
    %cst_48 = arith.constant dense<0.000000e+00> : vector<8x64xf32>
    %101 = tpu.matmul %99, %100, %cst_48 {dimension_numbers = #tpu.dot_dimension_numbers<[1], [0], [0], [1], [0, 0, 1, 1], [], []>} : vector<8x128xf32>, vector<128x64xf32>, vector<8x64xf32> -> vector<8x64xf32>
    %c0_49 = arith.constant 0 : index
    %c0_50 = arith.constant 0 : index
    %102 = vector.load %arg9[%c0_49, %c0_50] : memref<3x64xf32, #tpu.memory_space<vmem>>, vector<1x64xf32>
    %103 = vector.broadcast %102 : vector<1x64xf32> to vector<8x64xf32>
    %104 = arith.addf %101, %103 : vector<8x64xf32>
    %cst_51 = arith.constant dense<0.000000e+00> : vector<8xf32>
    %105 = vector.multi_reduction <add>, %104, %cst_51 [1] : vector<8x64xf32> to vector<8xf32>
    %106 = vector.shape_cast %105 : vector<8xf32> to vector<8x1xf32>
    %cst_52 = arith.constant 6.400000e+01 : f32
    %107 = vector.broadcast %cst_52 : f32 to vector<8x1xf32>
    %108 = arith.divf %106, %107 : vector<8x1xf32>
    %109 = arith.mulf %104, %104 : vector<8x64xf32>
    %cst_53 = arith.constant dense<0.000000e+00> : vector<8xf32>
    %110 = vector.multi_reduction <add>, %109, %cst_53 [1] : vector<8x64xf32> to vector<8xf32>
    %111 = vector.shape_cast %110 : vector<8xf32> to vector<8x1xf32>
    %cst_54 = arith.constant 6.400000e+01 : f32
    %112 = vector.broadcast %cst_54 : f32 to vector<8x1xf32>
    %113 = arith.divf %111, %112 : vector<8x1xf32>
    %114 = arith.mulf %108, %108 : vector<8x1xf32>
    %115 = arith.subf %113, %114 : vector<8x1xf32>
    %cst_55 = arith.constant 0.000000e+00 : f32
    %116 = vector.broadcast %cst_55 : f32 to vector<8x1xf32>
    %117 = arith.maximumf %115, %116 : vector<8x1xf32>
    %118 = vector.broadcast %108 : vector<8x1xf32> to vector<8x64xf32>
    %119 = arith.subf %104, %118 : vector<8x64xf32>
    %cst_56 = arith.constant 9.99999974E-6 : f32
    %120 = vector.broadcast %cst_56 : f32 to vector<8x1xf32>
    %121 = arith.addf %117, %120 : vector<8x1xf32>
    %122 = math.rsqrt %121 : vector<8x1xf32>
    %123 = vector.broadcast %122 : vector<8x1xf32> to vector<8x64xf32>
    %124 = arith.mulf %119, %123 : vector<8x64xf32>
    %c1_57 = arith.constant 1 : index
    %c0_58 = arith.constant 0 : index
    %125 = vector.load %arg9[%c1_57, %c0_58] : memref<3x64xf32, #tpu.memory_space<vmem>>, vector<1x64xf32>
    %126 = vector.broadcast %125 : vector<1x64xf32> to vector<8x64xf32>
    %127 = arith.mulf %124, %126 : vector<8x64xf32>
    %c2_59 = arith.constant 2 : index
    %c0_60 = arith.constant 0 : index
    %128 = vector.load %arg9[%c2_59, %c0_60] : memref<3x64xf32, #tpu.memory_space<vmem>>, vector<1x64xf32>
    %129 = vector.broadcast %128 : vector<1x64xf32> to vector<8x64xf32>
    %130 = arith.addf %127, %129 : vector<8x64xf32>
    %cst_61 = arith.constant 0.000000e+00 : f32
    %131 = vector.broadcast %cst_61 : f32 to vector<8x64xf32>
    %132 = arith.maximumf %130, %131 : vector<8x64xf32>
    %c0_62 = arith.constant 0 : index
    %c0_63 = arith.constant 0 : index
    %133 = vector.load %arg10[%c0_62, %c0_63] : memref<64x64xf32, #tpu.memory_space<vmem>>, vector<64x64xf32>
    %cst_64 = arith.constant dense<0.000000e+00> : vector<8x64xf32>
    %134 = tpu.matmul %132, %133, %cst_64 {dimension_numbers = #tpu.dot_dimension_numbers<[1], [0], [0], [1], [0, 0, 1, 1], [], []>} : vector<8x64xf32>, vector<64x64xf32>, vector<8x64xf32> -> vector<8x64xf32>
    %c0_65 = arith.constant 0 : index
    %c0_66 = arith.constant 0 : index
    %135 = vector.load %arg11[%c0_65, %c0_66] : memref<3x64xf32, #tpu.memory_space<vmem>>, vector<1x64xf32>
    %136 = vector.broadcast %135 : vector<1x64xf32> to vector<8x64xf32>
    %137 = arith.addf %134, %136 : vector<8x64xf32>
    %cst_67 = arith.constant dense<0.000000e+00> : vector<8xf32>
    %138 = vector.multi_reduction <add>, %137, %cst_67 [1] : vector<8x64xf32> to vector<8xf32>
    %139 = vector.shape_cast %138 : vector<8xf32> to vector<8x1xf32>
    %cst_68 = arith.constant 6.400000e+01 : f32
    %140 = vector.broadcast %cst_68 : f32 to vector<8x1xf32>
    %141 = arith.divf %139, %140 : vector<8x1xf32>
    %142 = arith.mulf %137, %137 : vector<8x64xf32>
    %cst_69 = arith.constant dense<0.000000e+00> : vector<8xf32>
    %143 = vector.multi_reduction <add>, %142, %cst_69 [1] : vector<8x64xf32> to vector<8xf32>
    %144 = vector.shape_cast %143 : vector<8xf32> to vector<8x1xf32>
    %cst_70 = arith.constant 6.400000e+01 : f32
    %145 = vector.broadcast %cst_70 : f32 to vector<8x1xf32>
    %146 = arith.divf %144, %145 : vector<8x1xf32>
    %147 = arith.mulf %141, %141 : vector<8x1xf32>
    %148 = arith.subf %146, %147 : vector<8x1xf32>
    %cst_71 = arith.constant 0.000000e+00 : f32
    %149 = vector.broadcast %cst_71 : f32 to vector<8x1xf32>
    %150 = arith.maximumf %148, %149 : vector<8x1xf32>
    %151 = vector.broadcast %141 : vector<8x1xf32> to vector<8x64xf32>
    %152 = arith.subf %137, %151 : vector<8x64xf32>
    %cst_72 = arith.constant 9.99999974E-6 : f32
    %153 = vector.broadcast %cst_72 : f32 to vector<8x1xf32>
    %154 = arith.addf %150, %153 : vector<8x1xf32>
    %155 = math.rsqrt %154 : vector<8x1xf32>
    %156 = vector.broadcast %155 : vector<8x1xf32> to vector<8x64xf32>
    %157 = arith.mulf %152, %156 : vector<8x64xf32>
    %c1_73 = arith.constant 1 : index
    %c0_74 = arith.constant 0 : index
    %158 = vector.load %arg11[%c1_73, %c0_74] : memref<3x64xf32, #tpu.memory_space<vmem>>, vector<1x64xf32>
    %159 = vector.broadcast %158 : vector<1x64xf32> to vector<8x64xf32>
    %160 = arith.mulf %157, %159 : vector<8x64xf32>
    %c2_75 = arith.constant 2 : index
    %c0_76 = arith.constant 0 : index
    %161 = vector.load %arg11[%c2_75, %c0_76] : memref<3x64xf32, #tpu.memory_space<vmem>>, vector<1x64xf32>
    %162 = vector.broadcast %161 : vector<1x64xf32> to vector<8x64xf32>
    %163 = arith.addf %160, %162 : vector<8x64xf32>
    %cst_77 = arith.constant 0.000000e+00 : f32
    %164 = vector.broadcast %cst_77 : f32 to vector<8x64xf32>
    %165 = arith.maximumf %163, %164 : vector<8x64xf32>
    %c0_78 = arith.constant 0 : index
    %c0_79 = arith.constant 0 : index
    %166 = vector.load %arg12[%c0_78, %c0_79] : memref<64x32xf32, #tpu.memory_space<vmem>>, vector<64x32xf32>
    %cst_80 = arith.constant dense<0.000000e+00> : vector<8x32xf32>
    %167 = tpu.matmul %165, %166, %cst_80 {dimension_numbers = #tpu.dot_dimension_numbers<[1], [0], [0], [1], [0, 0, 1, 1], [], []>} : vector<8x64xf32>, vector<64x32xf32>, vector<8x32xf32> -> vector<8x32xf32>
    %c0_81 = arith.constant 0 : index
    %c0_82 = arith.constant 0 : index
    %168 = vector.load %arg13[%c0_81, %c0_82] : memref<3x32xf32, #tpu.memory_space<vmem>>, vector<1x32xf32>
    %169 = vector.broadcast %168 : vector<1x32xf32> to vector<8x32xf32>
    %170 = arith.addf %167, %169 : vector<8x32xf32>
    %cst_83 = arith.constant dense<0.000000e+00> : vector<8xf32>
    %171 = vector.multi_reduction <add>, %170, %cst_83 [1] : vector<8x32xf32> to vector<8xf32>
    %172 = vector.shape_cast %171 : vector<8xf32> to vector<8x1xf32>
    %cst_84 = arith.constant 3.200000e+01 : f32
    %173 = vector.broadcast %cst_84 : f32 to vector<8x1xf32>
    %174 = arith.divf %172, %173 : vector<8x1xf32>
    %175 = arith.mulf %170, %170 : vector<8x32xf32>
    %cst_85 = arith.constant dense<0.000000e+00> : vector<8xf32>
    %176 = vector.multi_reduction <add>, %175, %cst_85 [1] : vector<8x32xf32> to vector<8xf32>
    %177 = vector.shape_cast %176 : vector<8xf32> to vector<8x1xf32>
    %cst_86 = arith.constant 3.200000e+01 : f32
    %178 = vector.broadcast %cst_86 : f32 to vector<8x1xf32>
    %179 = arith.divf %177, %178 : vector<8x1xf32>
    %180 = arith.mulf %174, %174 : vector<8x1xf32>
    %181 = arith.subf %179, %180 : vector<8x1xf32>
    %cst_87 = arith.constant 0.000000e+00 : f32
    %182 = vector.broadcast %cst_87 : f32 to vector<8x1xf32>
    %183 = arith.maximumf %181, %182 : vector<8x1xf32>
    %184 = vector.broadcast %174 : vector<8x1xf32> to vector<8x32xf32>
    %185 = arith.subf %170, %184 : vector<8x32xf32>
    %cst_88 = arith.constant 9.99999974E-6 : f32
    %186 = vector.broadcast %cst_88 : f32 to vector<8x1xf32>
    %187 = arith.addf %183, %186 : vector<8x1xf32>
    %188 = math.rsqrt %187 : vector<8x1xf32>
    %189 = vector.broadcast %188 : vector<8x1xf32> to vector<8x32xf32>
    %190 = arith.mulf %185, %189 : vector<8x32xf32>
    %c1_89 = arith.constant 1 : index
    %c0_90 = arith.constant 0 : index
    %191 = vector.load %arg13[%c1_89, %c0_90] : memref<3x32xf32, #tpu.memory_space<vmem>>, vector<1x32xf32>
    %192 = vector.broadcast %191 : vector<1x32xf32> to vector<8x32xf32>
    %193 = arith.mulf %190, %192 : vector<8x32xf32>
    %c2_91 = arith.constant 2 : index
    %c0_92 = arith.constant 0 : index
    %194 = vector.load %arg13[%c2_91, %c0_92] : memref<3x32xf32, #tpu.memory_space<vmem>>, vector<1x32xf32>
    %195 = vector.broadcast %194 : vector<1x32xf32> to vector<8x32xf32>
    %196 = arith.addf %193, %195 : vector<8x32xf32>
    %cst_93 = arith.constant 0.000000e+00 : f32
    %197 = vector.broadcast %cst_93 : f32 to vector<8x32xf32>
    %198 = arith.maximumf %196, %197 : vector<8x32xf32>
    %c0_94 = arith.constant 0 : index
    %c0_95 = arith.constant 0 : index
    %199 = vector.load %arg14[%c0_94, %c0_95] : memref<32x16xf32, #tpu.memory_space<vmem>>, vector<32x16xf32>
    %cst_96 = arith.constant dense<0.000000e+00> : vector<8x16xf32>
    %200 = tpu.matmul %198, %199, %cst_96 {dimension_numbers = #tpu.dot_dimension_numbers<[1], [0], [0], [1], [0, 0, 1, 1], [], []>} : vector<8x32xf32>, vector<32x16xf32>, vector<8x16xf32> -> vector<8x16xf32>
    %c0_97 = arith.constant 0 : index
    %c0_98 = arith.constant 0 : index
    %201 = vector.load %arg15[%c0_97, %c0_98] : memref<3x16xf32, #tpu.memory_space<vmem>>, vector<1x16xf32>
    %202 = vector.broadcast %201 : vector<1x16xf32> to vector<8x16xf32>
    %203 = arith.addf %200, %202 : vector<8x16xf32>
    %cst_99 = arith.constant dense<0.000000e+00> : vector<8xf32>
    %204 = vector.multi_reduction <add>, %203, %cst_99 [1] : vector<8x16xf32> to vector<8xf32>
    %205 = vector.shape_cast %204 : vector<8xf32> to vector<8x1xf32>
    %cst_100 = arith.constant 1.600000e+01 : f32
    %206 = vector.broadcast %cst_100 : f32 to vector<8x1xf32>
    %207 = arith.divf %205, %206 : vector<8x1xf32>
    %208 = arith.mulf %203, %203 : vector<8x16xf32>
    %cst_101 = arith.constant dense<0.000000e+00> : vector<8xf32>
    %209 = vector.multi_reduction <add>, %208, %cst_101 [1] : vector<8x16xf32> to vector<8xf32>
    %210 = vector.shape_cast %209 : vector<8xf32> to vector<8x1xf32>
    %cst_102 = arith.constant 1.600000e+01 : f32
    %211 = vector.broadcast %cst_102 : f32 to vector<8x1xf32>
    %212 = arith.divf %210, %211 : vector<8x1xf32>
    %213 = arith.mulf %207, %207 : vector<8x1xf32>
    %214 = arith.subf %212, %213 : vector<8x1xf32>
    %cst_103 = arith.constant 0.000000e+00 : f32
    %215 = vector.broadcast %cst_103 : f32 to vector<8x1xf32>
    %216 = arith.maximumf %214, %215 : vector<8x1xf32>
    %217 = vector.broadcast %207 : vector<8x1xf32> to vector<8x16xf32>
    %218 = arith.subf %203, %217 : vector<8x16xf32>
    %cst_104 = arith.constant 9.99999974E-6 : f32
    %219 = vector.broadcast %cst_104 : f32 to vector<8x1xf32>
    %220 = arith.addf %216, %219 : vector<8x1xf32>
    %221 = math.rsqrt %220 : vector<8x1xf32>
    %222 = vector.broadcast %221 : vector<8x1xf32> to vector<8x16xf32>
    %223 = arith.mulf %218, %222 : vector<8x16xf32>
    %c1_105 = arith.constant 1 : index
    %c0_106 = arith.constant 0 : index
    %224 = vector.load %arg15[%c1_105, %c0_106] : memref<3x16xf32, #tpu.memory_space<vmem>>, vector<1x16xf32>
    %225 = vector.broadcast %224 : vector<1x16xf32> to vector<8x16xf32>
    %226 = arith.mulf %223, %225 : vector<8x16xf32>
    %c2_107 = arith.constant 2 : index
    %c0_108 = arith.constant 0 : index
    %227 = vector.load %arg15[%c2_107, %c0_108] : memref<3x16xf32, #tpu.memory_space<vmem>>, vector<1x16xf32>
    %228 = vector.broadcast %227 : vector<1x16xf32> to vector<8x16xf32>
    %229 = arith.addf %226, %228 : vector<8x16xf32>
    %cst_109 = arith.constant 0.000000e+00 : f32
    %230 = vector.broadcast %cst_109 : f32 to vector<8x16xf32>
    %231 = arith.maximumf %229, %230 : vector<8x16xf32>
    %c0_110 = arith.constant 0 : index
    %c0_111 = arith.constant 0 : index
    %232 = vector.load %arg16[%c0_110, %c0_111] : memref<16x8xf32, #tpu.memory_space<vmem>>, vector<16x8xf32>
    %cst_112 = arith.constant dense<0.000000e+00> : vector<8x8xf32>
    %233 = tpu.matmul %231, %232, %cst_112 {dimension_numbers = #tpu.dot_dimension_numbers<[1], [0], [0], [1], [0, 0, 1, 1], [], []>} : vector<8x16xf32>, vector<16x8xf32>, vector<8x8xf32> -> vector<8x8xf32>
    %c0_113 = arith.constant 0 : index
    %c0_114 = arith.constant 0 : index
    %234 = vector.load %arg17[%c0_113, %c0_114] : memref<3x8xf32, #tpu.memory_space<vmem>>, vector<1x8xf32>
    %235 = vector.broadcast %234 : vector<1x8xf32> to vector<8x8xf32>
    %236 = arith.addf %233, %235 : vector<8x8xf32>
    %cst_115 = arith.constant dense<0.000000e+00> : vector<8xf32>
    %237 = vector.multi_reduction <add>, %236, %cst_115 [1] : vector<8x8xf32> to vector<8xf32>
    %238 = vector.shape_cast %237 : vector<8xf32> to vector<8x1xf32>
    %cst_116 = arith.constant 8.000000e+00 : f32
    %239 = vector.broadcast %cst_116 : f32 to vector<8x1xf32>
    %240 = arith.divf %238, %239 : vector<8x1xf32>
    %241 = arith.mulf %236, %236 : vector<8x8xf32>
    %cst_117 = arith.constant dense<0.000000e+00> : vector<8xf32>
    %242 = vector.multi_reduction <add>, %241, %cst_117 [1] : vector<8x8xf32> to vector<8xf32>
    %243 = vector.shape_cast %242 : vector<8xf32> to vector<8x1xf32>
    %cst_118 = arith.constant 8.000000e+00 : f32
    %244 = vector.broadcast %cst_118 : f32 to vector<8x1xf32>
    %245 = arith.divf %243, %244 : vector<8x1xf32>
    %246 = arith.mulf %240, %240 : vector<8x1xf32>
    %247 = arith.subf %245, %246 : vector<8x1xf32>
    %cst_119 = arith.constant 0.000000e+00 : f32
    %248 = vector.broadcast %cst_119 : f32 to vector<8x1xf32>
    %249 = arith.maximumf %247, %248 : vector<8x1xf32>
    %250 = vector.broadcast %240 : vector<8x1xf32> to vector<8x8xf32>
    %251 = arith.subf %236, %250 : vector<8x8xf32>
    %cst_120 = arith.constant 9.99999974E-6 : f32
    %252 = vector.broadcast %cst_120 : f32 to vector<8x1xf32>
    %253 = arith.addf %249, %252 : vector<8x1xf32>
    %254 = math.rsqrt %253 : vector<8x1xf32>
    %255 = vector.broadcast %254 : vector<8x1xf32> to vector<8x8xf32>
    %256 = arith.mulf %251, %255 : vector<8x8xf32>
    %c1_121 = arith.constant 1 : index
    %c0_122 = arith.constant 0 : index
    %257 = vector.load %arg17[%c1_121, %c0_122] : memref<3x8xf32, #tpu.memory_space<vmem>>, vector<1x8xf32>
    %258 = vector.broadcast %257 : vector<1x8xf32> to vector<8x8xf32>
    %259 = arith.mulf %256, %258 : vector<8x8xf32>
    %c2_123 = arith.constant 2 : index
    %c0_124 = arith.constant 0 : index
    %260 = vector.load %arg17[%c2_123, %c0_124] : memref<3x8xf32, #tpu.memory_space<vmem>>, vector<1x8xf32>
    %261 = vector.broadcast %260 : vector<1x8xf32> to vector<8x8xf32>
    %262 = arith.addf %259, %261 : vector<8x8xf32>
    %cst_125 = arith.constant 0.000000e+00 : f32
    %263 = vector.broadcast %cst_125 : f32 to vector<8x8xf32>
    %264 = arith.maximumf %262, %263 : vector<8x8xf32>
    %c0_126 = arith.constant 0 : index
    %c0_127 = arith.constant 0 : index
    %265 = vector.load %arg18[%c0_126, %c0_127] : memref<8x16xf32, #tpu.memory_space<vmem>>, vector<8x16xf32>
    %cst_128 = arith.constant dense<0.000000e+00> : vector<8x16xf32>
    %266 = tpu.matmul %264, %265, %cst_128 {dimension_numbers = #tpu.dot_dimension_numbers<[1], [0], [0], [1], [0, 0, 1, 1], [], []>} : vector<8x8xf32>, vector<8x16xf32>, vector<8x16xf32> -> vector<8x16xf32>
    %c0_129 = arith.constant 0 : index
    %c0_130 = arith.constant 0 : index
    %267 = vector.load %arg19[%c0_129, %c0_130] : memref<3x16xf32, #tpu.memory_space<vmem>>, vector<1x16xf32>
    %268 = vector.broadcast %267 : vector<1x16xf32> to vector<8x16xf32>
    %269 = arith.addf %266, %268 : vector<8x16xf32>
    %cst_131 = arith.constant dense<0.000000e+00> : vector<8xf32>
    %270 = vector.multi_reduction <add>, %269, %cst_131 [1] : vector<8x16xf32> to vector<8xf32>
    %271 = vector.shape_cast %270 : vector<8xf32> to vector<8x1xf32>
    %cst_132 = arith.constant 1.600000e+01 : f32
    %272 = vector.broadcast %cst_132 : f32 to vector<8x1xf32>
    %273 = arith.divf %271, %272 : vector<8x1xf32>
    %274 = arith.mulf %269, %269 : vector<8x16xf32>
    %cst_133 = arith.constant dense<0.000000e+00> : vector<8xf32>
    %275 = vector.multi_reduction <add>, %274, %cst_133 [1] : vector<8x16xf32> to vector<8xf32>
    %276 = vector.shape_cast %275 : vector<8xf32> to vector<8x1xf32>
    %cst_134 = arith.constant 1.600000e+01 : f32
    %277 = vector.broadcast %cst_134 : f32 to vector<8x1xf32>
    %278 = arith.divf %276, %277 : vector<8x1xf32>
    %279 = arith.mulf %273, %273 : vector<8x1xf32>
    %280 = arith.subf %278, %279 : vector<8x1xf32>
    %cst_135 = arith.constant 0.000000e+00 : f32
    %281 = vector.broadcast %cst_135 : f32 to vector<8x1xf32>
    %282 = arith.maximumf %280, %281 : vector<8x1xf32>
    %283 = vector.broadcast %273 : vector<8x1xf32> to vector<8x16xf32>
    %284 = arith.subf %269, %283 : vector<8x16xf32>
    %cst_136 = arith.constant 9.99999974E-6 : f32
    %285 = vector.broadcast %cst_136 : f32 to vector<8x1xf32>
    %286 = arith.addf %282, %285 : vector<8x1xf32>
    %287 = math.rsqrt %286 : vector<8x1xf32>
    %288 = vector.broadcast %287 : vector<8x1xf32> to vector<8x16xf32>
    %289 = arith.mulf %284, %288 : vector<8x16xf32>
    %c1_137 = arith.constant 1 : index
    %c0_138 = arith.constant 0 : index
    %290 = vector.load %arg19[%c1_137, %c0_138] : memref<3x16xf32, #tpu.memory_space<vmem>>, vector<1x16xf32>
    %291 = vector.broadcast %290 : vector<1x16xf32> to vector<8x16xf32>
    %292 = arith.mulf %289, %291 : vector<8x16xf32>
    %c2_139 = arith.constant 2 : index
    %c0_140 = arith.constant 0 : index
    %293 = vector.load %arg19[%c2_139, %c0_140] : memref<3x16xf32, #tpu.memory_space<vmem>>, vector<1x16xf32>
    %294 = vector.broadcast %293 : vector<1x16xf32> to vector<8x16xf32>
    %295 = arith.addf %292, %294 : vector<8x16xf32>
    %cst_141 = arith.constant 0.000000e+00 : f32
    %296 = vector.broadcast %cst_141 : f32 to vector<8x16xf32>
    %297 = arith.maximumf %295, %296 : vector<8x16xf32>
    %c0_142 = arith.constant 0 : index
    %c0_143 = arith.constant 0 : index
    %298 = vector.load %arg20[%c0_142, %c0_143] : memref<16x16xf32, #tpu.memory_space<vmem>>, vector<16x16xf32>
    %cst_144 = arith.constant dense<0.000000e+00> : vector<8x16xf32>
    %299 = tpu.matmul %297, %298, %cst_144 {dimension_numbers = #tpu.dot_dimension_numbers<[1], [0], [0], [1], [0, 0, 1, 1], [], []>} : vector<8x16xf32>, vector<16x16xf32>, vector<8x16xf32> -> vector<8x16xf32>
    %c0_145 = arith.constant 0 : index
    %c0_146 = arith.constant 0 : index
    %300 = vector.load %arg21[%c0_145, %c0_146] : memref<3x16xf32, #tpu.memory_space<vmem>>, vector<1x16xf32>
    %301 = vector.broadcast %300 : vector<1x16xf32> to vector<8x16xf32>
    %302 = arith.addf %299, %301 : vector<8x16xf32>
    %cst_147 = arith.constant dense<0.000000e+00> : vector<8xf32>
    %303 = vector.multi_reduction <add>, %302, %cst_147 [1] : vector<8x16xf32> to vector<8xf32>
    %304 = vector.shape_cast %303 : vector<8xf32> to vector<8x1xf32>
    %cst_148 = arith.constant 1.600000e+01 : f32
    %305 = vector.broadcast %cst_148 : f32 to vector<8x1xf32>
    %306 = arith.divf %304, %305 : vector<8x1xf32>
    %307 = arith.mulf %302, %302 : vector<8x16xf32>
    %cst_149 = arith.constant dense<0.000000e+00> : vector<8xf32>
    %308 = vector.multi_reduction <add>, %307, %cst_149 [1] : vector<8x16xf32> to vector<8xf32>
    %309 = vector.shape_cast %308 : vector<8xf32> to vector<8x1xf32>
    %cst_150 = arith.constant 1.600000e+01 : f32
    %310 = vector.broadcast %cst_150 : f32 to vector<8x1xf32>
    %311 = arith.divf %309, %310 : vector<8x1xf32>
    %312 = arith.mulf %306, %306 : vector<8x1xf32>
    %313 = arith.subf %311, %312 : vector<8x1xf32>
    %cst_151 = arith.constant 0.000000e+00 : f32
    %314 = vector.broadcast %cst_151 : f32 to vector<8x1xf32>
    %315 = arith.maximumf %313, %314 : vector<8x1xf32>
    %316 = vector.broadcast %306 : vector<8x1xf32> to vector<8x16xf32>
    %317 = arith.subf %302, %316 : vector<8x16xf32>
    %cst_152 = arith.constant 9.99999974E-6 : f32
    %318 = vector.broadcast %cst_152 : f32 to vector<8x1xf32>
    %319 = arith.addf %315, %318 : vector<8x1xf32>
    %320 = math.rsqrt %319 : vector<8x1xf32>
    %321 = vector.broadcast %320 : vector<8x1xf32> to vector<8x16xf32>
    %322 = arith.mulf %317, %321 : vector<8x16xf32>
    %c1_153 = arith.constant 1 : index
    %c0_154 = arith.constant 0 : index
    %323 = vector.load %arg21[%c1_153, %c0_154] : memref<3x16xf32, #tpu.memory_space<vmem>>, vector<1x16xf32>
    %324 = vector.broadcast %323 : vector<1x16xf32> to vector<8x16xf32>
    %325 = arith.mulf %322, %324 : vector<8x16xf32>
    %c2_155 = arith.constant 2 : index
    %c0_156 = arith.constant 0 : index
    %326 = vector.load %arg21[%c2_155, %c0_156] : memref<3x16xf32, #tpu.memory_space<vmem>>, vector<1x16xf32>
    %327 = vector.broadcast %326 : vector<1x16xf32> to vector<8x16xf32>
    %328 = arith.addf %325, %327 : vector<8x16xf32>
    %cst_157 = arith.constant 0.000000e+00 : f32
    %329 = vector.broadcast %cst_157 : f32 to vector<8x16xf32>
    %330 = arith.maximumf %328, %329 : vector<8x16xf32>
    %c0_158 = arith.constant 0 : index
    %c0_159 = arith.constant 0 : index
    %331 = vector.load %arg22[%c0_158, %c0_159] : memref<16x16xf32, #tpu.memory_space<vmem>>, vector<16x16xf32>
    %cst_160 = arith.constant dense<0.000000e+00> : vector<8x16xf32>
    %332 = tpu.matmul %330, %331, %cst_160 {dimension_numbers = #tpu.dot_dimension_numbers<[1], [0], [0], [1], [0, 0, 1, 1], [], []>} : vector<8x16xf32>, vector<16x16xf32>, vector<8x16xf32> -> vector<8x16xf32>
    %c0_161 = arith.constant 0 : index
    %c0_162 = arith.constant 0 : index
    %333 = vector.load %arg23[%c0_161, %c0_162] : memref<3x16xf32, #tpu.memory_space<vmem>>, vector<1x16xf32>
    %334 = vector.broadcast %333 : vector<1x16xf32> to vector<8x16xf32>
    %335 = arith.addf %332, %334 : vector<8x16xf32>
    %cst_163 = arith.constant dense<0.000000e+00> : vector<8xf32>
    %336 = vector.multi_reduction <add>, %335, %cst_163 [1] : vector<8x16xf32> to vector<8xf32>
    %337 = vector.shape_cast %336 : vector<8xf32> to vector<8x1xf32>
    %cst_164 = arith.constant 1.600000e+01 : f32
    %338 = vector.broadcast %cst_164 : f32 to vector<8x1xf32>
    %339 = arith.divf %337, %338 : vector<8x1xf32>
    %340 = arith.mulf %335, %335 : vector<8x16xf32>
    %cst_165 = arith.constant dense<0.000000e+00> : vector<8xf32>
    %341 = vector.multi_reduction <add>, %340, %cst_165 [1] : vector<8x16xf32> to vector<8xf32>
    %342 = vector.shape_cast %341 : vector<8xf32> to vector<8x1xf32>
    %cst_166 = arith.constant 1.600000e+01 : f32
    %343 = vector.broadcast %cst_166 : f32 to vector<8x1xf32>
    %344 = arith.divf %342, %343 : vector<8x1xf32>
    %345 = arith.mulf %339, %339 : vector<8x1xf32>
    %346 = arith.subf %344, %345 : vector<8x1xf32>
    %cst_167 = arith.constant 0.000000e+00 : f32
    %347 = vector.broadcast %cst_167 : f32 to vector<8x1xf32>
    %348 = arith.maximumf %346, %347 : vector<8x1xf32>
    %349 = vector.broadcast %339 : vector<8x1xf32> to vector<8x16xf32>
    %350 = arith.subf %335, %349 : vector<8x16xf32>
    %cst_168 = arith.constant 9.99999974E-6 : f32
    %351 = vector.broadcast %cst_168 : f32 to vector<8x1xf32>
    %352 = arith.addf %348, %351 : vector<8x1xf32>
    %353 = math.rsqrt %352 : vector<8x1xf32>
    %354 = vector.broadcast %353 : vector<8x1xf32> to vector<8x16xf32>
    %355 = arith.mulf %350, %354 : vector<8x16xf32>
    %c1_169 = arith.constant 1 : index
    %c0_170 = arith.constant 0 : index
    %356 = vector.load %arg23[%c1_169, %c0_170] : memref<3x16xf32, #tpu.memory_space<vmem>>, vector<1x16xf32>
    %357 = vector.broadcast %356 : vector<1x16xf32> to vector<8x16xf32>
    %358 = arith.mulf %355, %357 : vector<8x16xf32>
    %c2_171 = arith.constant 2 : index
    %c0_172 = arith.constant 0 : index
    %359 = vector.load %arg23[%c2_171, %c0_172] : memref<3x16xf32, #tpu.memory_space<vmem>>, vector<1x16xf32>
    %360 = vector.broadcast %359 : vector<1x16xf32> to vector<8x16xf32>
    %361 = arith.addf %358, %360 : vector<8x16xf32>
    %cst_173 = arith.constant 0.000000e+00 : f32
    %362 = vector.broadcast %cst_173 : f32 to vector<8x16xf32>
    %363 = arith.maximumf %361, %362 : vector<8x16xf32>
    %c0_174 = arith.constant 0 : index
    %c0_175 = arith.constant 0 : index
    %364 = vector.load %arg24[%c0_174, %c0_175] : memref<16x16xf32, #tpu.memory_space<vmem>>, vector<16x16xf32>
    %cst_176 = arith.constant dense<0.000000e+00> : vector<8x16xf32>
    %365 = tpu.matmul %363, %364, %cst_176 {dimension_numbers = #tpu.dot_dimension_numbers<[1], [0], [0], [1], [0, 0, 1, 1], [], []>} : vector<8x16xf32>, vector<16x16xf32>, vector<8x16xf32> -> vector<8x16xf32>
    %c0_177 = arith.constant 0 : index
    %c0_178 = arith.constant 0 : index
    %366 = vector.load %arg25[%c0_177, %c0_178] : memref<3x16xf32, #tpu.memory_space<vmem>>, vector<1x16xf32>
    %367 = vector.broadcast %366 : vector<1x16xf32> to vector<8x16xf32>
    %368 = arith.addf %365, %367 : vector<8x16xf32>
    %cst_179 = arith.constant dense<0.000000e+00> : vector<8xf32>
    %369 = vector.multi_reduction <add>, %368, %cst_179 [1] : vector<8x16xf32> to vector<8xf32>
    %370 = vector.shape_cast %369 : vector<8xf32> to vector<8x1xf32>
    %cst_180 = arith.constant 1.600000e+01 : f32
    %371 = vector.broadcast %cst_180 : f32 to vector<8x1xf32>
    %372 = arith.divf %370, %371 : vector<8x1xf32>
    %373 = arith.mulf %368, %368 : vector<8x16xf32>
    %cst_181 = arith.constant dense<0.000000e+00> : vector<8xf32>
    %374 = vector.multi_reduction <add>, %373, %cst_181 [1] : vector<8x16xf32> to vector<8xf32>
    %375 = vector.shape_cast %374 : vector<8xf32> to vector<8x1xf32>
    %cst_182 = arith.constant 1.600000e+01 : f32
    %376 = vector.broadcast %cst_182 : f32 to vector<8x1xf32>
    %377 = arith.divf %375, %376 : vector<8x1xf32>
    %378 = arith.mulf %372, %372 : vector<8x1xf32>
    %379 = arith.subf %377, %378 : vector<8x1xf32>
    %cst_183 = arith.constant 0.000000e+00 : f32
    %380 = vector.broadcast %cst_183 : f32 to vector<8x1xf32>
    %381 = arith.maximumf %379, %380 : vector<8x1xf32>
    %382 = vector.broadcast %372 : vector<8x1xf32> to vector<8x16xf32>
    %383 = arith.subf %368, %382 : vector<8x16xf32>
    %cst_184 = arith.constant 9.99999974E-6 : f32
    %384 = vector.broadcast %cst_184 : f32 to vector<8x1xf32>
    %385 = arith.addf %381, %384 : vector<8x1xf32>
    %386 = math.rsqrt %385 : vector<8x1xf32>
    %387 = vector.broadcast %386 : vector<8x1xf32> to vector<8x16xf32>
    %388 = arith.mulf %383, %387 : vector<8x16xf32>
    %c1_185 = arith.constant 1 : index
    %c0_186 = arith.constant 0 : index
    %389 = vector.load %arg25[%c1_185, %c0_186] : memref<3x16xf32, #tpu.memory_space<vmem>>, vector<1x16xf32>
    %390 = vector.broadcast %389 : vector<1x16xf32> to vector<8x16xf32>
    %391 = arith.mulf %388, %390 : vector<8x16xf32>
    %c2_187 = arith.constant 2 : index
    %c0_188 = arith.constant 0 : index
    %392 = vector.load %arg25[%c2_187, %c0_188] : memref<3x16xf32, #tpu.memory_space<vmem>>, vector<1x16xf32>
    %393 = vector.broadcast %392 : vector<1x16xf32> to vector<8x16xf32>
    %394 = arith.addf %391, %393 : vector<8x16xf32>
    %cst_189 = arith.constant 0.000000e+00 : f32
    %395 = vector.broadcast %cst_189 : f32 to vector<8x16xf32>
    %396 = arith.maximumf %394, %395 : vector<8x16xf32>
    %c0_190 = arith.constant 0 : index
    %c0_191 = arith.constant 0 : index
    %397 = vector.load %arg26[%c0_190, %c0_191] : memref<16x8xf32, #tpu.memory_space<vmem>>, vector<16x8xf32>
    %cst_192 = arith.constant dense<0.000000e+00> : vector<8x8xf32>
    %398 = tpu.matmul %396, %397, %cst_192 {dimension_numbers = #tpu.dot_dimension_numbers<[1], [0], [0], [1], [0, 0, 1, 1], [], []>} : vector<8x16xf32>, vector<16x8xf32>, vector<8x8xf32> -> vector<8x8xf32>
    %c0_193 = arith.constant 0 : index
    %c0_194 = arith.constant 0 : index
    %399 = vector.load %arg27[%c0_193, %c0_194] : memref<3x8xf32, #tpu.memory_space<vmem>>, vector<1x8xf32>
    %400 = vector.broadcast %399 : vector<1x8xf32> to vector<8x8xf32>
    %401 = arith.addf %398, %400 : vector<8x8xf32>
    %cst_195 = arith.constant dense<0.000000e+00> : vector<8xf32>
    %402 = vector.multi_reduction <add>, %401, %cst_195 [1] : vector<8x8xf32> to vector<8xf32>
    %403 = vector.shape_cast %402 : vector<8xf32> to vector<8x1xf32>
    %cst_196 = arith.constant 8.000000e+00 : f32
    %404 = vector.broadcast %cst_196 : f32 to vector<8x1xf32>
    %405 = arith.divf %403, %404 : vector<8x1xf32>
    %406 = arith.mulf %401, %401 : vector<8x8xf32>
    %cst_197 = arith.constant dense<0.000000e+00> : vector<8xf32>
    %407 = vector.multi_reduction <add>, %406, %cst_197 [1] : vector<8x8xf32> to vector<8xf32>
    %408 = vector.shape_cast %407 : vector<8xf32> to vector<8x1xf32>
    %cst_198 = arith.constant 8.000000e+00 : f32
    %409 = vector.broadcast %cst_198 : f32 to vector<8x1xf32>
    %410 = arith.divf %408, %409 : vector<8x1xf32>
    %411 = arith.mulf %405, %405 : vector<8x1xf32>
    %412 = arith.subf %410, %411 : vector<8x1xf32>
    %cst_199 = arith.constant 0.000000e+00 : f32
    %413 = vector.broadcast %cst_199 : f32 to vector<8x1xf32>
    %414 = arith.maximumf %412, %413 : vector<8x1xf32>
    %415 = vector.broadcast %405 : vector<8x1xf32> to vector<8x8xf32>
    %416 = arith.subf %401, %415 : vector<8x8xf32>
    %cst_200 = arith.constant 9.99999974E-6 : f32
    %417 = vector.broadcast %cst_200 : f32 to vector<8x1xf32>
    %418 = arith.addf %414, %417 : vector<8x1xf32>
    %419 = math.rsqrt %418 : vector<8x1xf32>
    %420 = vector.broadcast %419 : vector<8x1xf32> to vector<8x8xf32>
    %421 = arith.mulf %416, %420 : vector<8x8xf32>
    %c1_201 = arith.constant 1 : index
    %c0_202 = arith.constant 0 : index
    %422 = vector.load %arg27[%c1_201, %c0_202] : memref<3x8xf32, #tpu.memory_space<vmem>>, vector<1x8xf32>
    %423 = vector.broadcast %422 : vector<1x8xf32> to vector<8x8xf32>
    %424 = arith.mulf %421, %423 : vector<8x8xf32>
    %c2_203 = arith.constant 2 : index
    %c0_204 = arith.constant 0 : index
    %425 = vector.load %arg27[%c2_203, %c0_204] : memref<3x8xf32, #tpu.memory_space<vmem>>, vector<1x8xf32>
    %426 = vector.broadcast %425 : vector<1x8xf32> to vector<8x8xf32>
    %427 = arith.addf %424, %426 : vector<8x8xf32>
    %cst_205 = arith.constant 0.000000e+00 : f32
    %428 = vector.broadcast %cst_205 : f32 to vector<8x8xf32>
    %429 = arith.maximumf %427, %428 : vector<8x8xf32>
    %c0_206 = arith.constant 0 : index
    %c0_207 = arith.constant 0 : index
    %430 = vector.load %arg28[%c0_206, %c0_207] : memref<8x8xf32, #tpu.memory_space<vmem>>, vector<8x8xf32>
    %cst_208 = arith.constant dense<0.000000e+00> : vector<8x8xf32>
    %431 = tpu.matmul %429, %430, %cst_208 {dimension_numbers = #tpu.dot_dimension_numbers<[1], [0], [0], [1], [0, 0, 1, 1], [], []>} : vector<8x8xf32>, vector<8x8xf32>, vector<8x8xf32> -> vector<8x8xf32>
    %c0_209 = arith.constant 0 : index
    %c0_210 = arith.constant 0 : index
    %432 = vector.load %arg29[%c0_209, %c0_210] : memref<3x8xf32, #tpu.memory_space<vmem>>, vector<1x8xf32>
    %433 = vector.broadcast %432 : vector<1x8xf32> to vector<8x8xf32>
    %434 = arith.addf %431, %433 : vector<8x8xf32>
    %cst_211 = arith.constant dense<0.000000e+00> : vector<8xf32>
    %435 = vector.multi_reduction <add>, %434, %cst_211 [1] : vector<8x8xf32> to vector<8xf32>
    %436 = vector.shape_cast %435 : vector<8xf32> to vector<8x1xf32>
    %cst_212 = arith.constant 8.000000e+00 : f32
    %437 = vector.broadcast %cst_212 : f32 to vector<8x1xf32>
    %438 = arith.divf %436, %437 : vector<8x1xf32>
    %439 = arith.mulf %434, %434 : vector<8x8xf32>
    %cst_213 = arith.constant dense<0.000000e+00> : vector<8xf32>
    %440 = vector.multi_reduction <add>, %439, %cst_213 [1] : vector<8x8xf32> to vector<8xf32>
    %441 = vector.shape_cast %440 : vector<8xf32> to vector<8x1xf32>
    %cst_214 = arith.constant 8.000000e+00 : f32
    %442 = vector.broadcast %cst_214 : f32 to vector<8x1xf32>
    %443 = arith.divf %441, %442 : vector<8x1xf32>
    %444 = arith.mulf %438, %438 : vector<8x1xf32>
    %445 = arith.subf %443, %444 : vector<8x1xf32>
    %cst_215 = arith.constant 0.000000e+00 : f32
    %446 = vector.broadcast %cst_215 : f32 to vector<8x1xf32>
    %447 = arith.maximumf %445, %446 : vector<8x1xf32>
    %448 = vector.broadcast %438 : vector<8x1xf32> to vector<8x8xf32>
    %449 = arith.subf %434, %448 : vector<8x8xf32>
    %cst_216 = arith.constant 9.99999974E-6 : f32
    %450 = vector.broadcast %cst_216 : f32 to vector<8x1xf32>
    %451 = arith.addf %447, %450 : vector<8x1xf32>
    %452 = math.rsqrt %451 : vector<8x1xf32>
    %453 = vector.broadcast %452 : vector<8x1xf32> to vector<8x8xf32>
    %454 = arith.mulf %449, %453 : vector<8x8xf32>
    %c1_217 = arith.constant 1 : index
    %c0_218 = arith.constant 0 : index
    %455 = vector.load %arg29[%c1_217, %c0_218] : memref<3x8xf32, #tpu.memory_space<vmem>>, vector<1x8xf32>
    %456 = vector.broadcast %455 : vector<1x8xf32> to vector<8x8xf32>
    %457 = arith.mulf %454, %456 : vector<8x8xf32>
    %c2_219 = arith.constant 2 : index
    %c0_220 = arith.constant 0 : index
    %458 = vector.load %arg29[%c2_219, %c0_220] : memref<3x8xf32, #tpu.memory_space<vmem>>, vector<1x8xf32>
    %459 = vector.broadcast %458 : vector<1x8xf32> to vector<8x8xf32>
    %460 = arith.addf %457, %459 : vector<8x8xf32>
    %cst_221 = arith.constant 0.000000e+00 : f32
    %461 = vector.broadcast %cst_221 : f32 to vector<8x8xf32>
    %462 = arith.maximumf %460, %461 : vector<8x8xf32>
    %c0_222 = arith.constant 0 : index
    %c0_223 = arith.constant 0 : index
    %463 = vector.load %arg30[%c0_222, %c0_223] : memref<8x8xf32, #tpu.memory_space<vmem>>, vector<8x8xf32>
    %cst_224 = arith.constant dense<0.000000e+00> : vector<8x8xf32>
    %464 = tpu.matmul %462, %463, %cst_224 {dimension_numbers = #tpu.dot_dimension_numbers<[1], [0], [0], [1], [0, 0, 1, 1], [], []>} : vector<8x8xf32>, vector<8x8xf32>, vector<8x8xf32> -> vector<8x8xf32>
    %c0_225 = arith.constant 0 : index
    %c0_226 = arith.constant 0 : index
    %465 = vector.load %arg31[%c0_225, %c0_226] : memref<3x8xf32, #tpu.memory_space<vmem>>, vector<1x8xf32>
    %466 = vector.broadcast %465 : vector<1x8xf32> to vector<8x8xf32>
    %467 = arith.addf %464, %466 : vector<8x8xf32>
    %cst_227 = arith.constant dense<0.000000e+00> : vector<8xf32>
    %468 = vector.multi_reduction <add>, %467, %cst_227 [1] : vector<8x8xf32> to vector<8xf32>
    %469 = vector.shape_cast %468 : vector<8xf32> to vector<8x1xf32>
    %cst_228 = arith.constant 8.000000e+00 : f32
    %470 = vector.broadcast %cst_228 : f32 to vector<8x1xf32>
    %471 = arith.divf %469, %470 : vector<8x1xf32>
    %472 = arith.mulf %467, %467 : vector<8x8xf32>
    %cst_229 = arith.constant dense<0.000000e+00> : vector<8xf32>
    %473 = vector.multi_reduction <add>, %472, %cst_229 [1] : vector<8x8xf32> to vector<8xf32>
    %474 = vector.shape_cast %473 : vector<8xf32> to vector<8x1xf32>
    %cst_230 = arith.constant 8.000000e+00 : f32
    %475 = vector.broadcast %cst_230 : f32 to vector<8x1xf32>
    %476 = arith.divf %474, %475 : vector<8x1xf32>
    %477 = arith.mulf %471, %471 : vector<8x1xf32>
    %478 = arith.subf %476, %477 : vector<8x1xf32>
    %cst_231 = arith.constant 0.000000e+00 : f32
    %479 = vector.broadcast %cst_231 : f32 to vector<8x1xf32>
    %480 = arith.maximumf %478, %479 : vector<8x1xf32>
    %481 = vector.broadcast %471 : vector<8x1xf32> to vector<8x8xf32>
    %482 = arith.subf %467, %481 : vector<8x8xf32>
    %cst_232 = arith.constant 9.99999974E-6 : f32
    %483 = vector.broadcast %cst_232 : f32 to vector<8x1xf32>
    %484 = arith.addf %480, %483 : vector<8x1xf32>
    %485 = math.rsqrt %484 : vector<8x1xf32>
    %486 = vector.broadcast %485 : vector<8x1xf32> to vector<8x8xf32>
    %487 = arith.mulf %482, %486 : vector<8x8xf32>
    %c1_233 = arith.constant 1 : index
    %c0_234 = arith.constant 0 : index
    %488 = vector.load %arg31[%c1_233, %c0_234] : memref<3x8xf32, #tpu.memory_space<vmem>>, vector<1x8xf32>
    %489 = vector.broadcast %488 : vector<1x8xf32> to vector<8x8xf32>
    %490 = arith.mulf %487, %489 : vector<8x8xf32>
    %c2_235 = arith.constant 2 : index
    %c0_236 = arith.constant 0 : index
    %491 = vector.load %arg31[%c2_235, %c0_236] : memref<3x8xf32, #tpu.memory_space<vmem>>, vector<1x8xf32>
    %492 = vector.broadcast %491 : vector<1x8xf32> to vector<8x8xf32>
    %493 = arith.addf %490, %492 : vector<8x8xf32>
    %cst_237 = arith.constant 0.000000e+00 : f32
    %494 = vector.broadcast %cst_237 : f32 to vector<8x8xf32>
    %495 = arith.maximumf %493, %494 : vector<8x8xf32>
    %c0_238 = arith.constant 0 : index
    %c0_239 = arith.constant 0 : index
    %496 = vector.load %arg32[%c0_238, %c0_239] : memref<8x8xf32, #tpu.memory_space<vmem>>, vector<8x8xf32>
    %cst_240 = arith.constant dense<0.000000e+00> : vector<8x8xf32>
    %497 = tpu.matmul %495, %496, %cst_240 {dimension_numbers = #tpu.dot_dimension_numbers<[1], [0], [0], [1], [0, 0, 1, 1], [], []>} : vector<8x8xf32>, vector<8x8xf32>, vector<8x8xf32> -> vector<8x8xf32>
    %c0_241 = arith.constant 0 : index
    %c0_242 = arith.constant 0 : index
    %498 = vector.load %arg33[%c0_241, %c0_242] : memref<3x8xf32, #tpu.memory_space<vmem>>, vector<1x8xf32>
    %499 = vector.broadcast %498 : vector<1x8xf32> to vector<8x8xf32>
    %500 = arith.addf %497, %499 : vector<8x8xf32>
    %cst_243 = arith.constant dense<0.000000e+00> : vector<8xf32>
    %501 = vector.multi_reduction <add>, %500, %cst_243 [1] : vector<8x8xf32> to vector<8xf32>
    %502 = vector.shape_cast %501 : vector<8xf32> to vector<8x1xf32>
    %cst_244 = arith.constant 8.000000e+00 : f32
    %503 = vector.broadcast %cst_244 : f32 to vector<8x1xf32>
    %504 = arith.divf %502, %503 : vector<8x1xf32>
    %505 = arith.mulf %500, %500 : vector<8x8xf32>
    %cst_245 = arith.constant dense<0.000000e+00> : vector<8xf32>
    %506 = vector.multi_reduction <add>, %505, %cst_245 [1] : vector<8x8xf32> to vector<8xf32>
    %507 = vector.shape_cast %506 : vector<8xf32> to vector<8x1xf32>
    %cst_246 = arith.constant 8.000000e+00 : f32
    %508 = vector.broadcast %cst_246 : f32 to vector<8x1xf32>
    %509 = arith.divf %507, %508 : vector<8x1xf32>
    %510 = arith.mulf %504, %504 : vector<8x1xf32>
    %511 = arith.subf %509, %510 : vector<8x1xf32>
    %cst_247 = arith.constant 0.000000e+00 : f32
    %512 = vector.broadcast %cst_247 : f32 to vector<8x1xf32>
    %513 = arith.maximumf %511, %512 : vector<8x1xf32>
    %514 = vector.broadcast %504 : vector<8x1xf32> to vector<8x8xf32>
    %515 = arith.subf %500, %514 : vector<8x8xf32>
    %cst_248 = arith.constant 9.99999974E-6 : f32
    %516 = vector.broadcast %cst_248 : f32 to vector<8x1xf32>
    %517 = arith.addf %513, %516 : vector<8x1xf32>
    %518 = math.rsqrt %517 : vector<8x1xf32>
    %519 = vector.broadcast %518 : vector<8x1xf32> to vector<8x8xf32>
    %520 = arith.mulf %515, %519 : vector<8x8xf32>
    %c1_249 = arith.constant 1 : index
    %c0_250 = arith.constant 0 : index
    %521 = vector.load %arg33[%c1_249, %c0_250] : memref<3x8xf32, #tpu.memory_space<vmem>>, vector<1x8xf32>
    %522 = vector.broadcast %521 : vector<1x8xf32> to vector<8x8xf32>
    %523 = arith.mulf %520, %522 : vector<8x8xf32>
    %c2_251 = arith.constant 2 : index
    %c0_252 = arith.constant 0 : index
    %524 = vector.load %arg33[%c2_251, %c0_252] : memref<3x8xf32, #tpu.memory_space<vmem>>, vector<1x8xf32>
    %525 = vector.broadcast %524 : vector<1x8xf32> to vector<8x8xf32>
    %526 = arith.addf %523, %525 : vector<8x8xf32>
    %cst_253 = arith.constant 0.000000e+00 : f32
    %527 = vector.broadcast %cst_253 : f32 to vector<8x8xf32>
    %528 = arith.maximumf %526, %527 : vector<8x8xf32>
    %c0_254 = arith.constant 0 : index
    %c0_255 = arith.constant 0 : index
    %529 = vector.load %arg34[%c0_254, %c0_255] : memref<8x8xf32, #tpu.memory_space<vmem>>, vector<8x8xf32>
    tpu.vector_store %arg34[%c0_254, %c0_255], %528 {strides = array<i32>} : memref<8x8xf32, #tpu.memory_space<vmem>>, vector<8x8xf32>,
    return
  }
  func.func @transform_0(%arg0: i32) -> (i32, i32) {
    %c0_i32 = arith.constant 0 : i32
    %c0_i32_0 = arith.constant 0 : i32
    return %arg0, %c0_i32 : i32, i32
  }
  func.func @transform_1(%arg0: i32) -> (i32, i32) {
    %c0_i32 = arith.constant 0 : i32
    %c0_i32_0 = arith.constant 0 : i32
    %c0_i32_1 = arith.constant 0 : i32
    return %c0_i32, %c0_i32_0 : i32, i32
  }
  func.func @transform_2(%arg0: i32) -> (i32, i32) {
    %c0_i32 = arith.constant 0 : i32
    %c0_i32_0 = arith.constant 0 : i32
    %c0_i32_1 = arith.constant 0 : i32
    return %c0_i32, %c0_i32_0 : i32, i32
  }
  func.func @transform_3(%arg0: i32) -> (i32, i32) {
    %c0_i32 = arith.constant 0 : i32
    %c0_i32_0 = arith.constant 0 : i32
    %c0_i32_1 = arith.constant 0 : i32
    return %c0_i32, %c0_i32_0 : i32, i32
  }
  func.func @transform_4(%arg0: i32) -> (i32, i32) {
    %c0_i32 = arith.constant 0 : i32
    %c0_i32_0 = arith.constant 0 : i32
    %c0_i32_1 = arith.constant 0 : i32
    return %c0_i32, %c0_i32_0 : i32, i32
  }
  func.func @transform_5(%arg0: i32) -> (i32, i32) {
    %c0_i32 = arith.constant 0 : i32
    %c0_i32_0 = arith.constant 0 : i32
    %c0_i32_1 = arith.constant 0 : i32
    return %c0_i32, %c0_i32_0 : i32, i32
  }
  func.func @transform_6(%arg0: i32) -> (i32, i32) {
    %c0_i32 = arith.constant 0 : i32
    %c0_i32_0 = arith.constant 0 : i32
    %c0_i32_1 = arith.constant 0 : i32
    return %c0_i32, %c0_i32_0 : i32, i32
  }
  func.func @transform_7(%arg0: i32) -> (i32, i32) {
    %c0_i32 = arith.constant 0 : i32
    %c0_i32_0 = arith.constant 0 : i32
    %c0_i32_1 = arith.constant 0 : i32
    return %c0_i32, %c0_i32_0 : i32, i32
  }
  func.func @transform_8(%arg0: i32) -> (i32, i32) {
    %c0_i32 = arith.constant 0 : i32
    %c0_i32_0 = arith.constant 0 : i32
    %c0_i32_1 = arith.constant 0 : i32
    return %c0_i32, %c0_i32_0 : i32, i32
  }
  func.func @transform_9(%arg0: i32) -> (i32, i32) {
    %c0_i32 = arith.constant 0 : i32
    %c0_i32_0 = arith.constant 0 : i32
    %c0_i32_1 = arith.constant 0 : i32
    return %c0_i32, %c0_i32_0 : i32, i32
  }
  func.func @transform_10(%arg0: i32) -> (i32, i32) {
    %c0_i32 = arith.constant 0 : i32
    %c0_i32_0 = arith.constant 0 : i32
    %c0_i32_1 = arith.constant 0 : i32
    return %c0_i32, %c0_i32_0 : i32, i32
  }
  func.func @transform_11(%arg0: i32) -> (i32, i32) {
    %c0_i32 = arith.constant 0 : i32
    %c0_i32_0 = arith.constant 0 : i32
    %c0_i32_1 = arith.constant 0 : i32
    return %c0_i32, %c0_i32_0 : i32, i32
  }
  func.func @transform_12(%arg0: i32) -> (i32, i32) {
    %c0_i32 = arith.constant 0 : i32
    %c0_i32_0 = arith.constant 0 : i32
    %c0_i32_1 = arith.constant 0 : i32
    return %c0_i32, %c0_i32_0 : i32, i32
  }
  func.func @transform_13(%arg0: i32) -> (i32, i32) {
    %c0_i32 = arith.constant 0 : i32
    %c0_i32_0 = arith.constant 0 : i32
    %c0_i32_1 = arith.constant 0 : i32
    return %c0_i32, %c0_i32_0 : i32, i32
  }
  func.func @transform_14(%arg0: i32) -> (i32, i32) {
    %c0_i32 = arith.constant 0 : i32
    %c0_i32_0 = arith.constant 0 : i32
    %c0_i32_1 = arith.constant 0 : i32
    return %c0_i32, %c0_i32_0 : i32, i32
  }
  func.func @transform_15(%arg0: i32) -> (i32, i32) {
    %c0_i32 = arith.constant 0 : i32
    %c0_i32_0 = arith.constant 0 : i32
    %c0_i32_1 = arith.constant 0 : i32
    return %c0_i32, %c0_i32_0 : i32, i32
  }
  func.func @transform_16(%arg0: i32) -> (i32, i32) {
    %c0_i32 = arith.constant 0 : i32
    %c0_i32_0 = arith.constant 0 : i32
    %c0_i32_1 = arith.constant 0 : i32
    return %c0_i32, %c0_i32_0 : i32, i32
  }
  func.func @transform_17(%arg0: i32) -> (i32, i32) {
    %c0_i32 = arith.constant 0 : i32
    %c0_i32_0 = arith.constant 0 : i32
    %c0_i32_1 = arith.constant 0 : i32
    return %c0_i32, %c0_i32_0 : i32, i32
  }
  func.func @transform_18(%arg0: i32) -> (i32, i32) {
    %c0_i32 = arith.constant 0 : i32
    %c0_i32_0 = arith.constant 0 : i32
    %c0_i32_1 = arith.constant 0 : i32
    return %c0_i32, %c0_i32_0 : i32, i32
  }
  func.func @transform_19(%arg0: i32) -> (i32, i32) {
    %c0_i32 = arith.constant 0 : i32
    %c0_i32_0 = arith.constant 0 : i32
    %c0_i32_1 = arith.constant 0 : i32
    return %c0_i32, %c0_i32_0 : i32, i32
  }
  func.func @transform_20(%arg0: i32) -> (i32, i32) {
    %c0_i32 = arith.constant 0 : i32
    %c0_i32_0 = arith.constant 0 : i32
    %c0_i32_1 = arith.constant 0 : i32
    return %c0_i32, %c0_i32_0 : i32, i32
  }
  func.func @transform_21(%arg0: i32) -> (i32, i32) {
    %c0_i32 = arith.constant 0 : i32
    %c0_i32_0 = arith.constant 0 : i32
    %c0_i32_1 = arith.constant 0 : i32
    return %c0_i32, %c0_i32_0 : i32, i32
  }
  func.func @transform_22(%arg0: i32) -> (i32, i32) {
    %c0_i32 = arith.constant 0 : i32
    %c0_i32_0 = arith.constant 0 : i32
    %c0_i32_1 = arith.constant 0 : i32
    return %c0_i32, %c0_i32_0 : i32, i32
  }
  func.func @transform_23(%arg0: i32) -> (i32, i32) {
    %c0_i32 = arith.constant 0 : i32
    %c0_i32_0 = arith.constant 0 : i32
    %c0_i32_1 = arith.constant 0 : i32
    return %c0_i32, %c0_i32_0 : i32, i32
  }
  func.func @transform_24(%arg0: i32) -> (i32, i32) {
    %c0_i32 = arith.constant 0 : i32
    %c0_i32_0 = arith.constant 0 : i32
    %c0_i32_1 = arith.constant 0 : i32
    return %c0_i32, %c0_i32_0 : i32, i32
  }
  func.func @transform_25(%arg0: i32) -> (i32, i32) {
    %c0_i32 = arith.constant 0 : i32
    %c0_i32_0 = arith.constant 0 : i32
    %c0_i32_1 = arith.constant 0 : i32
    return %c0_i32, %c0_i32_0 : i32, i32
  }
  func.func @transform_26(%arg0: i32) -> (i32, i32) {
    %c0_i32 = arith.constant 0 : i32
    %c0_i32_0 = arith.constant 0 : i32
    %c0_i32_1 = arith.constant 0 : i32
    return %c0_i32, %c0_i32_0 : i32, i32
  }
  func.func @transform_27(%arg0: i32) -> (i32, i32) {
    %c0_i32 = arith.constant 0 : i32
    %c0_i32_0 = arith.constant 0 : i32
    %c0_i32_1 = arith.constant 0 : i32
    return %c0_i32, %c0_i32_0 : i32, i32
  }
  func.func @transform_28(%arg0: i32) -> (i32, i32) {
    %c0_i32 = arith.constant 0 : i32
    %c0_i32_0 = arith.constant 0 : i32
    %c0_i32_1 = arith.constant 0 : i32
    return %c0_i32, %c0_i32_0 : i32, i32
  }
  func.func @transform_29(%arg0: i32) -> (i32, i32) {
    %c0_i32 = arith.constant 0 : i32
    %c0_i32_0 = arith.constant 0 : i32
    %c0_i32_1 = arith.constant 0 : i32
    return %c0_i32, %c0_i32_0 : i32, i32
  }
  func.func @transform_30(%arg0: i32) -> (i32, i32) {
    %c0_i32 = arith.constant 0 : i32
    %c0_i32_0 = arith.constant 0 : i32
    %c0_i32_1 = arith.constant 0 : i32
    return %c0_i32, %c0_i32_0 : i32, i32
  }
  func.func @transform_31(%arg0: i32) -> (i32, i32) {
    %c0_i32 = arith.constant 0 : i32
    %c0_i32_0 = arith.constant 0 : i32
    %c0_i32_1 = arith.constant 0 : i32
    return %c0_i32, %c0_i32_0 : i32, i32
  }
  func.func @transform_32(%arg0: i32) -> (i32, i32) {
    %c0_i32 = arith.constant 0 : i32
    %c0_i32_0 = arith.constant 0 : i32
    %c0_i32_1 = arith.constant 0 : i32
    return %c0_i32, %c0_i32_0 : i32, i32
  }
  func.func @transform_33(%arg0: i32) -> (i32, i32) {
    %c0_i32 = arith.constant 0 : i32
    %c0_i32_0 = arith.constant 0 : i32
    return %arg0, %c0_i32 : i32, i32
  }
}

</mosaic_0001>

<llo_original>
// kernel: sepconv_encoder_pallas.1
$region0: #{sepconv_encoder_pallas.1}
  #allocation0 [shape = 'u32[]', space=smem, size = 0x4, offset = 0x4, fixed_abs, tag = 'smem constant byte address 0x4 - core index']
  #allocation1 [shape = 'u32[72,128]{1,0:T(1,128)}', space=vmem, size = 0x9000, scoped, tag = 'internal scratch']
  %s0 = inlined_call_operand.smem [shape: u32[34], index: -1, kind: input, shape index: {}]
  %s1 = sld [smem:[%s0]]
  %s2 = scalar_lea.smem %s0, 1
  %s3 = sld [smem:[%s2]]
  %s4 = scalar_lea.smem %s0, 2
  %s5 = sld [smem:[%s4]]
  %s6 = scalar_lea.smem %s0, 3
  %s7 = sld [smem:[%s6]]
  %s8 = scalar_lea.smem %s0, 4
  %s9 = sld [smem:[%s8]]
  %s10 = scalar_lea.smem %s0, 5
  %s11 = sld [smem:[%s10]]
  %s12 = scalar_lea.smem %s0, 6
  %s13 = sld [smem:[%s12]]
  %s14 = scalar_lea.smem %s0, 7
  %s15 = sld [smem:[%s14]]
  %s16 = scalar_lea.smem %s0, 8
  %s17 = sld [smem:[%s16]]
  %s18 = scalar_lea.smem %s0, 9
  %s19 = sld [smem:[%s18]]
  %s20 = scalar_lea.smem %s0, 10
  %s21 = sld [smem:[%s20]]
  %s22 = scalar_lea.smem %s0, 11
  %s23 = sld [smem:[%s22]]
  %s24 = scalar_lea.smem %s0, 12
  %s25 = sld [smem:[%s24]]
  %s26 = scalar_lea.smem %s0, 13
  %s27 = sld [smem:[%s26]]
  %s28 = scalar_lea.smem %s0, 14
  %s29 = sld [smem:[%s28]]
  %s30 = scalar_lea.smem %s0, 15
  %s31 = sld [smem:[%s30]]
  %s32 = scalar_lea.smem %s0, 16
  %s33 = sld [smem:[%s32]]
  %s34 = scalar_lea.smem %s0, 17
  %s35 = sld [smem:[%s34]]
  %s36 = scalar_lea.smem %s0, 18
  %s37 = sld [smem:[%s36]]
  %s38 = scalar_lea.smem %s0, 19
  %s39 = sld [smem:[%s38]]
  %s40 = scalar_lea.smem %s0, 20
  %s41 = sld [smem:[%s40]]
  %s42 = scalar_lea.smem %s0, 21
  %s43 = sld [smem:[%s42]]
  %s44 = scalar_lea.smem %s0, 22
  %s45 = sld [smem:[%s44]]
  %s46 = scalar_lea.smem %s0, 23
  %s47 = sld [smem:[%s46]]
  %s48 = scalar_lea.smem %s0, 24
  %s49 = sld [smem:[%s48]]
  %s50 = scalar_lea.smem %s0, 25
  %s51 = sld [smem:[%s50]]
  %s52 = scalar_lea.smem %s0, 26
  %s53 = sld [smem:[%s52]]
  %s54 = scalar_lea.smem %s0, 27
  %s55 = sld [smem:[%s54]]
  %s56 = scalar_lea.smem %s0, 28
  %s57 = sld [smem:[%s56]]
  %s58 = scalar_lea.smem %s0, 29
  %s59 = sld [smem:[%s58]]
  %s60 = scalar_lea.smem %s0, 30
  %s61 = sld [smem:[%s60]]
  %s62 = scalar_lea.smem %s0, 31
  %s63 = sld [smem:[%s62]]
  %s64 = scalar_lea.smem %s0, 32
  %s65 = sld [smem:[%s64]]
  %s66 = scalar_lea.smem %s0, 33
  %s67 = sld [smem:[%s66]]
  %s68 = sld [smem:[#allocation0]]
  $region218: #{sepconv_encoder_pallas.1} parent=0
    _
  %s70 = ssub.s32 1, %s68
  %s71 = scalar_select 0, %s70, %s68
  $region1: #{sepconv_encoder_pallas.1} parent=0
    #allocation2 [shape = 'u8[524288]{0}', space=vmem, size = 0x80000, scoped, tag = 'input window, operand 1, single buffered']
    #allocation3 [shape = 's32[1]{0}', space=sflag, size = 0x4, scoped, tag = 'scoped memory for sepconv_encoder_pallas.1']
    #allocation4 [shape = 'u8[524288]{0}', space=vmem, size = 0x80000, scoped, tag = 'input window, operand 3, single buffered']
    #allocation5 [shape = 's32[1]{0}', space=sflag, size = 0x4, scoped, tag = 'scoped memory for sepconv_encoder_pallas.1']
    #allocation6 [shape = 'u8[2048]{0}', space=vmem, size = 0x800, scoped, tag = 'input window, operand 6, single buffered']
    #allocation7 [shape = 'u8[2048]{0}', space=vmem, size = 0x800, scoped, tag = 'input window, operand 8, single buffered']
    #allocation8 [shape = 's32[1]{0}', space=sflag, size = 0x4, scoped, tag = 'scoped memory for sepconv_encoder_pallas.1']
    #allocation9 [shape = 'u8[32768]{0}', space=vmem, size = 0x8000, scoped, tag = 'input window, operand 9, single buffered']
    #allocation10 [shape = 'u8[2048]{0}', space=vmem, size = 0x800, scoped, tag = 'input window, operand 10, single buffered']
    #allocation11 [shape = 's32[1]{0}', space=sflag, size = 0x4, scoped, tag = 'scoped memory for sepconv_encoder_pallas.1']
    #allocation12 [shape = 'u8[2048]{0}', space=vmem, size = 0x800, scoped, tag = 'input window, operand 12, single buffered']
    #allocation13 [shape = 'u8[2048]{0}', space=vmem, size = 0x800, scoped, tag = 'input window, operand 14, single buffered']
    #allocation14 [shape = 's32[1]{0}', space=sflag, size = 0x4, scoped, tag = 'scoped memory for sepconv_encoder_pallas.1']
    #allocation15 [shape = 'u8[2048]{0}', space=vmem, size = 0x800, scoped, tag = 'input window, operand 16, single buffered']
    #allocation16 [shape = 'u8[4096]{0}', space=vmem, size = 0x1000, scoped, tag = 'input window, operand 17, single buffered']
    #allocation17 [shape = 's32[1]{0}', space=sflag, size = 0x4, scoped, tag = 'scoped memory for sepconv_encoder_pallas.1']
    #allocation18 [shape = 'u8[2048]{0}', space=vmem, size = 0x800, scoped, tag = 'input window, operand 18, single buffered']
    #allocation19 [shape = 'u8[2048]{0}', space=vmem, size = 0x800, scoped, tag = 'input window, operand 20, single buffered']
    #allocation20 [shape = 's32[1]{0}', space=sflag, size = 0x4, scoped, tag = 'scoped memory for sepconv_encoder_pallas.1']
    #allocation21 [shape = 'u8[2048]{0}', space=vmem, size = 0x800, scoped, tag = 'input window, operand 22, single buffered']
    #allocation22 [shape = 'u8[2048]{0}', space=vmem, size = 0x800, scoped, tag = 'input window, operand 24, single buffered']
    #allocation23 [shape = 's32[1]{0}', space=sflag, size = 0x4, scoped, tag = 'scoped memory for sepconv_encoder_pallas.1']
    #allocation24 [shape = 'u8[2048]{0}', space=vmem, size = 0x800, scoped, tag = 'input window, operand 26, single buffered']
    #allocation25 [shape = 'u8[2048]{0}', space=vmem, size = 0x800, scoped, tag = 'input window, operand 28, single buffered']
    #allocation26 [shape = 's32[1]{0}', space=sflag, size = 0x4, scoped, tag = 'scoped memory for sepconv_encoder_pallas.1']
    #allocation27 [shape = 'u8[4096]{0}', space=vmem, size = 0x1000, scoped, tag = 'input window, operand 29, single buffered']
    #allocation28 [shape = 'u8[4096]{0}', space=vmem, size = 0x1000, scoped, tag = 'input window, operand 31, single buffered']
    #allocation29 [shape = 's32[1]{0}', space=sflag, size = 0x4, scoped, tag = 'scoped memory for sepconv_encoder_pallas.1']
    #allocation30 [shape = 'u8[2048]{0}', space=vmem, size = 0x800, scoped, tag = 'input window, operand 32, single buffered']
    %72 = vsyncpa [#allocation3], 0
    %73 = vsyncpa [#allocation5], 0
    %74 = vsyncpa [#allocation8], 0
    %75 = vsyncpa [#allocation11], 0
    %76 = vsyncpa [#allocation14], 0
    %77 = vsyncpa [#allocation17], 0
    %78 = vsyncpa [#allocation20], 0
    %79 = vsyncpa [#allocation23], 0
    %80 = vsyncpa [#allocation26], 0
    %81 = vsyncpa [#allocation29], 0
    // Predicated region
    $region2: #{sepconv_encoder_pallas.1} parent=1 // pred_check
      _
    $region3: #{sepconv_encoder_pallas.1} parent=1 // pred_check_branch
      %83 = sbr.rel (0) target = $region5
    $region4: #{sepconv_encoder_pallas.1} parent=1 // pred_region
      _
    $region5: #{sepconv_encoder_pallas.1} parent=1 // pred_fallthru
      _
    // Predicated region
    $region6: #{sepconv_encoder_pallas.1} parent=1 // pred_check
      _
    $region7: #{sepconv_encoder_pallas.1} parent=1 // pred_check_branch
      %85 = sbr.rel (0) target = $region9
    $region8: #{sepconv_encoder_pallas.1} parent=1 // pred_region
      %87 = vsyncadd [#allocation3], 0
      %s88 = sshll.u32 %s3, 4
      %s89 = int_to_ptr.hbm [resolvable:$true] %s88
      %s90 = sshll.u32 [#allocation2], 4
      %s91 = int_to_ptr.vmem [resolvable:$true] %s90
      %96 = dma.hbm_to_vmem [thread:$0]  %s89, 16384, %s91, [#allocation3], 512, 512, 32
    $region9: #{sepconv_encoder_pallas.1} parent=1 // pred_fallthru
      _
    // Predicated region
    $region10: #{sepconv_encoder_pallas.1} parent=1 // pred_check
      _
    $region11: #{sepconv_encoder_pallas.1} parent=1 // pred_check_branch
      %98 = sbr.rel (0) target = $region13
    $region12: #{sepconv_encoder_pallas.1} parent=1 // pred_region
      _
    $region13: #{sepconv_encoder_pallas.1} parent=1 // pred_fallthru
      _
    // Predicated region
    $region14: #{sepconv_encoder_pallas.1} parent=1 // pred_check
      _
    $region15: #{sepconv_encoder_pallas.1} parent=1 // pred_check_branch
      %100 = sbr.rel (0) target = $region17
    $region16: #{sepconv_encoder_pallas.1} parent=1 // pred_region
      %102 = vsyncadd [#allocation5], 0
      %s103 = sshll.u32 %s7, 4
      %s104 = int_to_ptr.hbm [resolvable:$true] %s103
      %s105 = sshll.u32 [#allocation4], 4
      %s106 = int_to_ptr.vmem [resolvable:$true] %s105
      %111 = dma.hbm_to_vmem [thread:$0]  %s104, 16384, %s106, [#allocation5], 256, 256, 16
    $region17: #{sepconv_encoder_pallas.1} parent=1 // pred_fallthru
      _
    // Predicated region
    $region18: #{sepconv_encoder_pallas.1} parent=1 // pred_check
      _
    $region19: #{sepconv_encoder_pallas.1} parent=1 // pred_check_branch
      %113 = sbr.rel (0) target = $region21
    $region20: #{sepconv_encoder_pallas.1} parent=1 // pred_region
      _
    $region21: #{sepconv_encoder_pallas.1} parent=1 // pred_fallthru
      _
    // Predicated region
    $region22: #{sepconv_encoder_pallas.1} parent=1 // pred_check
      _
    $region23: #{sepconv_encoder_pallas.1} parent=1 // pred_check_branch
      %115 = sbr.rel (0) target = $region25
    $region24: #{sepconv_encoder_pallas.1} parent=1 // pred_region
      _
    $region25: #{sepconv_encoder_pallas.1} parent=1 // pred_fallthru
      _
    // Predicated region
    $region26: #{sepconv_encoder_pallas.1} parent=1 // pred_check
      _
    $region27: #{sepconv_encoder_pallas.1} parent=1 // pred_check_branch
      %117 = sbr.rel (0) target = $region29
    $region28: #{sepconv_encoder_pallas.1} parent=1 // pred_region
      %119 = vsyncadd [#allocation5], 0
      %s121 = sshll.u32 %s13, 4
      %s122 = int_to_ptr.hbm [resolvable:$true] %s121
      %s123 = sshll.u32 [#allocation6], 4
      %s124 = int_to_ptr.vmem [resolvable:$true] %s123
      %126 = dma.hbm_to_vmem [thread:$0]  %s122, 64, %s124, [#allocation5]
    $region29: #{sepconv_encoder_pallas.1} parent=1 // pred_fallthru
      _
    // Predicated region
    $region30: #{sepconv_encoder_pallas.1} parent=1 // pred_check
      _
    $region31: #{sepconv_encoder_pallas.1} parent=1 // pred_check_branch
      %128 = sbr.rel (0) target = $region33
    $region32: #{sepconv_encoder_pallas.1} parent=1 // pred_region
      _
    $region33: #{sepconv_encoder_pallas.1} parent=1 // pred_fallthru
      _
    // Predicated region
    $region34: #{sepconv_encoder_pallas.1} parent=1 // pred_check
      _
    $region35: #{sepconv_encoder_pallas.1} parent=1 // pred_check_branch
      %130 = sbr.rel (0) target = $region37
    $region36: #{sepconv_encoder_pallas.1} parent=1 // pred_region
      %132 = vsyncadd [#allocation8], 0
      %s134 = sshll.u32 %s17, 4
      %s135 = int_to_ptr.hbm [resolvable:$true] %s134
      %s136 = sshll.u32 [#allocation7], 4
      %s137 = int_to_ptr.vmem [resolvable:$true] %s136
      %139 = dma.hbm_to_vmem [thread:$0]  %s135, 64, %s137, [#allocation8]
    $region37: #{sepconv_encoder_pallas.1} parent=1 // pred_fallthru
      _
    // Predicated region
    $region38: #{sepconv_encoder_pallas.1} parent=1 // pred_check
      _
    $region39: #{sepconv_encoder_pallas.1} parent=1 // pred_check_branch
      %141 = sbr.rel (0) target = $region41
    $region40: #{sepconv_encoder_pallas.1} parent=1 // pred_region
      %143 = vsyncadd [#allocation8], 0
      %s144 = sshll.u32 %s19, 4
      %s145 = int_to_ptr.hbm [resolvable:$true] %s144
      %s146 = sshll.u32 [#allocation9], 4
      %s147 = int_to_ptr.vmem [resolvable:$true] %s146
      %152 = dma.hbm_to_vmem [thread:$0]  %s145, 1024, %s147, [#allocation8], 128, 128, 8
    $region41: #{sepconv_encoder_pallas.1} parent=1 // pred_fallthru
      _
    // Predicated region
    $region42: #{sepconv_encoder_pallas.1} parent=1 // pred_check
      _
    $region43: #{sepconv_encoder_pallas.1} parent=1 // pred_check_branch
      %154 = sbr.rel (0) target = $region45
    $region44: #{sepconv_encoder_pallas.1} parent=1 // pred_region
      %156 = vsyncadd [#allocation11], 0
      %s158 = sshll.u32 %s21, 4
      %s159 = int_to_ptr.hbm [resolvable:$true] %s158
      %s160 = sshll.u32 [#allocation10], 4
      %s161 = int_to_ptr.vmem [resolvable:$true] %s160
      %163 = dma.hbm_to_vmem [thread:$0]  %s159, 64, %s161, [#allocation11]
    $region45: #{sepconv_encoder_pallas.1} parent=1 // pred_fallthru
      _
    // Predicated region
    $region46: #{sepconv_encoder_pallas.1} parent=1 // pred_check
      _
    $region47: #{sepconv_encoder_pallas.1} parent=1 // pred_check_branch
      %165 = sbr.rel (0) target = $region49
    $region48: #{sepconv_encoder_pallas.1} parent=1 // pred_region
      _
    $region49: #{sepconv_encoder_pallas.1} parent=1 // pred_fallthru
      _
    // Predicated region
    $region50: #{sepconv_encoder_pallas.1} parent=1 // pred_check
      _
    $region51: #{sepconv_encoder_pallas.1} parent=1 // pred_check_branch
      %167 = sbr.rel (0) target = $region53
    $region52: #{sepconv_encoder_pallas.1} parent=1 // pred_region
      %169 = vsyncadd [#allocation11], 0
      %s171 = sshll.u32 %s25, 4
      %s172 = int_to_ptr.hbm [resolvable:$true] %s171
      %s173 = sshll.u32 [#allocation12], 4
      %s174 = int_to_ptr.vmem [resolvable:$true] %s173
      %176 = dma.hbm_to_vmem [thread:$0]  %s172, 64, %s174, [#allocation11]
    $region53: #{sepconv_encoder_pallas.1} parent=1 // pred_fallthru
      _
    // Predicated region
    $region54: #{sepconv_encoder_pallas.1} parent=1 // pred_check
      _
    $region55: #{sepconv_encoder_pallas.1} parent=1 // pred_check_branch
      %178 = sbr.rel (0) target = $region57
    $region56: #{sepconv_encoder_pallas.1} parent=1 // pred_region
      _
    $region57: #{sepconv_encoder_pallas.1} parent=1 // pred_fallthru
      _
    // Predicated region
    $region58: #{sepconv_encoder_pallas.1} parent=1 // pred_check
      _
    $region59: #{sepconv_encoder_pallas.1} parent=1 // pred_check_branch
      %180 = sbr.rel (0) target = $region61
    $region60: #{sepconv_encoder_pallas.1} parent=1 // pred_region
      %182 = vsyncadd [#allocation14], 0
      %s184 = sshll.u32 %s29, 4
      %s185 = int_to_ptr.hbm [resolvable:$true] %s184
      %s186 = sshll.u32 [#allocation13], 4
      %s187 = int_to_ptr.vmem [resolvable:$true] %s186
      %189 = dma.hbm_to_vmem [thread:$0]  %s185, 64, %s187, [#allocation14]
    $region61: #{sepconv_encoder_pallas.1} parent=1 // pred_fallthru
      _
    // Predicated region
    $region62: #{sepconv_encoder_pallas.1} parent=1 // pred_check
      _
    $region63: #{sepconv_encoder_pallas.1} parent=1 // pred_check_branch
      %191 = sbr.rel (0) target = $region65
    $region64: #{sepconv_encoder_pallas.1} parent=1 // pred_region
      _
    $region65: #{sepconv_encoder_pallas.1} parent=1 // pred_fallthru
      _
    // Predicated region
    $region66: #{sepconv_encoder_pallas.1} parent=1 // pred_check
      _
    $region67: #{sepconv_encoder_pallas.1} parent=1 // pred_check_branch
      %193 = sbr.rel (0) target = $region69
    $region68: #{sepconv_encoder_pallas.1} parent=1 // pred_region
      %195 = vsyncadd [#allocation14], 0
      %s197 = sshll.u32 %s33, 4
      %s198 = int_to_ptr.hbm [resolvable:$true] %s197
      %s199 = sshll.u32 [#allocation15], 4
      %s200 = int_to_ptr.vmem [resolvable:$true] %s199
      %202 = dma.hbm_to_vmem [thread:$0]  %s198, 64, %s200, [#allocation14]
    $region69: #{sepconv_encoder_pallas.1} parent=1 // pred_fallthru
      _
    // Predicated region
    $region70: #{sepconv_encoder_pallas.1} parent=1 // pred_check
      _
    $region71: #{sepconv_encoder_pallas.1} parent=1 // pred_check_branch
      %204 = sbr.rel (0) target = $region73
    $region72: #{sepconv_encoder_pallas.1} parent=1 // pred_region
      %206 = vsyncadd [#allocation17], 0
      %s208 = sshll.u32 %s35, 4
      %s209 = int_to_ptr.hbm [resolvable:$true] %s208
      %s210 = sshll.u32 [#allocation16], 4
      %s211 = int_to_ptr.vmem [resolvable:$true] %s210
      %213 = dma.hbm_to_vmem [thread:$0]  %s209, 128, %s211, [#allocation17]
    $region73: #{sepconv_encoder_pallas.1} parent=1 // pred_fallthru
      _
    // Predicated region
    $region74: #{sepconv_encoder_pallas.1} parent=1 // pred_check
      _
    $region75: #{sepconv_encoder_pallas.1} parent=1 // pred_check_branch
      %215 = sbr.rel (0) target = $region77
    $region76: #{sepconv_encoder_pallas.1} parent=1 // pred_region
      %217 = vsyncadd [#allocation17], 0
      %s219 = sshll.u32 %s37, 4
      %s220 = int_to_ptr.hbm [resolvable:$true] %s219
      %s221 = sshll.u32 [#allocation18], 4
      %s222 = int_to_ptr.vmem [resolvable:$true] %s221
      %224 = dma.hbm_to_vmem [thread:$0]  %s220, 64, %s222, [#allocation17]
    $region77: #{sepconv_encoder_pallas.1} parent=1 // pred_fallthru
      _
    // Predicated region
    $region78: #{sepconv_encoder_pallas.1} parent=1 // pred_check
      _
    $region79: #{sepconv_encoder_pallas.1} parent=1 // pred_check_branch
      %226 = sbr.rel (0) target = $region81
    $region80: #{sepconv_encoder_pallas.1} parent=1 // pred_region
      _
    $region81: #{sepconv_encoder_pallas.1} parent=1 // pred_fallthru
      _
    // Predicated region
    $region82: #{sepconv_encoder_pallas.1} parent=1 // pred_check
      _
    $region83: #{sepconv_encoder_pallas.1} parent=1 // pred_check_branch
      %228 = sbr.rel (0) target = $region85
    $region84: #{sepconv_encoder_pallas.1} parent=1 // pred_region
      %230 = vsyncadd [#allocation20], 0
      %s232 = sshll.u32 %s41, 4
      %s233 = int_to_ptr.hbm [resolvable:$true] %s232
      %s234 = sshll.u32 [#allocation19], 4
      %s235 = int_to_ptr.vmem [resolvable:$true] %s234
      %237 = dma.hbm_to_vmem [thread:$0]  %s233, 64, %s235, [#allocation20]
    $region85: #{sepconv_encoder_pallas.1} parent=1 // pred_fallthru
      _
    // Predicated region
    $region86: #{sepconv_encoder_pallas.1} parent=1 // pred_check
      _
    $region87: #{sepconv_encoder_pallas.1} parent=1 // pred_check_branch
      %239 = sbr.rel (0) target = $region89
    $region88: #{sepconv_encoder_pallas.1} parent=1 // pred_region
      _
    $region89: #{sepconv_encoder_pallas.1} parent=1 // pred_fallthru
      _
    // Predicated region
    $region90: #{sepconv_encoder_pallas.1} parent=1 // pred_check
      _
    $region91: #{sepconv_encoder_pallas.1} parent=1 // pred_check_branch
      %241 = sbr.rel (0) target = $region93
    $region92: #{sepconv_encoder_pallas.1} parent=1 // pred_region
      %243 = vsyncadd [#allocation20], 0
      %s245 = sshll.u32 %s45, 4
      %s246 = int_to_ptr.hbm [resolvable:$true] %s245
      %s247 = sshll.u32 [#allocation21], 4
      %s248 = int_to_ptr.vmem [resolvable:$true] %s247
      %250 = dma.hbm_to_vmem [thread:$0]  %s246, 64, %s248, [#allocation20]
    $region93: #{sepconv_encoder_pallas.1} parent=1 // pred_fallthru
      _
    // Predicated region
    $region94: #{sepconv_encoder_pallas.1} parent=1 // pred_check
      _
    $region95: #{sepconv_encoder_pallas.1} parent=1 // pred_check_branch
      %252 = sbr.rel (0) target = $region97
    $region96: #{sepconv_encoder_pallas.1} parent=1 // pred_region
      _
    $region97: #{sepconv_encoder_pallas.1} parent=1 // pred_fallthru
      _
    // Predicated region
    $region98: #{sepconv_encoder_pallas.1} parent=1 // pred_check
      _
    $region99: #{sepconv_encoder_pallas.1} parent=1 // pred_check_branch
      %254 = sbr.rel (0) target = $region101
    $region100: #{sepconv_encoder_pallas.1} parent=1 // pred_region
      %256 = vsyncadd [#allocation23], 0
      %s258 = sshll.u32 %s49, 4
      %s259 = int_to_ptr.hbm [resolvable:$true] %s258
      %s260 = sshll.u32 [#allocation22], 4
      %s261 = int_to_ptr.vmem [resolvable:$true] %s260
      %263 = dma.hbm_to_vmem [thread:$0]  %s259, 64, %s261, [#allocation23]
    $region101: #{sepconv_encoder_pallas.1} parent=1 // pred_fallthru
      _
    // Predicated region
    $region102: #{sepconv_encoder_pallas.1} parent=1 // pred_check
      _
    $region103: #{sepconv_encoder_pallas.1} parent=1 // pred_check_branch
      %265 = sbr.rel (0) target = $region105
    $region104: #{sepconv_encoder_pallas.1} parent=1 // pred_region
      _
    $region105: #{sepconv_encoder_pallas.1} parent=1 // pred_fallthru
      _
    // Predicated region
    $region106: #{sepconv_encoder_pallas.1} parent=1 // pred_check
      _
    $region107: #{sepconv_encoder_pallas.1} parent=1 // pred_check_branch
      %267 = sbr.rel (0) target = $region109
    $region108: #{sepconv_encoder_pallas.1} parent=1 // pred_region
      %269 = vsyncadd [#allocation23], 0
      %s271 = sshll.u32 %s53, 4
      %s272 = int_to_ptr.hbm [resolvable:$true] %s271
      %s273 = sshll.u32 [#allocation24], 4
      %s274 = int_to_ptr.vmem [resolvable:$true] %s273
      %276 = dma.hbm_to_vmem [thread:$0]  %s272, 64, %s274, [#allocation23]
    $region109: #{sepconv_encoder_pallas.1} parent=1 // pred_fallthru
      _
    // Predicated region
    $region110: #{sepconv_encoder_pallas.1} parent=1 // pred_check
      _
    $region111: #{sepconv_encoder_pallas.1} parent=1 // pred_check_branch
      %278 = sbr.rel (0) target = $region113
    $region112: #{sepconv_encoder_pallas.1} parent=1 // pred_region
      _
    $region113: #{sepconv_encoder_pallas.1} parent=1 // pred_fallthru
      _
    // Predicated region
    $region114: #{sepconv_encoder_pallas.1} parent=1 // pred_check
      _
    $region115: #{sepconv_encoder_pallas.1} parent=1 // pred_check_branch
      %280 = sbr.rel (0) target = $region117
    $region116: #{sepconv_encoder_pallas.1} parent=1 // pred_region
      %282 = vsyncadd [#allocation26], 0
      %s284 = sshll.u32 %s57, 4
      %s285 = int_to_ptr.hbm [resolvable:$true] %s284
      %s286 = sshll.u32 [#allocation25], 4
      %s287 = int_to_ptr.vmem [resolvable:$true] %s286
      %289 = dma.hbm_to_vmem [thread:$0]  %s285, 64, %s287, [#allocation26]
    $region117: #{sepconv_encoder_pallas.1} parent=1 // pred_fallthru
      _
    // Predicated region
    $region118: #{sepconv_encoder_pallas.1} parent=1 // pred_check
      _
    $region119: #{sepconv_encoder_pallas.1} parent=1 // pred_check_branch
      %291 = sbr.rel (0) target = $region121
    $region120: #{sepconv_encoder_pallas.1} parent=1 // pred_region
      %293 = vsyncadd [#allocation26], 0
      %s295 = sshll.u32 %s59, 4
      %s296 = int_to_ptr.hbm [resolvable:$true] %s295
      %s297 = sshll.u32 [#allocation27], 4
      %s298 = int_to_ptr.vmem [resolvable:$true] %s297
      %300 = dma.hbm_to_vmem [thread:$0]  %s296, 128, %s298, [#allocation26]
    $region121: #{sepconv_encoder_pallas.1} parent=1 // pred_fallthru
      _
    // Predicated region
    $region122: #{sepconv_encoder_pallas.1} parent=1 // pred_check
      _
    $region123: #{sepconv_encoder_pallas.1} parent=1 // pred_check_branch
      %302 = sbr.rel (0) target = $region125
    $region124: #{sepconv_encoder_pallas.1} parent=1 // pred_region
      _
    $region125: #{sepconv_encoder_pallas.1} parent=1 // pred_fallthru
      _
    // Predicated region
    $region126: #{sepconv_encoder_pallas.1} parent=1 // pred_check
      _
    $region127: #{sepconv_encoder_pallas.1} parent=1 // pred_check_branch
      %304 = sbr.rel (0) target = $region129
    $region128: #{sepconv_encoder_pallas.1} parent=1 // pred_region
      %306 = vsyncadd [#allocation29], 0
      %s308 = sshll.u32 %s63, 4
      %s309 = int_to_ptr.hbm [resolvable:$true] %s308
      %s310 = sshll.u32 [#allocation28], 4
      %s311 = int_to_ptr.vmem [resolvable:$true] %s310
      %313 = dma.hbm_to_vmem [thread:$0]  %s309, 128, %s311, [#allocation29]
    $region129: #{sepconv_encoder_pallas.1} parent=1 // pred_fallthru
      _
    // Predicated region
    $region130: #{sepconv_encoder_pallas.1} parent=1 // pred_check
      _
    $region131: #{sepconv_encoder_pallas.1} parent=1 // pred_check_branch
      %315 = sbr.rel (0) target = $region133
    $region132: #{sepconv_encoder_pallas.1} parent=1 // pred_region
      %317 = vsyncadd [#allocation29], 0
      %s319 = sshll.u32 %s65, 4
      %s320 = int_to_ptr.hbm [resolvable:$true] %s319
      %s321 = sshll.u32 [#allocation30], 4
      %s322 = int_to_ptr.vmem [resolvable:$true] %s321
      %324 = dma.hbm_to_vmem [thread:$0]  %s320, 64, %s322, [#allocation29]
    $region133: #{sepconv_encoder_pallas.1} parent=1 // pred_fallthru
      _
    // Predicated region
    $region134: #{sepconv_encoder_pallas.1} parent=1 // pred_check
      _
    $region135: #{sepconv_encoder_pallas.1} parent=1 // pred_check_branch
      %326 = sbr.rel (0) target = $region137
    $region136: #{sepconv_encoder_pallas.1} parent=1 // pred_region
      %328 = dma.done [#allocation3], 16384
    $region137: #{sepconv_encoder_pallas.1} parent=1 // pred_fallthru
      _
    // Predicated region
    $region138: #{sepconv_encoder_pallas.1} parent=1 // pred_check
      _
    $region139: #{sepconv_encoder_pallas.1} parent=1 // pred_check_branch
      %330 = sbr.rel (0) target = $region141
    $region140: #{sepconv_encoder_pallas.1} parent=1 // pred_region
      %332 = dma.done [#allocation5], 16384
    $region141: #{sepconv_encoder_pallas.1} parent=1 // pred_fallthru
      _
    // Predicated region
    $region142: #{sepconv_encoder_pallas.1} parent=1 // pred_check
      _
    $region143: #{sepconv_encoder_pallas.1} parent=1 // pred_check_branch
      %334 = sbr.rel (0) target = $region145
    $region144: #{sepconv_encoder_pallas.1} parent=1 // pred_region
      %336 = dma.done [#allocation5], 64
    $region145: #{sepconv_encoder_pallas.1} parent=1 // pred_fallthru
      _
    // Predicated region
    $region146: #{sepconv_encoder_pallas.1} parent=1 // pred_check
      _
    $region147: #{sepconv_encoder_pallas.1} parent=1 // pred_check_branch
      %338 = sbr.rel (0) target = $region149
    $region148: #{sepconv_encoder_pallas.1} parent=1 // pred_region
      %340 = dma.done [#allocation8], 64
    $region149: #{sepconv_encoder_pallas.1} parent=1 // pred_fallthru
      _
    // Predicated region
    $region150: #{sepconv_encoder_pallas.1} parent=1 // pred_check
      _
    $region151: #{sepconv_encoder_pallas.1} parent=1 // pred_check_branch
      %342 = sbr.rel (0) target = $region153
    $region152: #{sepconv_encoder_pallas.1} parent=1 // pred_region
      %344 = dma.done [#allocation8], 1024
    $region153: #{sepconv_encoder_pallas.1} parent=1 // pred_fallthru
      _
    // Predicated region
    $region154: #{sepconv_encoder_pallas.1} parent=1 // pred_check
      _
    $region155: #{sepconv_encoder_pallas.1} parent=1 // pred_check_branch
      %346 = sbr.rel (0) target = $region157
    $region156: #{sepconv_encoder_pallas.1} parent=1 // pred_region
      %348 = dma.done [#allocation11], 64
    $region157: #{sepconv_encoder_pallas.1} parent=1 // pred_fallthru
      _
    // Predicated region
    $region158: #{sepconv_encoder_pallas.1} parent=1 // pred_check
      _
    $region159: #{sepconv_encoder_pallas.1} parent=1 // pred_check_branch
      %350 = sbr.rel (0) target = $region161
    $region160: #{sepconv_encoder_pallas.1} parent=1 // pred_region
      %352 = dma.done [#allocation11], 64
    $region161: #{sepconv_encoder_pallas.1} parent=1 // pred_fallthru
      _
    // Predicated region
    $region162: #{sepconv_encoder_pallas.1} parent=1 // pred_check
      _
    $region163: #{sepconv_encoder_pallas.1} parent=1 // pred_check_branch
      %354 = sbr.rel (0) target = $region165
    $region164: #{sepconv_encoder_pallas.1} parent=1 // pred_region
      %356 = dma.done [#allocation14], 64
    $region165: #{sepconv_encoder_pallas.1} parent=1 // pred_fallthru
      _
    // Predicated region
    $region166: #{sepconv_encoder_pallas.1} parent=1 // pred_check
      _
    $region167: #{sepconv_encoder_pallas.1} parent=1 // pred_check_branch
      %358 = sbr.rel (0) target = $region169
    $region168: #{sepconv_encoder_pallas.1} parent=1 // pred_region
      %360 = dma.done [#allocation14], 64
    $region169: #{sepconv_encoder_pallas.1} parent=1 // pred_fallthru
      _
    // Predicated region
    $region170: #{sepconv_encoder_pallas.1} parent=1 // pred_check
      _
    $region171: #{sepconv_encoder_pallas.1} parent=1 // pred_check_branch
      %362 = sbr.rel (0) target = $region173
    $region172: #{sepconv_encoder_pallas.1} parent=1 // pred_region
      %364 = dma.done [#allocation17], 128
    $region173: #{sepconv_encoder_pallas.1} parent=1 // pred_fallthru
      _
    // Predicated region
    $region174: #{sepconv_encoder_pallas.1} parent=1 // pred_check
      _
    $region175: #{sepconv_encoder_pallas.1} parent=1 // pred_check_branch
      %366 = sbr.rel (0) target = $region177
    $region176: #{sepconv_encoder_pallas.1} parent=1 // pred_region
      %368 = dma.done [#allocation17], 64
    $region177: #{sepconv_encoder_pallas.1} parent=1 // pred_fallthru
      _
    // Predicated region
    $region178: #{sepconv_encoder_pallas.1} parent=1 // pred_check
      _
    $region179: #{sepconv_encoder_pallas.1} parent=1 // pred_check_branch
      %370 = sbr.rel (0) target = $region181
    $region180: #{sepconv_encoder_pallas.1} parent=1 // pred_region
      %372 = dma.done [#allocation20], 64
    $region181: #{sepconv_encoder_pallas.1} parent=1 // pred_fallthru
      _
    // Predicated region
    $region182: #{sepconv_encoder_pallas.1} parent=1 // pred_check
      _
    $region183: #{sepconv_encoder_pallas.1} parent=1 // pred_check_branch
      %374 = sbr.rel (0) target = $region185
    $region184: #{sepconv_encoder_pallas.1} parent=1 // pred_region
      %376 = dma.done [#allocation20], 64
    $region185: #{sepconv_encoder_pallas.1} parent=1 // pred_fallthru
      _
    // Predicated region
    $region186: #{sepconv_encoder_pallas.1} parent=1 // pred_check
      _
    $region187: #{sepconv_encoder_pallas.1} parent=1 // pred_check_branch
      %378 = sbr.rel (0) target = $region189
    $region188: #{sepconv_encoder_pallas.1} parent=1 // pred_region
      %380 = dma.done [#allocation23], 64
    $region189: #{sepconv_encoder_pallas.1} parent=1 // pred_fallthru
      _
    // Predicated region
    $region190: #{sepconv_encoder_pallas.1} parent=1 // pred_check
      _
    $region191: #{sepconv_encoder_pallas.1} parent=1 // pred_check_branch
      %382 = sbr.rel (0) target = $region193
    $region192: #{sepconv_encoder_pallas.1} parent=1 // pred_region
      %384 = dma.done [#allocation23], 64
    $region193: #{sepconv_encoder_pallas.1} parent=1 // pred_fallthru
      _
    // Predicated region
    $region194: #{sepconv_encoder_pallas.1} parent=1 // pred_check
      _
    $region195: #{sepconv_encoder_pallas.1} parent=1 // pred_check_branch
      %386 = sbr.rel (0) target = $region197
    $region196: #{sepconv_encoder_pallas.1} parent=1 // pred_region
      %388 = dma.done [#allocation26], 64
    $region197: #{sepconv_encoder_pallas.1} parent=1 // pred_fallthru
      _
    // Predicated region
    $region198: #{sepconv_encoder_pallas.1} parent=1 // pred_check
      _
    $region199: #{sepconv_encoder_pallas.1} parent=1 // pred_check_branch
      %390 = sbr.rel (0) target = $region201
    $region200: #{sepconv_encoder_pallas.1} parent=1 // pred_region
      %392 = dma.done [#allocation26], 128
    $region201: #{sepconv_encoder_pallas.1} parent=1 // pred_fallthru
      _
    // Predicated region
    $region202: #{sepconv_encoder_pallas.1} parent=1 // pred_check
      _
    $region203: #{sepconv_encoder_pallas.1} parent=1 // pred_check_branch
      %394 = sbr.rel (0) target = $region205
    $region204: #{sepconv_encoder_pallas.1} parent=1 // pred_region
      %396 = dma.done [#allocation29], 128
    $region205: #{sepconv_encoder_pallas.1} parent=1 // pred_fallthru
      _
    // Predicated region
    $region206: #{sepconv_encoder_pallas.1} parent=1 // pred_check
      _
    $region207: #{sepconv_encoder_pallas.1} parent=1 // pred_check_branch
      %398 = sbr.rel (0) target = $region209
    $region208: #{sepconv_encoder_pallas.1} parent=1 // pred_region
      %400 = dma.done [#allocation29], 64
    $region209: #{sepconv_encoder_pallas.1} parent=1 // pred_fallthru
      _
    %v401 = vld [vmem:[%s1] sm:$0xff]
    %v402 = vld [vmem:[%s1 + $0x8] sm:$0xff]
    %v403 = vld [vmem:[#allocation2] sm:$0xff]
    %v404 = vld [vmem:[#allocation2 + $0x8] sm:$0xff]
    %v405 = vld [vmem:[#allocation2 + $0x10] sm:$0xff]
    %v406 = vld [vmem:[#allocation2 + $0x18] sm:$0xff]
    %v407 = vld [vmem:[#allocation2 + $0x20] sm:$0xff]
    %v408 = vld [vmem:[#allocation2 + $0x28] sm:$0xff]
    %v409 = vld [vmem:[#allocation2 + $0x30] sm:$0xff]
    %v410 = vld [vmem:[#allocation2 + $0x38] sm:$0xff]
    %v411 = vld [vmem:[#allocation2 + $0x40] sm:$0xff]
    %v412 = vld [vmem:[#allocation2 + $0x48] sm:$0xff]
    %v413 = vld [vmem:[#allocation2 + $0x50] sm:$0xff]
    %v414 = vld [vmem:[#allocation2 + $0x58] sm:$0xff]
    %v415 = vld [vmem:[#allocation2 + $0x60] sm:$0xff]
    %v416 = vld [vmem:[#allocation2 + $0x68] sm:$0xff]
    %v417 = vld [vmem:[#allocation2 + $0x70] sm:$0xff]
    %v418 = vld [vmem:[#allocation2 + $0x78] sm:$0xff]
    %v419 = vld [vmem:[#allocation2 + $0x80] sm:$0xff]
    %v420 = vld [vmem:[#allocation2 + $0x88] sm:$0xff]
    %v421 = vld [vmem:[#allocation2 + $0x90] sm:$0xff]
    %v422 = vld [vmem:[#allocation2 + $0x98] sm:$0xff]
    %v423 = vld [vmem:[#allocation2 + $0xa0] sm:$0xff]
    %v424 = vld [vmem:[#allocation2 + $0xa8] sm:$0xff]
    %v425 = vld [vmem:[#allocation2 + $0xb0] sm:$0xff]
    %v426 = vld [vmem:[#allocation2 + $0xb8] sm:$0xff]
    %v427 = vld [vmem:[#allocation2 + $0xc0] sm:$0xff]
    %v428 = vld [vmem:[#allocation2 + $0xc8] sm:$0xff]
    %v429 = vld [vmem:[#allocation2 + $0xd0] sm:$0xff]
    %v430 = vld [vmem:[#allocation2 + $0xd8] sm:$0xff]
    %v431 = vld [vmem:[#allocation2 + $0xe0] sm:$0xff]
    %v432 = vld [vmem:[#allocation2 + $0xe8] sm:$0xff]
    %v433 = vld [vmem:[#allocation2 + $0xf0] sm:$0xff]
    %v434 = vld [vmem:[#allocation2 + $0xf8] sm:$0xff]
    %v435 = vld [vmem:[#allocation2 + $0x100] sm:$0xff]
    %v436 = vld [vmem:[#allocation2 + $0x108] sm:$0xff]
    %v437 = vld [vmem:[#allocation2 + $0x110] sm:$0xff]
    %v438 = vld [vmem:[#allocation2 + $0x118] sm:$0xff]
    %v439 = vld [vmem:[#allocation2 + $0x120] sm:$0xff]
    %v440 = vld [vmem:[#allocation2 + $0x128] sm:$0xff]
    %v441 = vld [vmem:[#allocation2 + $0x130] sm:$0xff]
    %v442 = vld [vmem:[#allocation2 + $0x138] sm:$0xff]
    %v443 = vld [vmem:[#allocation2 + $0x140] sm:$0xff]
    %v444 = vld [vmem:[#allocation2 + $0x148] sm:$0xff]
    %v445 = vld [vmem:[#allocation2 + $0x150] sm:$0xff]
    %v446 = vld [vmem:[#allocation2 + $0x158] sm:$0xff]
    %v447 = vld [vmem:[#allocation2 + $0x160] sm:$0xff]
    %v448 = vld [vmem:[#allocation2 + $0x168] sm:$0xff]
    %v449 = vld [vmem:[#allocation2 + $0x170] sm:$0xff]
    %v450 = vld [vmem:[#allocation2 + $0x178] sm:$0xff]
    %v451 = vld [vmem:[#allocation2 + $0x180] sm:$0xff]
    %v452 = vld [vmem:[#allocation2 + $0x188] sm:$0xff]
    %v453 = vld [vmem:[#allocation2 + $0x190] sm:$0xff]
    %v454 = vld [vmem:[#allocation2 + $0x198] sm:$0xff]
    %v455 = vld [vmem:[#allocation2 + $0x1a0] sm:$0xff]
    %v456 = vld [vmem:[#allocation2 + $0x1a8] sm:$0xff]
    %v457 = vld [vmem:[#allocation2 + $0x1b0] sm:$0xff]
    %v458 = vld [vmem:[#allocation2 + $0x1b8] sm:$0xff]
    %v459 = vld [vmem:[#allocation2 + $0x1c0] sm:$0xff]
    %v460 = vld [vmem:[#allocation2 + $0x1c8] sm:$0xff]
    %v461 = vld [vmem:[#allocation2 + $0x1d0] sm:$0xff]
    %v462 = vld [vmem:[#allocation2 + $0x1d8] sm:$0xff]
    %v463 = vld [vmem:[#allocation2 + $0x1e0] sm:$0xff]
    %v464 = vld [vmem:[#allocation2 + $0x1e8] sm:$0xff]
    %v465 = vld [vmem:[#allocation2 + $0x1f0] sm:$0xff]
    %v466 = vld [vmem:[#allocation2 + $0x1f8] sm:$0xff]
    %v467 = vld [vmem:[#allocation2 + $0x200] sm:$0xff]
    %v468 = vld [vmem:[#allocation2 + $0x208] sm:$0xff]
    %v469 = vld [vmem:[#allocation2 + $0x210] sm:$0xff]
    %v470 = vld [vmem:[#allocation2 + $0x218] sm:$0xff]
    %v471 = vld [vmem:[#allocation2 + $0x220] sm:$0xff]
    %v472 = vld [vmem:[#allocation2 + $0x228] sm:$0xff]
    %v473 = vld [vmem:[#allocation2 + $0x230] sm:$0xff]
    %v474 = vld [vmem:[#allocation2 + $0x238] sm:$0xff]
    %v475 = vld [vmem:[#allocation2 + $0x240] sm:$0xff]
    %v476 = vld [vmem:[#allocation2 + $0x248] sm:$0xff]
    %v477 = vld [vmem:[#allocation2 + $0x250] sm:$0xff]
    %v478 = vld [vmem:[#allocation2 + $0x258] sm:$0xff]
    %v479 = vld [vmem:[#allocation2 + $0x260] sm:$0xff]
    %v480 = vld [vmem:[#allocation2 + $0x268] sm:$0xff]
    %v481 = vld [vmem:[#allocation2 + $0x270] sm:$0xff]
    %v482 = vld [vmem:[#allocation2 + $0x278] sm:$0xff]
    %v483 = vld [vmem:[#allocation2 + $0x280] sm:$0xff]
    %v484 = vld [vmem:[#allocation2 + $0x288] sm:$0xff]
    %v485 = vld [vmem:[#allocation2 + $0x290] sm:$0xff]
    %v486 = vld [vmem:[#allocation2 + $0x298] sm:$0xff]
    %v487 = vld [vmem:[#allocation2 + $0x2a0] sm:$0xff]
    %v488 = vld [vmem:[#allocation2 + $0x2a8] sm:$0xff]
    %v489 = vld [vmem:[#allocation2 + $0x2b0] sm:$0xff]
    %v490 = vld [vmem:[#allocation2 + $0x2b8] sm:$0xff]
    %v491 = vld [vmem:[#allocation2 + $0x2c0] sm:$0xff]
    %v492 = vld [vmem:[#allocation2 + $0x2c8] sm:$0xff]
    %v493 = vld [vmem:[#allocation2 + $0x2d0] sm:$0xff]
    %v494 = vld [vmem:[#allocation2 + $0x2d8] sm:$0xff]
    %v495 = vld [vmem:[#allocation2 + $0x2e0] sm:$0xff]
    %v496 = vld [vmem:[#allocation2 + $0x2e8] sm:$0xff]
    %v497 = vld [vmem:[#allocation2 + $0x2f0] sm:$0xff]
    %v498 = vld [vmem:[#allocation2 + $0x2f8] sm:$0xff]
    %v499 = vld [vmem:[#allocation2 + $0x300] sm:$0xff]
    %v500 = vld [vmem:[#allocation2 + $0x308] sm:$0xff]
    %v501 = vld [vmem:[#allocation2 + $0x310] sm:$0xff]
    %v502 = vld [vmem:[#allocation2 + $0x318] sm:$0xff]
    %v503 = vld [vmem:[#allocation2 + $0x320] sm:$0xff]
    %v504 = vld [vmem:[#allocation2 + $0x328] sm:$0xff]
    %v505 = vld [vmem:[#allocation2 + $0x330] sm:$0xff]
    %v506 = vld [vmem:[#allocation2 + $0x338] sm:$0xff]
    %v507 = vld [vmem:[#allocation2 + $0x340] sm:$0xff]
    %v508 = vld [vmem:[#allocation2 + $0x348] sm:$0xff]
    %v509 = vld [vmem:[#allocation2 + $0x350] sm:$0xff]
    %v510 = vld [vmem:[#allocation2 + $0x358] sm:$0xff]
    %v511 = vld [vmem:[#allocation2 + $0x360] sm:$0xff]
    %v512 = vld [vmem:[#allocation2 + $0x368] sm:$0xff]
    %v513 = vld [vmem:[#allocation2 + $0x370] sm:$0xff]
    %v514 = vld [vmem:[#allocation2 + $0x378] sm:$0xff]
    %v515 = vld [vmem:[#allocation2 + $0x380] sm:$0xff]
    %v516 = vld [vmem:[#allocation2 + $0x388] sm:$0xff]
    %v517 = vld [vmem:[#allocation2 + $0x390] sm:$0xff]
    %v518 = vld [vmem:[#allocation2 + $0x398] sm:$0xff]
    %v519 = vld [vmem:[#allocation2 + $0x3a0] sm:$0xff]
    %v520 = vld [vmem:[#allocation2 + $0x3a8] sm:$0xff]
    %v521 = vld [vmem:[#allocation2 + $0x3b0] sm:$0xff]
    %v522 = vld [vmem:[#allocation2 + $0x3b8] sm:$0xff]
    %v523 = vld [vmem:[#allocation2 + $0x3c0] sm:$0xff]
    %v524 = vld [vmem:[#allocation2 + $0x3c8] sm:$0xff]
    %v525 = vld [vmem:[#allocation2 + $0x3d0] sm:$0xff]
    %v526 = vld [vmem:[#allocation2 + $0x3d8] sm:$0xff]
    %v527 = vld [vmem:[#allocation2 + $0x3e0] sm:$0xff]
    %v528 = vld [vmem:[#allocation2 + $0x3e8] sm:$0xff]
    %v529 = vld [vmem:[#allocation2 + $0x3f0] sm:$0xff]
    %v530 = vld [vmem:[#allocation2 + $0x3f8] sm:$0xff]
    %v531 = vld [vmem:[%s5] ss:$4 sm:$0xf]
    %v533 = vperm.slane %v531, 0
    %v534 = vperm.slane %v531, 1
    %v535 = vperm.slane %v531, 2
    %v536 = vperm.slane %v531, 3
    %541 = vmatpush.msra.mxu0 %v463
    %542 = vmatpush.msra.mxu0 %v459
    %543 = vmatpush.msra.mxu0 %v455
    %544 = vmatpush.msra.mxu0 %v451
    %545 = vmatpush.msra.mxu0 %v447
    %546 = vmatpush.msra.mxu0 %v443
    %547 = vmatpush.msra.mxu0 %v439
    %548 = vmatpush.msra.mxu0 %v435
    %549 = vmatpush.msra.mxu0 %v431
    %550 = vmatpush.msra.mxu0 %v427
    %551 = vmatpush.msra.mxu0 %v423
    %552 = vmatpush.msra.mxu0 %v419
    %553 = vmatpush.msra.mxu0 %v415
    %554 = vmatpush.msra.mxu0 %v411
    %555 = vmatpush.msra.mxu0 %v407
    %556 = vmatpush.msra.mxu0 %v403
    %557 = vmatmul.f32.gmra.mxu0 %v401
    %v558 = vpop.f32.mrf.mxu0
    %v559 = vadd.f32 %v533, %v558
    %560 = vdwg.mxu0
    %561 = vmatpush.msra.mxu0 %v527
    %562 = vmatpush.msra.mxu0 %v523
    %563 = vmatpush.msra.mxu0 %v519
    %564 = vmatpush.msra.mxu0 %v515
    %565 = vmatpush.msra.mxu0 %v511
    %566 = vmatpush.msra.mxu0 %v507
    %567 = vmatpush.msra.mxu0 %v503
    %568 = vmatpush.msra.mxu0 %v499
    %569 = vmatpush.msra.mxu0 %v495
    %570 = vmatpush.msra.mxu0 %v491
    %571 = vmatpush.msra.mxu0 %v487
    %572 = vmatpush.msra.mxu0 %v483
    %573 = vmatpush.msra.mxu0 %v479
    %574 = vmatpush.msra.mxu0 %v475
    %575 = vmatpush.msra.mxu0 %v471
    %576 = vmatpush.msra.mxu0 %v467
    %577 = vmatmul.f32.gmra.mxu0 %v402
    %v578 = vpop.f32.mrf.mxu0
    %v579 = vadd.f32 %v559, %v578
    %580 = vdwg.mxu0
    %581 = vmatpush.msra.mxu0 %v464
    %582 = vmatpush.msra.mxu0 %v460
    %583 = vmatpush.msra.mxu0 %v456
    %584 = vmatpush.msra.mxu0 %v452
    %585 = vmatpush.msra.mxu0 %v448
    %586 = vmatpush.msra.mxu0 %v444
    %587 = vmatpush.msra.mxu0 %v440
    %588 = vmatpush.msra.mxu0 %v436
    %589 = vmatpush.msra.mxu0 %v432
    %590 = vmatpush.msra.mxu0 %v428
    %591 = vmatpush.msra.mxu0 %v424
    %592 = vmatpush.msra.mxu0 %v420
    %593 = vmatpush.msra.mxu0 %v416
    %594 = vmatpush.msra.mxu0 %v412
    %595 = vmatpush.msra.mxu0 %v408
    %596 = vmatpush.msra.mxu0 %v404
    %597 = vmatmul.f32.gmra.mxu0 %v401
    %v598 = vpop.f32.mrf.mxu0
    %v599 = vadd.f32 %v534, %v598
    %600 = vdwg.mxu0
    %601 = vmatpush.msra.mxu0 %v528
    %602 = vmatpush.msra.mxu0 %v524
    %603 = vmatpush.msra.mxu0 %v520
    %604 = vmatpush.msra.mxu0 %v516
    %605 = vmatpush.msra.mxu0 %v512
    %606 = vmatpush.msra.mxu0 %v508
    %607 = vmatpush.msra.mxu0 %v504
    %608 = vmatpush.msra.mxu0 %v500
    %609 = vmatpush.msra.mxu0 %v496
    %610 = vmatpush.msra.mxu0 %v492
    %611 = vmatpush.msra.mxu0 %v488
    %612 = vmatpush.msra.mxu0 %v484
    %613 = vmatpush.msra.mxu0 %v480
    %614 = vmatpush.msra.mxu0 %v476
    %615 = vmatpush.msra.mxu0 %v472
    %616 = vmatpush.msra.mxu0 %v468
    %617 = vmatmul.f32.gmra.mxu0 %v402
    %v618 = vpop.f32.mrf.mxu0
    %v619 = vadd.f32 %v599, %v618
    %620 = vdwg.mxu0
    %621 = vmatpush.msra.mxu0 %v465
    %622 = vmatpush.msra.mxu0 %v461
    %623 = vmatpush.msra.mxu0 %v457
    %624 = vmatpush.msra.mxu0 %v453
    %625 = vmatpush.msra.mxu0 %v449
    %626 = vmatpush.msra.mxu0 %v445
    %627 = vmatpush.msra.mxu0 %v441
    %628 = vmatpush.msra.mxu0 %v437
    %629 = vmatpush.msra.mxu0 %v433
    %630 = vmatpush.msra.mxu0 %v429
    %631 = vmatpush.msra.mxu0 %v425
    %632 = vmatpush.msra.mxu0 %v421
    %633 = vmatpush.msra.mxu0 %v417
    %634 = vmatpush.msra.mxu0 %v413
    %635 = vmatpush.msra.mxu0 %v409
    %636 = vmatpush.msra.mxu0 %v405
    %637 = vmatmul.f32.gmra.mxu0 %v401
    %v638 = vpop.f32.mrf.mxu0
    %v639 = vadd.f32 %v535, %v638
    %640 = vdwg.mxu0
    %641 = vmatpush.msra.mxu0 %v529
    %642 = vmatpush.msra.mxu0 %v525
    %643 = vmatpush.msra.mxu0 %v521
    %644 = vmatpush.msra.mxu0 %v517
    %645 = vmatpush.msra.mxu0 %v513
    %646 = vmatpush.msra.mxu0 %v509
    %647 = vmatpush.msra.mxu0 %v505
    %648 = vmatpush.msra.mxu0 %v501
    %649 = vmatpush.msra.mxu0 %v497
    %650 = vmatpush.msra.mxu0 %v493
    %651 = vmatpush.msra.mxu0 %v489
    %652 = vmatpush.msra.mxu0 %v485
    %653 = vmatpush.msra.mxu0 %v481
    %654 = vmatpush.msra.mxu0 %v477
    %655 = vmatpush.msra.mxu0 %v473
    %656 = vmatpush.msra.mxu0 %v469
    %657 = vmatmul.f32.gmra.mxu0 %v402
    %v658 = vpop.f32.mrf.mxu0
    %v659 = vadd.f32 %v639, %v658
    %660 = vdwg.mxu0
    %661 = vmatpush.msra.mxu0 %v466
    %662 = vmatpush.msra.mxu0 %v462
    %663 = vmatpush.msra.mxu0 %v458
    %664 = vmatpush.msra.mxu0 %v454
    %665 = vmatpush.msra.mxu0 %v450
    %666 = vmatpush.msra.mxu0 %v446
    %667 = vmatpush.msra.mxu0 %v442
    %668 = vmatpush.msra.mxu0 %v438
    %669 = vmatpush.msra.mxu0 %v434
    %670 = vmatpush.msra.mxu0 %v430
    %671 = vmatpush.msra.mxu0 %v426
    %672 = vmatpush.msra.mxu0 %v422
    %673 = vmatpush.msra.mxu0 %v418
    %674 = vmatpush.msra.mxu0 %v414
    %675 = vmatpush.msra.mxu0 %v410
    %676 = vmatpush.msra.mxu0 %v406
    %677 = vmatmul.f32.gmra.mxu0 %v401
    %v678 = vpop.f32.mrf.mxu0
    %v679 = vadd.f32 %v536, %v678
    %680 = vdwg.mxu0
    %681 = vmatpush.msra.mxu0 %v530
    %682 = vmatpush.msra.mxu0 %v526
    %683 = vmatpush.msra.mxu0 %v522
    %684 = vmatpush.msra.mxu0 %v518
    %685 = vmatpush.msra.mxu0 %v514
    %686 = vmatpush.msra.mxu0 %v510
    %687 = vmatpush.msra.mxu0 %v506
    %688 = vmatpush.msra.mxu0 %v502
    %689 = vmatpush.msra.mxu0 %v498
    %690 = vmatpush.msra.mxu0 %v494
    %691 = vmatpush.msra.mxu0 %v490
    %692 = vmatpush.msra.mxu0 %v486
    %693 = vmatpush.msra.mxu0 %v482
    %694 = vmatpush.msra.mxu0 %v478
    %695 = vmatpush.msra.mxu0 %v474
    %696 = vmatpush.msra.mxu0 %v470
    %697 = vmatmul.f32.gmra.mxu0 %v402
    %v698 = vpop.f32.mrf.mxu0
    %v699 = vadd.f32 %v679, %v698
    %700 = vdwg.mxu0
    %v701 = vadd.f32 %v579, %v619
    %v702 = vadd.f32 %v701, %v659
    %v703 = vadd.f32 %v702, %v699
    %704 = vadd.xlane.f32.xlu0 %v703
    %v705 = vpop.xlane.xlu0 %704
    %v706 = vrcp.pop 512.0
    %v707 = vmul.f32 512.0, %v706
    %v708 = vsub.f32 1.0, %v707
    %v709 = vmul.f32 %v706, %v708
    %v710 = vadd.f32 %v706, %v709
    %vm711 = vweird.f32 %v706
    %v712 = vsel %vm711, %v706, %v710
    %v713 = vmul.f32 %v705, %v712
    %v714 = vmul.f32 %v579, %v579
    %v715 = vmul.f32 %v619, %v619
    %v716 = vmul.f32 %v659, %v659
    %v717 = vmul.f32 %v699, %v699
    %v718 = vadd.f32 %v714, %v715
    %v719 = vadd.f32 %v718, %v716
    %v720 = vadd.f32 %v719, %v717
    %721 = vadd.xlane.f32.xlu0 %v720
    %v722 = vpop.xlane.xlu0 %721
    %v723 = vmul.f32 %v722, %v712
    %v724 = vmul.f32 %v713, %v713
    %v725 = vsub.f32 %v723, %v724
    %v726 = vmax.f32 %v725, 0.0
    %v727 = vsub.f32 %v579, %v713
    %v728 = vsub.f32 %v619, %v713
    %v729 = vsub.f32 %v659, %v713
    %v730 = vsub.f32 %v699, %v713
    %v731 = vadd.f32 %v726, 1e-05
    %v732 = vrsqrt.pop %v731
    %v733 = vmul.f32 %v732, %v731
    %v734 = vmul.f32 %v733, %v732
    %v735 = vmul.f32 0.5, %v734
    %v736 = vsub.f32 1.5, %v735
    %v737 = vmul.f32 %v732, %v736
    %vm738 = vweird.f32 %v731
    %vm739 = vweird.f32 %v732
    %vm740 = vmor %vm738, %vm739
    %v741 = vsel %vm740, %v732, %v737
    %v742 = vmul.f32 %v727, %v741
    %v743 = vmul.f32 %v728, %v741
    %v744 = vmul.f32 %v729, %v741
    %v745 = vmul.f32 %v730, %v741
    %s746 = scalar_lea.vmem %s5, 1
    %v747 = vld [vmem:[%s746] ss:$4 sm:$0xf]
    %v749 = vperm.slane %v747, 0
    %v750 = vperm.slane %v747, 1
    %v751 = vperm.slane %v747, 2
    %v752 = vperm.slane %v747, 3
    %v757 = vmul.f32 %v742, %v749
    %v758 = vmul.f32 %v743, %v750
    %v759 = vmul.f32 %v744, %v751
    %v760 = vmul.f32 %v745, %v752
    %s761 = scalar_lea.vmem %s5, 2
    %v762 = vld [vmem:[%s761] ss:$4 sm:$0xf]
    %v764 = vperm.slane %v762, 0
    %v765 = vperm.slane %v762, 1
    %v766 = vperm.slane %v762, 2
    %v767 = vperm.slane %v762, 3
    %v772 = vadd.f32 %v757, %v764
    %v773 = vadd.f32 %v758, %v765
    %v774 = vadd.f32 %v759, %v766
    %v775 = vadd.f32 %v760, %v767
    %v776 = vmax.f32 %v772, 0.0
    %v777 = vmax.f32 %v773, 0.0
    %v778 = vmax.f32 %v774, 0.0
    %v779 = vmax.f32 %v775, 0.0
    %v780 = vld [vmem:[#allocation4] sm:$0xff]
    %v781 = vld [vmem:[#allocation4 + $0x8] sm:$0xff]
    %v782 = vld [vmem:[#allocation4 + $0x10] sm:$0xff]
    %v783 = vld [vmem:[#allocation4 + $0x18] sm:$0xff]
    %v784 = vld [vmem:[#allocation4 + $0x20] sm:$0xff]
    %v785 = vld [vmem:[#allocation4 + $0x28] sm:$0xff]
    %v786 = vld [vmem:[#allocation4 + $0x30] sm:$0xff]
    %v787 = vld [vmem:[#allocation4 + $0x38] sm:$0xff]
    %v788 = vld [vmem:[#allocation4 + $0x40] sm:$0xff]
    %v789 = vld [vmem:[#allocation4 + $0x48] sm:$0xff]
    %v790 = vld [vmem:[#allocation4 + $0x50] sm:$0xff]
    %v791 = vld [vmem:[#allocation4 + $0x58] sm:$0xff]
    %v792 = vld [vmem:[#allocation4 + $0x60] sm:$0xff]
    %v793 = vld [vmem:[#allocation4 + $0x68] sm:$0xff]
    %v794 = vld [vmem:[#allocation4 + $0x70] sm:$0xff]
    %v795 = vld [vmem:[#allocation4 + $0x78] sm:$0xff]
    %v796 = vld [vmem:[#allocation4 + $0x80] sm:$0xff]
    %v797 = vld [vmem:[#allocation4 + $0x88] sm:$0xff]
    %v798 = vld [vmem:[#allocation4 + $0x90] sm:$0xff]
    %v799 = vld [vmem:[#allocation4 + $0x98] sm:$0xff]
    %v800 = vld [vmem:[#allocation4 + $0xa0] sm:$0xff]
    %v801 = vld [vmem:[#allocation4 + $0xa8] sm:$0xff]
    %v802 = vld [vmem:[#allocation4 + $0xb0] sm:$0xff]
    %v803 = vld [vmem:[#allocation4 + $0xb8] sm:$0xff]
    %v804 = vld [vmem:[#allocation4 + $0xc0] sm:$0xff]
    %v805 = vld [vmem:[#allocation4 + $0xc8] sm:$0xff]
    %v806 = vld [vmem:[#allocation4 + $0xd0] sm:$0xff]
    %v807 = vld [vmem:[#allocation4 + $0xd8] sm:$0xff]
    %v808 = vld [vmem:[#allocation4 + $0xe0] sm:$0xff]
    %v809 = vld [vmem:[#allocation4 + $0xe8] sm:$0xff]
    %v810 = vld [vmem:[#allocation4 + $0xf0] sm:$0xff]
    %v811 = vld [vmem:[#allocation4 + $0xf8] sm:$0xff]
    %v812 = vld [vmem:[#allocation4 + $0x100] sm:$0xff]
    %v813 = vld [vmem:[#allocation4 + $0x108] sm:$0xff]
    %v814 = vld [vmem:[#allocation4 + $0x110] sm:$0xff]
    %v815 = vld [vmem:[#allocation4 + $0x118] sm:$0xff]
    %v816 = vld [vmem:[#allocation4 + $0x120] sm:$0xff]
    %v817 = vld [vmem:[#allocation4 + $0x128] sm:$0xff]
    %v818 = vld [vmem:[#allocation4 + $0x130] sm:$0xff]
    %v819 = vld [vmem:[#allocation4 + $0x138] sm:$0xff]
    %v820 = vld [vmem:[#allocation4 + $0x140] sm:$0xff]
    %v821 = vld [vmem:[#allocation4 + $0x148] sm:$0xff]
    %v822 = vld [vmem:[#allocation4 + $0x150] sm:$0xff]
    %v823 = vld [vmem:[#allocation4 + $0x158] sm:$0xff]
    %v824 = vld [vmem:[#allocation4 + $0x160] sm:$0xff]
    %v825 = vld [vmem:[#allocation4 + $0x168] sm:$0xff]
    %v826 = vld [vmem:[#allocation4 + $0x170] sm:$0xff]
    %v827 = vld [vmem:[#allocation4 + $0x178] sm:$0xff]
    %v828 = vld [vmem:[#allocation4 + $0x180] sm:$0xff]
    %v829 = vld [vmem:[#allocation4 + $0x188] sm:$0xff]
    %v830 = vld [vmem:[#allocation4 + $0x190] sm:$0xff]
    %v831 = vld [vmem:[#allocation4 + $0x198] sm:$0xff]
    %v832 = vld [vmem:[#allocation4 + $0x1a0] sm:$0xff]
    %v833 = vld [vmem:[#allocation4 + $0x1a8] sm:$0xff]
    %v834 = vld [vmem:[#allocation4 + $0x1b0] sm:$0xff]
    %v835 = vld [vmem:[#allocation4 + $0x1b8] sm:$0xff]
    %v836 = vld [vmem:[#allocation4 + $0x1c0] sm:$0xff]
    %v837 = vld [vmem:[#allocation4 + $0x1c8] sm:$0xff]
    %v838 = vld [vmem:[#allocation4 + $0x1d0] sm:$0xff]
    %v839 = vld [vmem:[#allocation4 + $0x1d8] sm:$0xff]
    %v840 = vld [vmem:[#allocation4 + $0x1e0] sm:$0xff]
    %v841 = vld [vmem:[#allocation4 + $0x1e8] sm:$0xff]
    %v842 = vld [vmem:[#allocation4 + $0x1f0] sm:$0xff]
    %v843 = vld [vmem:[#allocation4 + $0x1f8] sm:$0xff]
    %v844 = vld [vmem:[#allocation4 + $0x200] sm:$0xff]
    %v845 = vld [vmem:[#allocation4 + $0x208] sm:$0xff]
    %v846 = vld [vmem:[#allocation4 + $0x210] sm:$0xff]
    %v847 = vld [vmem:[#allocation4 + $0x218] sm:$0xff]
    %v848 = vld [vmem:[#allocation4 + $0x220] sm:$0xff]
    %v849 = vld [vmem:[#allocation4 + $0x228] sm:$0xff]
    %v850 = vld [vmem:[#allocation4 + $0x230] sm:$0xff]
    %v851 = vld [vmem:[#allocation4 + $0x238] sm:$0xff]
    %v852 = vld [vmem:[#allocation4 + $0x240] sm:$0xff]
    %v853 = vld [vmem:[#allocation4 + $0x248] sm:$0xff]
    %v854 = vld [vmem:[#allocation4 + $0x250] sm:$0xff]
    %v855 = vld [vmem:[#allocation4 + $0x258] sm:$0xff]
    %v856 = vld [vmem:[#allocation4 + $0x260] sm:$0xff]
    %v857 = vld [vmem:[#allocation4 + $0x268] sm:$0xff]
    %v858 = vld [vmem:[#allocation4 + $0x270] sm:$0xff]
    %v859 = vld [vmem:[#allocation4 + $0x278] sm:$0xff]
    %v860 = vld [vmem:[#allocation4 + $0x280] sm:$0xff]
    %v861 = vld [vmem:[#allocation4 + $0x288] sm:$0xff]
    %v862 = vld [vmem:[#allocation4 + $0x290] sm:$0xff]
    %v863 = vld [vmem:[#allocation4 + $0x298] sm:$0xff]
    %v864 = vld [vmem:[#allocation4 + $0x2a0] sm:$0xff]
    %v865 = vld [vmem:[#allocation4 + $0x2a8] sm:$0xff]
    %v866 = vld [vmem:[#allocation4 + $0x2b0] sm:$0xff]
    %v867 = vld [vmem:[#allocation4 + $0x2b8] sm:$0xff]
    %v868 = vld [vmem:[#allocation4 + $0x2c0] sm:$0xff]
    %v869 = vld [vmem:[#allocation4 + $0x2c8] sm:$0xff]
    %v870 = vld [vmem:[#allocation4 + $0x2d0] sm:$0xff]
    %v871 = vld [vmem:[#allocation4 + $0x2d8] sm:$0xff]
    %v872 = vld [vmem:[#allocation4 + $0x2e0] sm:$0xff]
    %v873 = vld [vmem:[#allocation4 + $0x2e8] sm:$0xff]
    %v874 = vld [vmem:[#allocation4 + $0x2f0] sm:$0xff]
    %v875 = vld [vmem:[#allocation4 + $0x2f8] sm:$0xff]
    %v876 = vld [vmem:[#allocation4 + $0x300] sm:$0xff]
    %v877 = vld [vmem:[#allocation4 + $0x308] sm:$0xff]
    %v878 = vld [vmem:[#allocation4 + $0x310] sm:$0xff]
    %v879 = vld [vmem:[#allocation4 + $0x318] sm:$0xff]
    %v880 = vld [vmem:[#allocation4 + $0x320] sm:$0xff]
    %v881 = vld [vmem:[#allocation4 + $0x328] sm:$0xff]
    %v882 = vld [vmem:[#allocation4 + $0x330] sm:$0xff]
    %v883 = vld [vmem:[#allocation4 + $0x338] sm:$0xff]
    %v884 = vld [vmem:[#allocation4 + $0x340] sm:$0xff]
    %v885 = vld [vmem:[#allocation4 + $0x348] sm:$0xff]
    %v886 = vld [vmem:[#allocation4 + $0x350] sm:$0xff]
    %v887 = vld [vmem:[#allocation4 + $0x358] sm:$0xff]
    %v888 = vld [vmem:[#allocation4 + $0x360] sm:$0xff]
    %v889 = vld [vmem:[#allocation4 + $0x368] sm:$0xff]
    %v890 = vld [vmem:[#allocation4 + $0x370] sm:$0xff]
    %v891 = vld [vmem:[#allocation4 + $0x378] sm:$0xff]
    %v892 = vld [vmem:[#allocation4 + $0x380] sm:$0xff]
    %v893 = vld [vmem:[#allocation4 + $0x388] sm:$0xff]
    %v894 = vld [vmem:[#allocation4 + $0x390] sm:$0xff]
    %v895 = vld [vmem:[#allocation4 + $0x398] sm:$0xff]
    %v896 = vld [vmem:[#allocation4 + $0x3a0] sm:$0xff]
    %v897 = vld [vmem:[#allocation4 + $0x3a8] sm:$0xff]
    %v898 = vld [vmem:[#allocation4 + $0x3b0] sm:$0xff]
    %v899 = vld [vmem:[#allocation4 + $0x3b8] sm:$0xff]
    %v900 = vld [vmem:[#allocation4 + $0x3c0] sm:$0xff]
    %v901 = vld [vmem:[#allocation4 + $0x3c8] sm:$0xff]
    %v902 = vld [vmem:[#allocation4 + $0x3d0] sm:$0xff]
    %v903 = vld [vmem:[#allocation4 + $0x3d8] sm:$0xff]
    %v904 = vld [vmem:[#allocation4 + $0x3e0] sm:$0xff]
    %v905 = vld [vmem:[#allocation4 + $0x3e8] sm:$0xff]
    %v906 = vld [vmem:[#allocation4 + $0x3f0] sm:$0xff]
    %v907 = vld [vmem:[#allocation4 + $0x3f8] sm:$0xff]
    %v908 = vld [vmem:[%s9] ss:$4 sm:$0x3]
    %v910 = vperm.slane %v908, 0
    %v911 = vperm.slane %v908, 1
    %914 = vmatpush.msra.mxu0 %v810
    %915 = vmatpush.msra.mxu0 %v808
    %916 = vmatpush.msra.mxu0 %v806
    %917 = vmatpush.msra.mxu0 %v804
    %918 = vmatpush.msra.mxu0 %v802
    %919 = vmatpush.msra.mxu0 %v800
    %920 = vmatpush.msra.mxu0 %v798
    %921 = vmatpush.msra.mxu0 %v796
    %922 = vmatpush.msra.mxu0 %v794
    %923 = vmatpush.msra.mxu0 %v792
    %924 = vmatpush.msra.mxu0 %v790
    %925 = vmatpush.msra.mxu0 %v788
    %926 = vmatpush.msra.mxu0 %v786
    %927 = vmatpush.msra.mxu0 %v784
    %928 = vmatpush.msra.mxu0 %v782
    %929 = vmatpush.msra.mxu0 %v780
    %930 = vmatmul.f32.gmra.mxu0 %v776
    %v931 = vpop.f32.mrf.mxu0
    %v932 = vadd.f32 %v910, %v931
    %933 = vdwg.mxu0
    %934 = vmatpush.msra.mxu0 %v842
    %935 = vmatpush.msra.mxu0 %v840
    %936 = vmatpush.msra.mxu0 %v838
    %937 = vmatpush.msra.mxu0 %v836
    %938 = vmatpush.msra.mxu0 %v834
    %939 = vmatpush.msra.mxu0 %v832
    %940 = vmatpush.msra.mxu0 %v830
    %941 = vmatpush.msra.mxu0 %v828
    %942 = vmatpush.msra.mxu0 %v826
    %943 = vmatpush.msra.mxu0 %v824
    %944 = vmatpush.msra.mxu0 %v822
    %945 = vmatpush.msra.mxu0 %v820
    %946 = vmatpush.msra.mxu0 %v818
    %947 = vmatpush.msra.mxu0 %v816
    %948 = vmatpush.msra.mxu0 %v814
    %949 = vmatpush.msra.mxu0 %v812
    %950 = vmatmul.f32.gmra.mxu0 %v777
    %v951 = vpop.f32.mrf.mxu0
    %v952 = vadd.f32 %v932, %v951
    %953 = vdwg.mxu0
    %954 = vmatpush.msra.mxu0 %v874
    %955 = vmatpush.msra.mxu0 %v872
    %956 = vmatpush.msra.mxu0 %v870
    %957 = vmatpush.msra.mxu0 %v868
    %958 = vmatpush.msra.mxu0 %v866
    %959 = vmatpush.msra.mxu0 %v864
    %960 = vmatpush.msra.mxu0 %v862
    %961 = vmatpush.msra.mxu0 %v860
    %962 = vmatpush.msra.mxu0 %v858
    %963 = vmatpush.msra.mxu0 %v856
    %964 = vmatpush.msra.mxu0 %v854
    %965 = vmatpush.msra.mxu0 %v852
    %966 = vmatpush.msra.mxu0 %v850
    %967 = vmatpush.msra.mxu0 %v848
    %968 = vmatpush.msra.mxu0 %v846
    %969 = vmatpush.msra.mxu0 %v844
    %970 = vmatmul.f32.gmra.mxu0 %v778
    %v971 = vpop.f32.mrf.mxu0
    %v972 = vadd.f32 %v952, %v971
    %973 = vdwg.mxu0
    %974 = vmatpush.msra.mxu0 %v906
    %975 = vmatpush.msra.mxu0 %v904
    %976 = vmatpush.msra.mxu0 %v902
    %977 = vmatpush.msra.mxu0 %v900
    %978 = vmatpush.msra.mxu0 %v898
    %979 = vmatpush.msra.mxu0 %v896
    %980 = vmatpush.msra.mxu0 %v894
    %981 = vmatpush.msra.mxu0 %v892
    %982 = vmatpush.msra.mxu0 %v890
    %983 = vmatpush.msra.mxu0 %v888
    %984 = vmatpush.msra.mxu0 %v886
    %985 = vmatpush.msra.mxu0 %v884
    %986 = vmatpush.msra.mxu0 %v882
    %987 = vmatpush.msra.mxu0 %v880
    %988 = vmatpush.msra.mxu0 %v878
    %989 = vmatpush.msra.mxu0 %v876
    %990 = vmatmul.f32.gmra.mxu0 %v779
    %v991 = vpop.f32.mrf.mxu0
    %v992 = vadd.f32 %v972, %v991
    %993 = vdwg.mxu0
    %994 = vmatpush.msra.mxu0 %v811
    %995 = vmatpush.msra.mxu0 %v809
    %996 = vmatpush.msra.mxu0 %v807
    %997 = vmatpush.msra.mxu0 %v805
    %998 = vmatpush.msra.mxu0 %v803
    %999 = vmatpush.msra.mxu0 %v801
    %1000 = vmatpush.msra.mxu0 %v799
    %1001 = vmatpush.msra.mxu0 %v797
    %1002 = vmatpush.msra.mxu0 %v795
    %1003 = vmatpush.msra.mxu0 %v793
    %1004 = vmatpush.msra.mxu0 %v791
    %1005 = vmatpush.msra.mxu0 %v789
    %1006 = vmatpush.msra.mxu0 %v787
    %1007 = vmatpush.msra.mxu0 %v785
    %1008 = vmatpush.msra.mxu0 %v783
    %1009 = vmatpush.msra.mxu0 %v781
    %1010 = vmatmul.f32.gmra.mxu0 %v776
    %v1011 = vpop.f32.mrf.mxu0
    %v1012 = vadd.f32 %v911, %v1011
    %1013 = vdwg.mxu0
    %1014 = vmatpush.msra.mxu0 %v843
    %1015 = vmatpush.msra.mxu0 %v841
    %1016 = vmatpush.msra.mxu0 %v839
    %1017 = vmatpush.msra.mxu0 %v837
    %1018 = vmatpush.msra.mxu0 %v835
    %1019 = vmatpush.msra.mxu0 %v833
    %1020 = vmatpush.msra.mxu0 %v831
    %1021 = vmatpush.msra.mxu0 %v829
    %1022 = vmatpush.msra.mxu0 %v827
    %1023 = vmatpush.msra.mxu0 %v825
    %1024 = vmatpush.msra.mxu0 %v823
    %1025 = vmatpush.msra.mxu0 %v821
    %1026 = vmatpush.msra.mxu0 %v819
    %1027 = vmatpush.msra.mxu0 %v817
    %1028 = vmatpush.msra.mxu0 %v815
    %1029 = vmatpush.msra.mxu0 %v813
    %1030 = vmatmul.f32.gmra.mxu0 %v777
    %v1031 = vpop.f32.mrf.mxu0
    %v1032 = vadd.f32 %v1012, %v1031
    %1033 = vdwg.mxu0
    %1034 = vmatpush.msra.mxu0 %v875
    %1035 = vmatpush.msra.mxu0 %v873
    %1036 = vmatpush.msra.mxu0 %v871
    %1037 = vmatpush.msra.mxu0 %v869
    %1038 = vmatpush.msra.mxu0 %v867
    %1039 = vmatpush.msra.mxu0 %v865
    %1040 = vmatpush.msra.mxu0 %v863
    %1041 = vmatpush.msra.mxu0 %v861
    %1042 = vmatpush.msra.mxu0 %v859
    %1043 = vmatpush.msra.mxu0 %v857
    %1044 = vmatpush.msra.mxu0 %v855
    %1045 = vmatpush.msra.mxu0 %v853
    %1046 = vmatpush.msra.mxu0 %v851
    %1047 = vmatpush.msra.mxu0 %v849
    %1048 = vmatpush.msra.mxu0 %v847
    %1049 = vmatpush.msra.mxu0 %v845
    %1050 = vmatmul.f32.gmra.mxu0 %v778
    %v1051 = vpop.f32.mrf.mxu0
    %v1052 = vadd.f32 %v1032, %v1051
    %1053 = vdwg.mxu0
    %1054 = vmatpush.msra.mxu0 %v907
    %1055 = vmatpush.msra.mxu0 %v905
    %1056 = vmatpush.msra.mxu0 %v903
    %1057 = vmatpush.msra.mxu0 %v901
    %1058 = vmatpush.msra.mxu0 %v899
    %1059 = vmatpush.msra.mxu0 %v897
    %1060 = vmatpush.msra.mxu0 %v895
    %1061 = vmatpush.msra.mxu0 %v893
    %1062 = vmatpush.msra.mxu0 %v891
    %1063 = vmatpush.msra.mxu0 %v889
    %1064 = vmatpush.msra.mxu0 %v887
    %1065 = vmatpush.msra.mxu0 %v885
    %1066 = vmatpush.msra.mxu0 %v883
    %1067 = vmatpush.msra.mxu0 %v881
    %1068 = vmatpush.msra.mxu0 %v879
    %1069 = vmatpush.msra.mxu0 %v877
    %1070 = vmatmul.f32.gmra.mxu0 %v779
    %v1071 = vpop.f32.mrf.mxu0
    %v1072 = vadd.f32 %v1052, %v1071
    %1073 = vdwg.mxu0
    %v1074 = vadd.f32 %v992, %v1072
    %1075 = vadd.xlane.f32.xlu0 %v1074
    %v1076 = vpop.xlane.xlu0 %1075
    %v1077 = vrcp.pop 256.0
    %v1078 = vmul.f32 256.0, %v1077
    %v1079 = vsub.f32 1.0, %v1078
    %v1080 = vmul.f32 %v1077, %v1079
    %v1081 = vadd.f32 %v1077, %v1080
    %vm1082 = vweird.f32 %v1077
    %v1083 = vsel %vm1082, %v1077, %v1081
    %v1084 = vmul.f32 %v1076, %v1083
    %v1085 = vmul.f32 %v992, %v992
    %v1086 = vmul.f32 %v1072, %v1072
    %v1087 = vadd.f32 %v1085, %v1086
    %1088 = vadd.xlane.f32.xlu0 %v1087
    %v1089 = vpop.xlane.xlu0 %1088
    %v1090 = vmul.f32 %v1089, %v1083
    %v1091 = vmul.f32 %v1084, %v1084
    %v1092 = vsub.f32 %v1090, %v1091
    %v1093 = vmax.f32 %v1092, 0.0
    %v1094 = vsub.f32 %v992, %v1084
    %v1095 = vsub.f32 %v1072, %v1084
    %v1096 = vadd.f32 %v1093, 1e-05
    %v1097 = vrsqrt.pop %v1096
    %v1098 = vmul.f32 %v1097, %v1096
    %v1099 = vmul.f32 %v1098, %v1097
    %v1100 = vmul.f32 0.5, %v1099
    %v1101 = vsub.f32 1.5, %v1100
    %v1102 = vmul.f32 %v1097, %v1101
    %vm1103 = vweird.f32 %v1096
    %vm1104 = vweird.f32 %v1097
    %vm1105 = vmor %vm1103, %vm1104
    %v1106 = vsel %vm1105, %v1097, %v1102
    %v1107 = vmul.f32 %v1094, %v1106
    %v1108 = vmul.f32 %v1095, %v1106
    %s1109 = scalar_lea.vmem %s9, 1
    %v1110 = vld [vmem:[%s1109] ss:$4 sm:$0x3]
    %v1112 = vperm.slane %v1110, 0
    %v1113 = vperm.slane %v1110, 1
    %v1116 = vmul.f32 %v1107, %v1112
    %v1117 = vmul.f32 %v1108, %v1113
    %s1118 = scalar_lea.vmem %s9, 2
    %v1119 = vld [vmem:[%s1118] ss:$4 sm:$0x3]
    %v1121 = vperm.slane %v1119, 0
    %v1122 = vperm.slane %v1119, 1
    %v1125 = vadd.f32 %v1116, %v1121
    %v1126 = vadd.f32 %v1117, %v1122
    %v1127 = vmax.f32 %v1125, 0.0
    %v1128 = vmax.f32 %v1126, 0.0
    %v1129 = vld [vmem:[%s11] sm:$0xff]
    %v1130 = vld [vmem:[%s11 + $0x8] sm:$0xff]
    %v1131 = vld [vmem:[%s11 + $0x10] sm:$0xff]
    %v1132 = vld [vmem:[%s11 + $0x18] sm:$0xff]
    %v1133 = vld [vmem:[%s11 + $0x20] sm:$0xff]
    %v1134 = vld [vmem:[%s11 + $0x28] sm:$0xff]
    %v1135 = vld [vmem:[%s11 + $0x30] sm:$0xff]
    %v1136 = vld [vmem:[%s11 + $0x38] sm:$0xff]
    %v1137 = vld [vmem:[%s11 + $0x40] sm:$0xff]
    %v1138 = vld [vmem:[%s11 + $0x48] sm:$0xff]
    %v1139 = vld [vmem:[%s11 + $0x50] sm:$0xff]
    %v1140 = vld [vmem:[%s11 + $0x58] sm:$0xff]
    %v1141 = vld [vmem:[%s11 + $0x60] sm:$0xff]
    %v1142 = vld [vmem:[%s11 + $0x68] sm:$0xff]
    %v1143 = vld [vmem:[%s11 + $0x70] sm:$0xff]
    %v1144 = vld [vmem:[%s11 + $0x78] sm:$0xff]
    %v1145 = vld [vmem:[%s11 + $0x80] sm:$0xff]
    %v1146 = vld [vmem:[%s11 + $0x88] sm:$0xff]
    %v1147 = vld [vmem:[%s11 + $0x90] sm:$0xff]
    %v1148 = vld [vmem:[%s11 + $0x98] sm:$0xff]
    %v1149 = vld [vmem:[%s11 + $0xa0] sm:$0xff]
    %v1150 = vld [vmem:[%s11 + $0xa8] sm:$0xff]
    %v1151 = vld [vmem:[%s11 + $0xb0] sm:$0xff]
    %v1152 = vld [vmem:[%s11 + $0xb8] sm:$0xff]
    %v1153 = vld [vmem:[%s11 + $0xc0] sm:$0xff]
    %v1154 = vld [vmem:[%s11 + $0xc8] sm:$0xff]
    %v1155 = vld [vmem:[%s11 + $0xd0] sm:$0xff]
    %v1156 = vld [vmem:[%s11 + $0xd8] sm:$0xff]
    %v1157 = vld [vmem:[%s11 + $0xe0] sm:$0xff]
    %v1158 = vld [vmem:[%s11 + $0xe8] sm:$0xff]
    %v1159 = vld [vmem:[%s11 + $0xf0] sm:$0xff]
    %v1160 = vld [vmem:[%s11 + $0xf8] sm:$0xff]
    %v1161 = vld [vmem:[#allocation6] sm:$0x1]
    %v1162 = vperm.slane %v1161, 0
    %1163 = vmatpush.msra.mxu0 %v1144
    %1164 = vmatpush.msra.mxu0 %v1143
    %1165 = vmatpush.msra.mxu0 %v1142
    %1166 = vmatpush.msra.mxu0 %v1141
    %1167 = vmatpush.msra.mxu0 %v1140
    %1168 = vmatpush.msra.mxu0 %v1139
    %1169 = vmatpush.msra.mxu0 %v1138
    %1170 = vmatpush.msra.mxu0 %v1137
    %1171 = vmatpush.msra.mxu0 %v1136
    %1172 = vmatpush.msra.mxu0 %v1135
    %1173 = vmatpush.msra.mxu0 %v1134
    %1174 = vmatpush.msra.mxu0 %v1133
    %1175 = vmatpush.msra.mxu0 %v1132
    %1176 = vmatpush.msra.mxu0 %v1131
    %1177 = vmatpush.msra.mxu0 %v1130
    %1178 = vmatpush.msra.mxu0 %v1129
    %1179 = vmatmul.f32.gmra.mxu0 %v1127
    %v1180 = vpop.f32.mrf.mxu0
    %v1181 = vadd.f32 %v1162, %v1180
    %1182 = vdwg.mxu0
    %1183 = vmatpush.msra.mxu0 %v1160
    %1184 = vmatpush.msra.mxu0 %v1159
    %1185 = vmatpush.msra.mxu0 %v1158
    %1186 = vmatpush.msra.mxu0 %v1157
    %1187 = vmatpush.msra.mxu0 %v1156
    %1188 = vmatpush.msra.mxu0 %v1155
    %1189 = vmatpush.msra.mxu0 %v1154
    %1190 = vmatpush.msra.mxu0 %v1153
    %1191 = vmatpush.msra.mxu0 %v1152
    %1192 = vmatpush.msra.mxu0 %v1151
    %1193 = vmatpush.msra.mxu0 %v1150
    %1194 = vmatpush.msra.mxu0 %v1149
    %1195 = vmatpush.msra.mxu0 %v1148
    %1196 = vmatpush.msra.mxu0 %v1147
    %1197 = vmatpush.msra.mxu0 %v1146
    %1198 = vmatpush.msra.mxu0 %v1145
    %1199 = vmatmul.f32.gmra.mxu0 %v1128
    %v1200 = vpop.f32.mrf.mxu0
    %v1201 = vadd.f32 %v1181, %v1200
    %1202 = vdwg.mxu0
    %1203 = vadd.xlane.f32.xlu0 %v1201
    %v1204 = vpop.xlane.xlu0 %1203
    %v1205 = vrcp.pop 128.0
    %v1206 = vmul.f32 128.0, %v1205
    %v1207 = vsub.f32 1.0, %v1206
    %v1208 = vmul.f32 %v1205, %v1207
    %v1209 = vadd.f32 %v1205, %v1208
    %vm1210 = vweird.f32 %v1205
    %v1211 = vsel %vm1210, %v1205, %v1209
    %v1212 = vmul.f32 %v1204, %v1211
    %v1213 = vmul.f32 %v1201, %v1201
    %1214 = vadd.xlane.f32.xlu0 %v1213
    %v1215 = vpop.xlane.xlu0 %1214
    %v1216 = vmul.f32 %v1215, %v1211
    %v1217 = vmul.f32 %v1212, %v1212
    %v1218 = vsub.f32 %v1216, %v1217
    %v1219 = vmax.f32 %v1218, 0.0
    %v1220 = vsub.f32 %v1201, %v1212
    %v1221 = vadd.f32 %v1219, 1e-05
    %v1222 = vrsqrt.pop %v1221
    %v1223 = vmul.f32 %v1222, %v1221
    %v1224 = vmul.f32 %v1223, %v1222
    %v1225 = vmul.f32 0.5, %v1224
    %v1226 = vsub.f32 1.5, %v1225
    %v1227 = vmul.f32 %v1222, %v1226
    %vm1228 = vweird.f32 %v1221
    %vm1229 = vweird.f32 %v1222
    %vm1230 = vmor %vm1228, %vm1229
    %v1231 = vsel %vm1230, %v1222, %v1227
    %v1232 = vmul.f32 %v1220, %v1231
    %v1233 = vld [vmem:[#allocation6 + $0x1] sm:$0x1]
    %v1234 = vperm.slane %v1233, 0
    %v1235 = vmul.f32 %v1232, %v1234
    %v1236 = vld [vmem:[#allocation6 + $0x2] sm:$0x1]
    %v1237 = vperm.slane %v1236, 0
    %v1238 = vadd.f32 %v1235, %v1237
    %v1239 = vmax.f32 %v1238, 0.0
    %v1240 = vld [vmem:[%s15] sm:$0xff]
    %v1241 = vld [vmem:[%s15 + $0x8] sm:$0xff]
    %v1242 = vld [vmem:[%s15 + $0x10] sm:$0xff]
    %v1243 = vld [vmem:[%s15 + $0x18] sm:$0xff]
    %v1244 = vld [vmem:[%s15 + $0x20] sm:$0xff]
    %v1245 = vld [vmem:[%s15 + $0x28] sm:$0xff]
    %v1246 = vld [vmem:[%s15 + $0x30] sm:$0xff]
    %v1247 = vld [vmem:[%s15 + $0x38] sm:$0xff]
    %v1248 = vld [vmem:[%s15 + $0x40] sm:$0xff]
    %v1249 = vld [vmem:[%s15 + $0x48] sm:$0xff]
    %v1250 = vld [vmem:[%s15 + $0x50] sm:$0xff]
    %v1251 = vld [vmem:[%s15 + $0x58] sm:$0xff]
    %v1252 = vld [vmem:[%s15 + $0x60] sm:$0xff]
    %v1253 = vld [vmem:[%s15 + $0x68] sm:$0xff]
    %v1254 = vld [vmem:[%s15 + $0x70] sm:$0xff]
    %v1255 = vld [vmem:[%s15 + $0x78] sm:$0xff]
    %v1256 = vld [vmem:[#allocation7] sm:$0x1]
    %v1257 = vperm.slane %v1256, 0
    %1258 = vmatpush.msra.mxu0 %v1255
    %1259 = vmatpush.msra.mxu0 %v1254
    %1260 = vmatpush.msra.mxu0 %v1253
    %1261 = vmatpush.msra.mxu0 %v1252
    %1262 = vmatpush.msra.mxu0 %v1251
    %1263 = vmatpush.msra.mxu0 %v1250
    %1264 = vmatpush.msra.mxu0 %v1249
    %1265 = vmatpush.msra.mxu0 %v1248
    %1266 = vmatpush.msra.mxu0 %v1247
    %1267 = vmatpush.msra.mxu0 %v1246
    %1268 = vmatpush.msra.mxu0 %v1245
    %1269 = vmatpush.msra.mxu0 %v1244
    %1270 = vmatpush.msra.mxu0 %v1243
    %1271 = vmatpush.msra.mxu0 %v1242
    %1272 = vmatpush.msra.mxu0 %v1241
    %1273 = vmatpush.msra.mxu0 %v1240
    %1274 = vmatmul.f32.gmra.mxu0 %v1239
    %v1275 = vpop.f32.mrf.mxu0
    %v1276 = vadd.f32 %v1257, %v1275
    %1277 = vdwg.mxu0
    %vm1278 = vcmask 523264
    %v1279 = vsel %vm1278, %v1276, 0.0
    %1280 = vadd.xlane.f32.xlu0 %v1279
    %v1281 = vpop.xlane.xlu0 %1280
    %v1282 = vrcp.pop 64.0
    %v1283 = vmul.f32 64.0, %v1282
    %v1284 = vsub.f32 1.0, %v1283
    %v1285 = vmul.f32 %v1282, %v1284
    %v1286 = vadd.f32 %v1282, %v1285
    %vm1287 = vweird.f32 %v1282
    %v1288 = vsel %vm1287, %v1282, %v1286
    %v1289 = vmul.f32 %v1281, %v1288
    %v1290 = vmul.f32 %v1276, %v1276
    %v1291 = vsel %vm1278, %v1290, 0.0
    %1292 = vadd.xlane.f32.xlu0 %v1291
    %v1293 = vpop.xlane.xlu0 %1292
    %v1294 = vmul.f32 %v1293, %v1288
    %v1295 = vmul.f32 %v1289, %v1289
    %v1296 = vsub.f32 %v1294, %v1295
    %v1297 = vmax.f32 %v1296, 0.0
    %v1298 = vsub.f32 %v1276, %v1289
    %v1299 = vadd.f32 %v1297, 1e-05
    %v1300 = vrsqrt.pop %v1299
    %v1301 = vmul.f32 %v1300, %v1299
    %v1302 = vmul.f32 %v1301, %v1300
    %v1303 = vmul.f32 0.5, %v1302
    %v1304 = vsub.f32 1.5, %v1303
    %v1305 = vmul.f32 %v1300, %v1304
    %vm1306 = vweird.f32 %v1299
    %vm1307 = vweird.f32 %v1300
    %vm1308 = vmor %vm1306, %vm1307
    %v1309 = vsel %vm1308, %v1300, %v1305
    %v1310 = vmul.f32 %v1298, %v1309
    %v1311 = vld [vmem:[#allocation7 + $0x1] sm:$0x1]
    %v1312 = vperm.slane %v1311, 0
    %v1313 = vmul.f32 %v1310, %v1312
    %v1314 = vld [vmem:[#allocation7 + $0x2] sm:$0x1]
    %v1315 = vperm.slane %v1314, 0
    %v1316 = vadd.f32 %v1313, %v1315
    %v1317 = vmax.f32 %v1316, 0.0
    %v1318 = vld [vmem:[#allocation9] sm:$0xff]
    %v1319 = vld [vmem:[#allocation9 + $0x8] sm:$0xff]
    %v1320 = vld [vmem:[#allocation9 + $0x10] sm:$0xff]
    %v1321 = vld [vmem:[#allocation9 + $0x18] sm:$0xff]
    %v1322 = vld [vmem:[#allocation9 + $0x20] sm:$0xff]
    %v1323 = vld [vmem:[#allocation9 + $0x28] sm:$0xff]
    %v1324 = vld [vmem:[#allocation9 + $0x30] sm:$0xff]
    %v1325 = vld [vmem:[#allocation9 + $0x38] sm:$0xff]
    %v1326 = vld [vmem:[#allocation10] sm:$0x1]
    %v1327 = vperm.slane %v1326, 0
    %v1329 = vsel %vm1278, %v1317, 0
    %1331 = vmatpush.msra.mxu0 0.0
    %1332 = vmatpush.msra.mxu0 0.0
    %1333 = vmatpush.msra.mxu0 0.0
    %1334 = vmatpush.msra.mxu0 0.0
    %1335 = vmatpush.msra.mxu0 0.0
    %1336 = vmatpush.msra.mxu0 0.0
    %1337 = vmatpush.msra.mxu0 0.0
    %1338 = vmatpush.msra.mxu0 0.0
    %1339 = vmatpush.msra.mxu0 %v1325
    %1340 = vmatpush.msra.mxu0 %v1324
    %1341 = vmatpush.msra.mxu0 %v1323
    %1342 = vmatpush.msra.mxu0 %v1322
    %1343 = vmatpush.msra.mxu0 %v1321
    %1344 = vmatpush.msra.mxu0 %v1320
    %1345 = vmatpush.msra.mxu0 %v1319
    %1346 = vmatpush.msra.mxu0 %v1318
    %1347 = vmatmul.f32.gmra.mxu0 %v1329
    %v1348 = vpop.f32.mrf.mxu0
    %v1349 = vadd.f32 %v1327, %v1348
    %1350 = vdwg.mxu0
    %v1351 = vsel %vm1278, %v1349, 0.0
    %1352 = vadd.xlane.f32.xlu0 %v1351
    %v1353 = vpop.xlane.xlu0 %1352
    %v1354 = vmul.f32 %v1353, %v1288
    %v1355 = vmul.f32 %v1349, %v1349
    %v1356 = vsel %vm1278, %v1355, 0.0
    %1357 = vadd.xlane.f32.xlu0 %v1356
    %v1358 = vpop.xlane.xlu0 %1357
    %v1359 = vmul.f32 %v1358, %v1288
    %v1360 = vmul.f32 %v1354, %v1354
    %v1361 = vsub.f32 %v1359, %v1360
    %v1362 = vmax.f32 %v1361, 0.0
    %v1363 = vsub.f32 %v1349, %v1354
    %v1364 = vadd.f32 %v1362, 1e-05
    %v1365 = vrsqrt.pop %v1364
    %v1366 = vmul.f32 %v1365, %v1364
    %v1367 = vmul.f32 %v1366, %v1365
    %v1368 = vmul.f32 0.5, %v1367
    %v1369 = vsub.f32 1.5, %v1368
    %v1370 = vmul.f32 %v1365, %v1369
    %vm1371 = vweird.f32 %v1364
    %vm1372 = vweird.f32 %v1365
    %vm1373 = vmor %vm1371, %vm1372
    %v1374 = vsel %vm1373, %v1365, %v1370
    %v1375 = vmul.f32 %v1363, %v1374
    %v1376 = vld [vmem:[#allocation10 + $0x1] sm:$0x1]
    %v1377 = vperm.slane %v1376, 0
    %v1378 = vmul.f32 %v1375, %v1377
    %v1379 = vld [vmem:[#allocation10 + $0x2] sm:$0x1]
    %v1380 = vperm.slane %v1379, 0
    %v1381 = vadd.f32 %v1378, %v1380
    %v1382 = vmax.f32 %v1381, 0.0
    %v1383 = vld [vmem:[%s23] sm:$0xff]
    %v1384 = vld [vmem:[%s23 + $0x8] sm:$0xff]
    %v1385 = vld [vmem:[%s23 + $0x10] sm:$0xff]
    %v1386 = vld [vmem:[%s23 + $0x18] sm:$0xff]
    %v1387 = vld [vmem:[%s23 + $0x20] sm:$0xff]
    %v1388 = vld [vmem:[%s23 + $0x28] sm:$0xff]
    %v1389 = vld [vmem:[%s23 + $0x30] sm:$0xff]
    %v1390 = vld [vmem:[%s23 + $0x38] sm:$0xff]
    %v1391 = vld [vmem:[#allocation12] sm:$0x1]
    %v1392 = vperm.slane %v1391, 0
    %v1394 = vsel %vm1278, %v1382, 0
    %1396 = vmatpush.msra.mxu0 0.0
    %1397 = vmatpush.msra.mxu0 0.0
    %1398 = vmatpush.msra.mxu0 0.0
    %1399 = vmatpush.msra.mxu0 0.0
    %1400 = vmatpush.msra.mxu0 0.0
    %1401 = vmatpush.msra.mxu0 0.0
    %1402 = vmatpush.msra.mxu0 0.0
    %1403 = vmatpush.msra.mxu0 0.0
    %1404 = vmatpush.msra.mxu0 %v1390
    %1405 = vmatpush.msra.mxu0 %v1389
    %1406 = vmatpush.msra.mxu0 %v1388
    %1407 = vmatpush.msra.mxu0 %v1387
    %1408 = vmatpush.msra.mxu0 %v1386
    %1409 = vmatpush.msra.mxu0 %v1385
    %1410 = vmatpush.msra.mxu0 %v1384
    %1411 = vmatpush.msra.mxu0 %v1383
    %1412 = vmatmul.f32.gmra.mxu0 %v1394
    %v1413 = vpop.f32.mrf.mxu0
    %v1414 = vadd.f32 %v1392, %v1413
    %1415 = vdwg.mxu0
    %vm1416 = vcmask 261120
    %v1417 = vsel %vm1416, %v1414, 0.0
    %1418 = vadd.xlane.f32.xlu0 %v1417
    %v1419 = vpop.xlane.xlu0 %1418
    %v1420 = vrcp.pop 32.0
    %v1421 = vmul.f32 32.0, %v1420
    %v1422 = vsub.f32 1.0, %v1421
    %v1423 = vmul.f32 %v1420, %v1422
    %v1424 = vadd.f32 %v1420, %v1423
    %vm1425 = vweird.f32 %v1420
    %v1426 = vsel %vm1425, %v1420, %v1424
    %v1427 = vmul.f32 %v1419, %v1426
    %v1428 = vmul.f32 %v1414, %v1414
    %v1429 = vsel %vm1416, %v1428, 0.0
    %1430 = vadd.xlane.f32.xlu0 %v1429
    %v1431 = vpop.xlane.xlu0 %1430
    %v1432 = vmul.f32 %v1431, %v1426
    %v1433 = vmul.f32 %v1427, %v1427
    %v1434 = vsub.f32 %v1432, %v1433
    %v1435 = vmax.f32 %v1434, 0.0
    %v1436 = vsub.f32 %v1414, %v1427
    %v1437 = vadd.f32 %v1435, 1e-05
    %v1438 = vrsqrt.pop %v1437
    %v1439 = vmul.f32 %v1438, %v1437
    %v1440 = vmul.f32 %v1439, %v1438
    %v1441 = vmul.f32 0.5, %v1440
    %v1442 = vsub.f32 1.5, %v1441
    %v1443 = vmul.f32 %v1438, %v1442
    %vm1444 = vweird.f32 %v1437
    %vm1445 = vweird.f32 %v1438
    %vm1446 = vmor %vm1444, %vm1445
    %v1447 = vsel %vm1446, %v1438, %v1443
    %v1448 = vmul.f32 %v1436, %v1447
    %v1449 = vld [vmem:[#allocation12 + $0x1] sm:$0x1]
    %v1450 = vperm.slane %v1449, 0
    %v1451 = vmul.f32 %v1448, %v1450
    %v1452 = vld [vmem:[#allocation12 + $0x2] sm:$0x1]
    %v1453 = vperm.slane %v1452, 0
    %v1454 = vadd.f32 %v1451, %v1453
    %v1455 = vmax.f32 %v1454, 0.0
    %v1456 = vld [vmem:[%s27] sm:$0xff]
    %v1457 = vld [vmem:[%s27 + $0x8] sm:$0xff]
    %v1458 = vld [vmem:[%s27 + $0x10] sm:$0xff]
    %v1459 = vld [vmem:[%s27 + $0x18] sm:$0xff]
    %v1460 = vld [vmem:[#allocation13] sm:$0x1]
    %v1461 = vperm.slane %v1460, 0
    %v1463 = vsel %vm1416, %v1455, 0
    %1465 = vmatpush.msra.mxu0 0.0
    %1466 = vmatpush.msra.mxu0 0.0
    %1467 = vmatpush.msra.mxu0 0.0
    %1468 = vmatpush.msra.mxu0 0.0
    %1469 = vmatpush.msra.mxu0 0.0
    %1470 = vmatpush.msra.mxu0 0.0
    %1471 = vmatpush.msra.mxu0 0.0
    %1472 = vmatpush.msra.mxu0 0.0
    %1473 = vmatpush.msra.mxu0 0.0
    %1474 = vmatpush.msra.mxu0 0.0
    %1475 = vmatpush.msra.mxu0 0.0
    %1476 = vmatpush.msra.mxu0 0.0
    %1477 = vmatpush.msra.mxu0 %v1459
    %1478 = vmatpush.msra.mxu0 %v1458
    %1479 = vmatpush.msra.mxu0 %v1457
    %1480 = vmatpush.msra.mxu0 %v1456
    %1481 = vmatmul.f32.gmra.mxu0 %v1463
    %v1482 = vpop.f32.mrf.mxu0
    %v1483 = vadd.f32 %v1461, %v1482
    %1484 = vdwg.mxu0
    %vm1485 = vcmask 130048
    %v1486 = vsel %vm1485, %v1483, 0.0
    %1487 = vadd.xlane.f32.xlu0 %v1486
    %v1488 = vpop.xlane.xlu0 %1487
    %v1489 = vrcp.pop 16.0
    %v1490 = vmul.f32 16.0, %v1489
    %v1491 = vsub.f32 1.0, %v1490
    %v1492 = vmul.f32 %v1489, %v1491
    %v1493 = vadd.f32 %v1489, %v1492
    %vm1494 = vweird.f32 %v1489
    %v1495 = vsel %vm1494, %v1489, %v1493
    %v1496 = vmul.f32 %v1488, %v1495
    %v1497 = vmul.f32 %v1483, %v1483
    %v1498 = vsel %vm1485, %v1497, 0.0
    %1499 = vadd.xlane.f32.xlu0 %v1498
    %v1500 = vpop.xlane.xlu0 %1499
    %v1501 = vmul.f32 %v1500, %v1495
    %v1502 = vmul.f32 %v1496, %v1496
    %v1503 = vsub.f32 %v1501, %v1502
    %v1504 = vmax.f32 %v1503, 0.0
    %v1505 = vsub.f32 %v1483, %v1496
    %v1506 = vadd.f32 %v1504, 1e-05
    %v1507 = vrsqrt.pop %v1506
    %v1508 = vmul.f32 %v1507, %v1506
    %v1509 = vmul.f32 %v1508, %v1507
    %v1510 = vmul.f32 0.5, %v1509
    %v1511 = vsub.f32 1.5, %v1510
    %v1512 = vmul.f32 %v1507, %v1511
    %vm1513 = vweird.f32 %v1506
    %vm1514 = vweird.f32 %v1507
    %vm1515 = vmor %vm1513, %vm1514
    %v1516 = vsel %vm1515, %v1507, %v1512
    %v1517 = vmul.f32 %v1505, %v1516
    %v1518 = vld [vmem:[#allocation13 + $0x1] sm:$0x1]
    %v1519 = vperm.slane %v1518, 0
    %v1520 = vmul.f32 %v1517, %v1519
    %v1521 = vld [vmem:[#allocation13 + $0x2] sm:$0x1]
    %v1522 = vperm.slane %v1521, 0
    %v1523 = vadd.f32 %v1520, %v1522
    %v1524 = vmax.f32 %v1523, 0.0
    %v1525 = vld [vmem:[%s31] sm:$0xff]
    %v1526 = vld [vmem:[%s31 + $0x8] sm:$0xff]
    %v1527 = vld [vmem:[#allocation15] sm:$0x1]
    %v1528 = vperm.slane %v1527, 0
    %v1530 = vsel %vm1485, %v1524, 0
    %1532 = vmatpush.msra.mxu0 0.0
    %1533 = vmatpush.msra.mxu0 0.0
    %1534 = vmatpush.msra.mxu0 0.0
    %1535 = vmatpush.msra.mxu0 0.0
    %1536 = vmatpush.msra.mxu0 0.0
    %1537 = vmatpush.msra.mxu0 0.0
    %1538 = vmatpush.msra.mxu0 0.0
    %1539 = vmatpush.msra.mxu0 0.0
    %1540 = vmatpush.msra.mxu0 0.0
    %1541 = vmatpush.msra.mxu0 0.0
    %1542 = vmatpush.msra.mxu0 0.0
    %1543 = vmatpush.msra.mxu0 0.0
    %1544 = vmatpush.msra.mxu0 0.0
    %1545 = vmatpush.msra.mxu0 0.0
    %1546 = vmatpush.msra.mxu0 %v1526
    %1547 = vmatpush.msra.mxu0 %v1525
    %1548 = vmatmul.f32.gmra.mxu0 %v1530
    %v1549 = vpop.f32.mrf.mxu0
    %v1550 = vadd.f32 %v1528, %v1549
    %1551 = vdwg.mxu0
    %vm1552 = vcmask 64512
    %v1553 = vsel %vm1552, %v1550, 0.0
    %1554 = vadd.xlane.f32.xlu0 %v1553
    %v1555 = vpop.xlane.xlu0 %1554
    %v1556 = vrcp.pop 8.0
    %v1557 = vmul.f32 8.0, %v1556
    %v1558 = vsub.f32 1.0, %v1557
    %v1559 = vmul.f32 %v1556, %v1558
    %v1560 = vadd.f32 %v1556, %v1559
    %vm1561 = vweird.f32 %v1556
    %v1562 = vsel %vm1561, %v1556, %v1560
    %v1563 = vmul.f32 %v1555, %v1562
    %v1564 = vmul.f32 %v1550, %v1550
    %v1565 = vsel %vm1552, %v1564, 0.0
    %1566 = vadd.xlane.f32.xlu0 %v1565
    %v1567 = vpop.xlane.xlu0 %1566
    %v1568 = vmul.f32 %v1567, %v1562
    %v1569 = vmul.f32 %v1563, %v1563
    %v1570 = vsub.f32 %v1568, %v1569
    %v1571 = vmax.f32 %v1570, 0.0
    %v1572 = vsub.f32 %v1550, %v1563
    %v1573 = vadd.f32 %v1571, 1e-05
    %v1574 = vrsqrt.pop %v1573
    %v1575 = vmul.f32 %v1574, %v1573
    %v1576 = vmul.f32 %v1575, %v1574
    %v1577 = vmul.f32 0.5, %v1576
    %v1578 = vsub.f32 1.5, %v1577
    %v1579 = vmul.f32 %v1574, %v1578
    %vm1580 = vweird.f32 %v1573
    %vm1581 = vweird.f32 %v1574
    %vm1582 = vmor %vm1580, %vm1581
    %v1583 = vsel %vm1582, %v1574, %v1579
    %v1584 = vmul.f32 %v1572, %v1583
    %v1585 = vld [vmem:[#allocation15 + $0x1] sm:$0x1]
    %v1586 = vperm.slane %v1585, 0
    %v1587 = vmul.f32 %v1584, %v1586
    %v1588 = vld [vmem:[#allocation15 + $0x2] sm:$0x1]
    %v1589 = vperm.slane %v1588, 0
    %v1590 = vadd.f32 %v1587, %v1589
    %v1591 = vmax.f32 %v1590, 0.0
    %v1592 = vld [vmem:[#allocation16] sm:$0xff]
    %v1593 = vld [vmem:[#allocation18] sm:$0x1]
    %v1594 = vperm.slane %v1593, 0
    %v1596 = vsel %vm1552, %v1591, 0
    %1598 = vmatpush.msra.mxu0 0.0
    %1599 = vmatpush.msra.mxu0 0.0
    %1600 = vmatpush.msra.mxu0 0.0
    %1601 = vmatpush.msra.mxu0 0.0
    %1602 = vmatpush.msra.mxu0 0.0
    %1603 = vmatpush.msra.mxu0 0.0
    %1604 = vmatpush.msra.mxu0 0.0
    %1605 = vmatpush.msra.mxu0 0.0
    %1606 = vmatpush.msra.mxu0 0.0
    %1607 = vmatpush.msra.mxu0 0.0
    %1608 = vmatpush.msra.mxu0 0.0
    %1609 = vmatpush.msra.mxu0 0.0
    %1610 = vmatpush.msra.mxu0 0.0
    %1611 = vmatpush.msra.mxu0 0.0
    %1612 = vmatpush.msra.mxu0 0.0
    %1613 = vmatpush.msra.mxu0 %v1592
    %1614 = vmatmul.f32.gmra.mxu0 %v1596
    %v1615 = vpop.f32.mrf.mxu0
    %v1616 = vadd.f32 %v1594, %v1615
    %1617 = vdwg.mxu0
    %v1618 = vsel %vm1485, %v1616, 0.0
    %1619 = vadd.xlane.f32.xlu0 %v1618
    %v1620 = vpop.xlane.xlu0 %1619
    %v1621 = vmul.f32 %v1620, %v1495
    %v1622 = vmul.f32 %v1616, %v1616
    %v1623 = vsel %vm1485, %v1622, 0.0
    %1624 = vadd.xlane.f32.xlu0 %v1623
    %v1625 = vpop.xlane.xlu0 %1624
    %v1626 = vmul.f32 %v1625, %v1495
    %v1627 = vmul.f32 %v1621, %v1621
    %v1628 = vsub.f32 %v1626, %v1627
    %v1629 = vmax.f32 %v1628, 0.0
    %v1630 = vsub.f32 %v1616, %v1621
    %v1631 = vadd.f32 %v1629, 1e-05
    %v1632 = vrsqrt.pop %v1631
    %v1633 = vmul.f32 %v1632, %v1631
    %v1634 = vmul.f32 %v1633, %v1632
    %v1635 = vmul.f32 0.5, %v1634
    %v1636 = vsub.f32 1.5, %v1635
    %v1637 = vmul.f32 %v1632, %v1636
    %vm1638 = vweird.f32 %v1631
    %vm1639 = vweird.f32 %v1632
    %vm1640 = vmor %vm1638, %vm1639
    %v1641 = vsel %vm1640, %v1632, %v1637
    %v1642 = vmul.f32 %v1630, %v1641
    %v1643 = vld [vmem:[#allocation18 + $0x1] sm:$0x1]
    %v1644 = vperm.slane %v1643, 0
    %v1645 = vmul.f32 %v1642, %v1644
    %v1646 = vld [vmem:[#allocation18 + $0x2] sm:$0x1]
    %v1647 = vperm.slane %v1646, 0
    %v1648 = vadd.f32 %v1645, %v1647
    %v1649 = vmax.f32 %v1648, 0.0
    %v1650 = vld [vmem:[%s39] sm:$0xff]
    %v1651 = vld [vmem:[%s39 + $0x8] sm:$0xff]
    %v1652 = vld [vmem:[#allocation19] sm:$0x1]
    %v1653 = vperm.slane %v1652, 0
    %v1655 = vsel %vm1485, %v1649, 0
    %1657 = vmatpush.msra.mxu0 0.0
    %1658 = vmatpush.msra.mxu0 0.0
    %1659 = vmatpush.msra.mxu0 0.0
    %1660 = vmatpush.msra.mxu0 0.0
    %1661 = vmatpush.msra.mxu0 0.0
    %1662 = vmatpush.msra.mxu0 0.0
    %1663 = vmatpush.msra.mxu0 0.0
    %1664 = vmatpush.msra.mxu0 0.0
    %1665 = vmatpush.msra.mxu0 0.0
    %1666 = vmatpush.msra.mxu0 0.0
    %1667 = vmatpush.msra.mxu0 0.0
    %1668 = vmatpush.msra.mxu0 0.0
    %1669 = vmatpush.msra.mxu0 0.0
    %1670 = vmatpush.msra.mxu0 0.0
    %1671 = vmatpush.msra.mxu0 %v1651
    %1672 = vmatpush.msra.mxu0 %v1650
    %1673 = vmatmul.f32.gmra.mxu0 %v1655
    %v1674 = vpop.f32.mrf.mxu0
    %v1675 = vadd.f32 %v1653, %v1674
    %1676 = vdwg.mxu0
    %v1677 = vsel %vm1485, %v1675, 0.0
    %1678 = vadd.xlane.f32.xlu0 %v1677
    %v1679 = vpop.xlane.xlu0 %1678
    %v1680 = vmul.f32 %v1679, %v1495
    %v1681 = vmul.f32 %v1675, %v1675
    %v1682 = vsel %vm1485, %v1681, 0.0
    %1683 = vadd.xlane.f32.xlu0 %v1682
    %v1684 = vpop.xlane.xlu0 %1683
    %v1685 = vmul.f32 %v1684, %v1495
    %v1686 = vmul.f32 %v1680, %v1680
    %v1687 = vsub.f32 %v1685, %v1686
    %v1688 = vmax.f32 %v1687, 0.0
    %v1689 = vsub.f32 %v1675, %v1680
    %v1690 = vadd.f32 %v1688, 1e-05
    %v1691 = vrsqrt.pop %v1690
    %v1692 = vmul.f32 %v1691, %v1690
    %v1693 = vmul.f32 %v1692, %v1691
    %v1694 = vmul.f32 0.5, %v1693
    %v1695 = vsub.f32 1.5, %v1694
    %v1696 = vmul.f32 %v1691, %v1695
    %vm1697 = vweird.f32 %v1690
    %vm1698 = vweird.f32 %v1691
    %vm1699 = vmor %vm1697, %vm1698
    %v1700 = vsel %vm1699, %v1691, %v1696
    %v1701 = vmul.f32 %v1689, %v1700
    %v1702 = vld [vmem:[#allocation19 + $0x1] sm:$0x1]
    %v1703 = vperm.slane %v1702, 0
    %v1704 = vmul.f32 %v1701, %v1703
    %v1705 = vld [vmem:[#allocation19 + $0x2] sm:$0x1]
    %v1706 = vperm.slane %v1705, 0
    %v1707 = vadd.f32 %v1704, %v1706
    %v1708 = vmax.f32 %v1707, 0.0
    %v1709 = vld [vmem:[%s43] sm:$0xff]
    %v1710 = vld [vmem:[%s43 + $0x8] sm:$0xff]
    %v1711 = vld [vmem:[#allocation21] sm:$0x1]
    %v1712 = vperm.slane %v1711, 0
    %v1714 = vsel %vm1485, %v1708, 0
    %1716 = vmatpush.msra.mxu0 0.0
    %1717 = vmatpush.msra.mxu0 0.0
    %1718 = vmatpush.msra.mxu0 0.0
    %1719 = vmatpush.msra.mxu0 0.0
    %1720 = vmatpush.msra.mxu0 0.0
    %1721 = vmatpush.msra.mxu0 0.0
    %1722 = vmatpush.msra.mxu0 0.0
    %1723 = vmatpush.msra.mxu0 0.0
    %1724 = vmatpush.msra.mxu0 0.0
    %1725 = vmatpush.msra.mxu0 0.0
    %1726 = vmatpush.msra.mxu0 0.0
    %1727 = vmatpush.msra.mxu0 0.0
    %1728 = vmatpush.msra.mxu0 0.0
    %1729 = vmatpush.msra.mxu0 0.0
    %1730 = vmatpush.msra.mxu0 %v1710
    %1731 = vmatpush.msra.mxu0 %v1709
    %1732 = vmatmul.f32.gmra.mxu0 %v1714
    %v1733 = vpop.f32.mrf.mxu0
    %v1734 = vadd.f32 %v1712, %v1733
    %1735 = vdwg.mxu0
    %v1736 = vsel %vm1485, %v1734, 0.0
    %1737 = vadd.xlane.f32.xlu0 %v1736
    %v1738 = vpop.xlane.xlu0 %1737
    %v1739 = vmul.f32 %v1738, %v1495
    %v1740 = vmul.f32 %v1734, %v1734
    %v1741 = vsel %vm1485, %v1740, 0.0
    %1742 = vadd.xlane.f32.xlu0 %v1741
    %v1743 = vpop.xlane.xlu0 %1742
    %v1744 = vmul.f32 %v1743, %v1495
    %v1745 = vmul.f32 %v1739, %v1739
    %v1746 = vsub.f32 %v1744, %v1745
    %v1747 = vmax.f32 %v1746, 0.0
    %v1748 = vsub.f32 %v1734, %v1739
    %v1749 = vadd.f32 %v1747, 1e-05
    %v1750 = vrsqrt.pop %v1749
    %v1751 = vmul.f32 %v1750, %v1749
    %v1752 = vmul.f32 %v1751, %v1750
    %v1753 = vmul.f32 0.5, %v1752
    %v1754 = vsub.f32 1.5, %v1753
    %v1755 = vmul.f32 %v1750, %v1754
    %vm1756 = vweird.f32 %v1749
    %vm1757 = vweird.f32 %v1750
    %vm1758 = vmor %vm1756, %vm1757
    %v1759 = vsel %vm1758, %v1750, %v1755
    %v1760 = vmul.f32 %v1748, %v1759
    %v1761 = vld [vmem:[#allocation21 + $0x1] sm:$0x1]
    %v1762 = vperm.slane %v1761, 0
    %v1763 = vmul.f32 %v1760, %v1762
    %v1764 = vld [vmem:[#allocation21 + $0x2] sm:$0x1]
    %v1765 = vperm.slane %v1764, 0
    %v1766 = vadd.f32 %v1763, %v1765
    %v1767 = vmax.f32 %v1766, 0.0
    %v1768 = vld [vmem:[%s47] sm:$0xff]
    %v1769 = vld [vmem:[%s47 + $0x8] sm:$0xff]
    %v1770 = vld [vmem:[#allocation22] sm:$0x1]
    %v1771 = vperm.slane %v1770, 0
    %v1773 = vsel %vm1485, %v1767, 0
    %1775 = vmatpush.msra.mxu0 0.0
    %1776 = vmatpush.msra.mxu0 0.0
    %1777 = vmatpush.msra.mxu0 0.0
    %1778 = vmatpush.msra.mxu0 0.0
    %1779 = vmatpush.msra.mxu0 0.0
    %1780 = vmatpush.msra.mxu0 0.0
    %1781 = vmatpush.msra.mxu0 0.0
    %1782 = vmatpush.msra.mxu0 0.0
    %1783 = vmatpush.msra.mxu0 0.0
    %1784 = vmatpush.msra.mxu0 0.0
    %1785 = vmatpush.msra.mxu0 0.0
    %1786 = vmatpush.msra.mxu0 0.0
    %1787 = vmatpush.msra.mxu0 0.0
    %1788 = vmatpush.msra.mxu0 0.0
    %1789 = vmatpush.msra.mxu0 %v1769
    %1790 = vmatpush.msra.mxu0 %v1768
    %1791 = vmatmul.f32.gmra.mxu0 %v1773
    %v1792 = vpop.f32.mrf.mxu0
    %v1793 = vadd.f32 %v1771, %v1792
    %1794 = vdwg.mxu0
    %v1795 = vsel %vm1485, %v1793, 0.0
    %1796 = vadd.xlane.f32.xlu0 %v1795
    %v1797 = vpop.xlane.xlu0 %1796
    %v1798 = vmul.f32 %v1797, %v1495
    %v1799 = vmul.f32 %v1793, %v1793
    %v1800 = vsel %vm1485, %v1799, 0.0
    %1801 = vadd.xlane.f32.xlu0 %v1800
    %v1802 = vpop.xlane.xlu0 %1801
    %v1803 = vmul.f32 %v1802, %v1495
    %v1804 = vmul.f32 %v1798, %v1798
    %v1805 = vsub.f32 %v1803, %v1804
    %v1806 = vmax.f32 %v1805, 0.0
    %v1807 = vsub.f32 %v1793, %v1798
    %v1808 = vadd.f32 %v1806, 1e-05
    %v1809 = vrsqrt.pop %v1808
    %v1810 = vmul.f32 %v1809, %v1808
    %v1811 = vmul.f32 %v1810, %v1809
    %v1812 = vmul.f32 0.5, %v1811
    %v1813 = vsub.f32 1.5, %v1812
    %v1814 = vmul.f32 %v1809, %v1813
    %vm1815 = vweird.f32 %v1808
    %vm1816 = vweird.f32 %v1809
    %vm1817 = vmor %vm1815, %vm1816
    %v1818 = vsel %vm1817, %v1809, %v1814
    %v1819 = vmul.f32 %v1807, %v1818
    %v1820 = vld [vmem:[#allocation22 + $0x1] sm:$0x1]
    %v1821 = vperm.slane %v1820, 0
    %v1822 = vmul.f32 %v1819, %v1821
    %v1823 = vld [vmem:[#allocation22 + $0x2] sm:$0x1]
    %v1824 = vperm.slane %v1823, 0
    %v1825 = vadd.f32 %v1822, %v1824
    %v1826 = vmax.f32 %v1825, 0.0
    %v1827 = vld [vmem:[%s51] sm:$0xff]
    %v1828 = vld [vmem:[%s51 + $0x8] sm:$0xff]
    %v1829 = vld [vmem:[#allocation24] sm:$0x1]
    %v1830 = vperm.slane %v1829, 0
    %v1832 = vsel %vm1485, %v1826, 0
    %1834 = vmatpush.msra.mxu0 0.0
    %1835 = vmatpush.msra.mxu0 0.0
    %1836 = vmatpush.msra.mxu0 0.0
    %1837 = vmatpush.msra.mxu0 0.0
    %1838 = vmatpush.msra.mxu0 0.0
    %1839 = vmatpush.msra.mxu0 0.0
    %1840 = vmatpush.msra.mxu0 0.0
    %1841 = vmatpush.msra.mxu0 0.0
    %1842 = vmatpush.msra.mxu0 0.0
    %1843 = vmatpush.msra.mxu0 0.0
    %1844 = vmatpush.msra.mxu0 0.0
    %1845 = vmatpush.msra.mxu0 0.0
    %1846 = vmatpush.msra.mxu0 0.0
    %1847 = vmatpush.msra.mxu0 0.0
    %1848 = vmatpush.msra.mxu0 %v1828
    %1849 = vmatpush.msra.mxu0 %v1827
    %1850 = vmatmul.f32.gmra.mxu0 %v1832
    %v1851 = vpop.f32.mrf.mxu0
    %v1852 = vadd.f32 %v1830, %v1851
    %1853 = vdwg.mxu0
    %v1854 = vsel %vm1552, %v1852, 0.0
    %1855 = vadd.xlane.f32.xlu0 %v1854
    %v1856 = vpop.xlane.xlu0 %1855
    %v1857 = vmul.f32 %v1856, %v1562
    %v1858 = vmul.f32 %v1852, %v1852
    %v1859 = vsel %vm1552, %v1858, 0.0
    %1860 = vadd.xlane.f32.xlu0 %v1859
    %v1861 = vpop.xlane.xlu0 %1860
    %v1862 = vmul.f32 %v1861, %v1562
    %v1863 = vmul.f32 %v1857, %v1857
    %v1864 = vsub.f32 %v1862, %v1863
    %v1865 = vmax.f32 %v1864, 0.0
    %v1866 = vsub.f32 %v1852, %v1857
    %v1867 = vadd.f32 %v1865, 1e-05
    %v1868 = vrsqrt.pop %v1867
    %v1869 = vmul.f32 %v1868, %v1867
    %v1870 = vmul.f32 %v1869, %v1868
    %v1871 = vmul.f32 0.5, %v1870
    %v1872 = vsub.f32 1.5, %v1871
    %v1873 = vmul.f32 %v1868, %v1872
    %vm1874 = vweird.f32 %v1867
    %vm1875 = vweird.f32 %v1868
    %vm1876 = vmor %vm1874, %vm1875
    %v1877 = vsel %vm1876, %v1868, %v1873
    %v1878 = vmul.f32 %v1866, %v1877
    %v1879 = vld [vmem:[#allocation24 + $0x1] sm:$0x1]
    %v1880 = vperm.slane %v1879, 0
    %v1881 = vmul.f32 %v1878, %v1880
    %v1882 = vld [vmem:[#allocation24 + $0x2] sm:$0x1]
    %v1883 = vperm.slane %v1882, 0
    %v1884 = vadd.f32 %v1881, %v1883
    %v1885 = vmax.f32 %v1884, 0.0
    %v1886 = vld [vmem:[%s55] sm:$0xff]
    %v1887 = vld [vmem:[#allocation25] sm:$0x1]
    %v1888 = vperm.slane %v1887, 0
    %v1890 = vsel %vm1552, %v1885, 0
    %1892 = vmatpush.msra.mxu0 0.0
    %1893 = vmatpush.msra.mxu0 0.0
    %1894 = vmatpush.msra.mxu0 0.0
    %1895 = vmatpush.msra.mxu0 0.0
    %1896 = vmatpush.msra.mxu0 0.0
    %1897 = vmatpush.msra.mxu0 0.0
    %1898 = vmatpush.msra.mxu0 0.0
    %1899 = vmatpush.msra.mxu0 0.0
    %1900 = vmatpush.msra.mxu0 0.0
    %1901 = vmatpush.msra.mxu0 0.0
    %1902 = vmatpush.msra.mxu0 0.0
    %1903 = vmatpush.msra.mxu0 0.0
    %1904 = vmatpush.msra.mxu0 0.0
    %1905 = vmatpush.msra.mxu0 0.0
    %1906 = vmatpush.msra.mxu0 0.0
    %1907 = vmatpush.msra.mxu0 %v1886
    %1908 = vmatmul.f32.gmra.mxu0 %v1890
    %v1909 = vpop.f32.mrf.mxu0
    %v1910 = vadd.f32 %v1888, %v1909
    %1911 = vdwg.mxu0
    %v1912 = vsel %vm1552, %v1910, 0.0
    %1913 = vadd.xlane.f32.xlu0 %v1912
    %v1914 = vpop.xlane.xlu0 %1913
    %v1915 = vmul.f32 %v1914, %v1562
    %v1916 = vmul.f32 %v1910, %v1910
    %v1917 = vsel %vm1552, %v1916, 0.0
    %1918 = vadd.xlane.f32.xlu0 %v1917
    %v1919 = vpop.xlane.xlu0 %1918
    %v1920 = vmul.f32 %v1919, %v1562
    %v1921 = vmul.f32 %v1915, %v1915
    %v1922 = vsub.f32 %v1920, %v1921
    %v1923 = vmax.f32 %v1922, 0.0
    %v1924 = vsub.f32 %v1910, %v1915
    %v1925 = vadd.f32 %v1923, 1e-05
    %v1926 = vrsqrt.pop %v1925
    %v1927 = vmul.f32 %v1926, %v1925
    %v1928 = vmul.f32 %v1927, %v1926
    %v1929 = vmul.f32 0.5, %v1928
    %v1930 = vsub.f32 1.5, %v1929
    %v1931 = vmul.f32 %v1926, %v1930
    %vm1932 = vweird.f32 %v1925
    %vm1933 = vweird.f32 %v1926
    %vm1934 = vmor %vm1932, %vm1933
    %v1935 = vsel %vm1934, %v1926, %v1931
    %v1936 = vmul.f32 %v1924, %v1935
    %v1937 = vld [vmem:[#allocation25 + $0x1] sm:$0x1]
    %v1938 = vperm.slane %v1937, 0
    %v1939 = vmul.f32 %v1936, %v1938
    %v1940 = vld [vmem:[#allocation25 + $0x2] sm:$0x1]
    %v1941 = vperm.slane %v1940, 0
    %v1942 = vadd.f32 %v1939, %v1941
    %v1943 = vmax.f32 %v1942, 0.0
    %v1944 = vld [vmem:[#allocation27] sm:$0xff]
    %v1945 = vld [vmem:[%s61] sm:$0x1]
    %v1946 = vperm.slane %v1945, 0
    %v1948 = vsel %vm1552, %v1943, 0
    %1950 = vmatpush.msra.mxu0 0.0
    %1951 = vmatpush.msra.mxu0 0.0
    %1952 = vmatpush.msra.mxu0 0.0
    %1953 = vmatpush.msra.mxu0 0.0
    %1954 = vmatpush.msra.mxu0 0.0
    %1955 = vmatpush.msra.mxu0 0.0
    %1956 = vmatpush.msra.mxu0 0.0
    %1957 = vmatpush.msra.mxu0 0.0
    %1958 = vmatpush.msra.mxu0 0.0
    %1959 = vmatpush.msra.mxu0 0.0
    %1960 = vmatpush.msra.mxu0 0.0
    %1961 = vmatpush.msra.mxu0 0.0
    %1962 = vmatpush.msra.mxu0 0.0
    %1963 = vmatpush.msra.mxu0 0.0
    %1964 = vmatpush.msra.mxu0 0.0
    %1965 = vmatpush.msra.mxu0 %v1944
    %1966 = vmatmul.f32.gmra.mxu0 %v1948
    %v1967 = vpop.f32.mrf.mxu0
    %v1968 = vadd.f32 %v1946, %v1967
    %1969 = vdwg.mxu0
    %v1970 = vsel %vm1552, %v1968, 0.0
    %1971 = vadd.xlane.f32.xlu0 %v1970
    %v1972 = vpop.xlane.xlu0 %1971
    %v1973 = vmul.f32 %v1972, %v1562
    %v1974 = vmul.f32 %v1968, %v1968
    %v1975 = vsel %vm1552, %v1974, 0.0
    %1976 = vadd.xlane.f32.xlu0 %v1975
    %v1977 = vpop.xlane.xlu0 %1976
    %v1978 = vmul.f32 %v1977, %v1562
    %v1979 = vmul.f32 %v1973, %v1973
    %v1980 = vsub.f32 %v1978, %v1979
    %v1981 = vmax.f32 %v1980, 0.0
    %v1982 = vsub.f32 %v1968, %v1973
    %v1983 = vadd.f32 %v1981, 1e-05
    %v1984 = vrsqrt.pop %v1983
    %v1985 = vmul.f32 %v1984, %v1983
    %v1986 = vmul.f32 %v1985, %v1984
    %v1987 = vmul.f32 0.5, %v1986
    %v1988 = vsub.f32 1.5, %v1987
    %v1989 = vmul.f32 %v1984, %v1988
    %vm1990 = vweird.f32 %v1983
    %vm1991 = vweird.f32 %v1984
    %vm1992 = vmor %vm1990, %vm1991
    %v1993 = vsel %vm1992, %v1984, %v1989
    %v1994 = vmul.f32 %v1982, %v1993
    %v1995 = vld [vmem:[%s61 + $0x1] sm:$0x1]
    %v1996 = vperm.slane %v1995, 0
    %v1997 = vmul.f32 %v1994, %v1996
    %v1998 = vld [vmem:[%s61 + $0x2] sm:$0x1]
    %v1999 = vperm.slane %v1998, 0
    %v2000 = vadd.f32 %v1997, %v1999
    %v2001 = vmax.f32 %v2000, 0.0
    %v2002 = vld [vmem:[#allocation28] sm:$0xff]
    %v2003 = vld [vmem:[#allocation30] sm:$0x1]
    %v2004 = vperm.slane %v2003, 0
    %v2006 = vsel %vm1552, %v2001, 0
    %2008 = vmatpush.msra.mxu0 0.0
    %2009 = vmatpush.msra.mxu0 0.0
    %2010 = vmatpush.msra.mxu0 0.0
    %2011 = vmatpush.msra.mxu0 0.0
    %2012 = vmatpush.msra.mxu0 0.0
    %2013 = vmatpush.msra.mxu0 0.0
    %2014 = vmatpush.msra.mxu0 0.0
    %2015 = vmatpush.msra.mxu0 0.0
    %2016 = vmatpush.msra.mxu0 0.0
    %2017 = vmatpush.msra.mxu0 0.0
    %2018 = vmatpush.msra.mxu0 0.0
    %2019 = vmatpush.msra.mxu0 0.0
    %2020 = vmatpush.msra.mxu0 0.0
    %2021 = vmatpush.msra.mxu0 0.0
    %2022 = vmatpush.msra.mxu0 0.0
    %2023 = vmatpush.msra.mxu0 %v2002
    %2024 = vmatmul.f32.gmra.mxu0 %v2006
    %v2025 = vpop.f32.mrf.mxu0
    %v2026 = vadd.f32 %v2004, %v2025
    %2027 = vdwg.mxu0
    %v2028 = vsel %vm1552, %v2026, 0.0
    %2029 = vadd.xlane.f32.xlu0 %v2028
    %v2030 = vpop.xlane.xlu0 %2029
    %v2031 = vmul.f32 %v2030, %v1562
    %v2032 = vmul.f32 %v2026, %v2026
    %v2033 = vsel %vm1552, %v2032, 0.0
    %2034 = vadd.xlane.f32.xlu0 %v2033
    %v2035 = vpop.xlane.xlu0 %2034
    %v2036 = vmul.f32 %v2035, %v1562
    %v2037 = vmul.f32 %v2031, %v2031
    %v2038 = vsub.f32 %v2036, %v2037
    %v2039 = vmax.f32 %v2038, 0.0
    %v2040 = vsub.f32 %v2026, %v2031
    %v2041 = vadd.f32 %v2039, 1e-05
    %v2042 = vrsqrt.pop %v2041
    %v2043 = vmul.f32 %v2042, %v2041
    %v2044 = vmul.f32 %v2043, %v2042
    %v2045 = vmul.f32 0.5, %v2044
    %v2046 = vsub.f32 1.5, %v2045
    %v2047 = vmul.f32 %v2042, %v2046
    %vm2048 = vweird.f32 %v2041
    %vm2049 = vweird.f32 %v2042
    %vm2050 = vmor %vm2048, %vm2049
    %v2051 = vsel %vm2050, %v2042, %v2047
    %v2052 = vmul.f32 %v2040, %v2051
    %v2053 = vld [vmem:[#allocation30 + $0x1] sm:$0x1]
    %v2054 = vperm.slane %v2053, 0
    %v2055 = vmul.f32 %v2052, %v2054
    %v2056 = vld [vmem:[#allocation30 + $0x2] sm:$0x1]
    %v2057 = vperm.slane %v2056, 0
    %v2058 = vadd.f32 %v2055, %v2057
    %v2059 = vmax.f32 %v2058, 0.0
    %2060 = vst.msk [vmem:[%s67] sm:$0xff] %vm1552, %v2059
    // Predicated region
    $region210: #{sepconv_encoder_pallas.1} parent=1 // pred_check
      _
    $region211: #{sepconv_encoder_pallas.1} parent=1 // pred_check_branch
      %2062 = sbr.rel (0) target = $region213
    $region212: #{sepconv_encoder_pallas.1} parent=1 // pred_region
      _
    $region213: #{sepconv_encoder_pallas.1} parent=1 // pred_fallthru
      _
    // Predicated region
    $region214: #{sepconv_encoder_pallas.1} parent=1 // pred_check
      _
    $region215: #{sepconv_encoder_pallas.1} parent=1 // pred_check_branch
      %2064 = sbr.rel (0) target = $region217
    $region216: #{sepconv_encoder_pallas.1} parent=1 // pred_region
      _
    $region217: #{sepconv_encoder_pallas.1} parent=1 // pred_fallthru
      _
    %2065 = vsyncpa [#allocation3], 1
    %2066 = vsyncpa [#allocation5], 1
    %2067 = vsyncpa [#allocation8], 1
    %2068 = vsyncpa [#allocation11], 1
    %2069 = vsyncpa [#allocation14], 1
    %2070 = vsyncpa [#allocation17], 1
    %2071 = vsyncpa [#allocation20], 1
    %2072 = vsyncpa [#allocation23], 1
    %2073 = vsyncpa [#allocation26], 1
    %2074 = vsyncpa [#allocation29], 1

</llo_original>
